<compile_context>
chip_gen: v7x
topology: tpu7x:2x2x1
jax: 0.10.0
libtpu: 0.0.40
codegen_flags: <defaults>
</compile_context>

<pallas_src>
import functools

import jax
import jax.numpy as jnp
from jax.experimental import pallas as pl
from jax.experimental.pallas import tpu as pltpu


_HALO = 128  # zero halo on each side of the lane-flattened image (keeps the
             # interior store 128-lane aligned and covers the +/-(W+1) tap reads)


# ------------------------- in-kernel helpers -------------------------

def _conv3x3_cf(xpad_ref, w_ref, *, W, HW, m_neg, m_pos):
    """3x3 SAME conv, channels-first.

    xpad_ref : (C, _HALO + HW + _HALO) lane-flattened image with zero halos.
    w_ref    : (9, Cout, C), tap t = ky*3 + kx, w_ref[t] = W[ky, kx].T.
    Returns (Cout, HW) f32 accumulator (no bias).
    """
    acc = None
    t = 0
    for dy in (-1, 0, 1):
        for dx in (-1, 0, 1):
            start = _HALO + dy * W + dx
            shifted = xpad_ref[:, start:start + HW]        # static lane slice
            if dx == -1:                                    # kill horizontal wrap
                shifted = jnp.where(m_neg, shifted, 0.0)
            elif dx == 1:
                shifted = jnp.where(m_pos, shifted, 0.0)
            contrib = jnp.dot(w_ref[t], shifted,
                              preferred_element_type=jnp.float32)
            acc = contrib if acc is None else acc + contrib
            t += 1
    return acc


def _group_norm_relu_cf(acc, *, n_groups, eps):
    """GroupNorm(affine=False) + ReLU on a channels-first (C, HW) tile.

    Single fused pass: sum and sum-of-squares, biased variance (torch GN).
    """
    C, HW = acc.shape
    G = C // n_groups
    inv_cnt = 1.0 / float(G * HW)
    s1 = jnp.sum(acc, axis=1, keepdims=True)           # (C, 1)
    s2 = jnp.sum(acc * acc, axis=1, keepdims=True)      # (C, 1)
    if G > 1:   # fold per-channel stats within each group (not hit when G==1)
        s1 = jnp.broadcast_to(
            s1.reshape(n_groups, G).sum(axis=1, keepdims=True),
            (n_groups, G)).reshape(C, 1)
        s2 = jnp.broadcast_to(
            s2.reshape(n_groups, G).sum(axis=1, keepdims=True),
            (n_groups, G)).reshape(C, 1)
    mean = s1 * inv_cnt
    var = s2 * inv_cnt - mean * mean
    return jnp.maximum((acc - mean) * jax.lax.rsqrt(var + eps), 0.0)


# ------------------------------ kernel ------------------------------

def _double_conv_kernel(x_ref, w1_ref, b1_ref, w2_ref, b2_ref, o_ref,
                        xpad1, xpad2, *, H, W, Cin, Cout, n_groups, eps):
    HW = H * W

    # Column-validity masks for the horizontal taps (shared by both layers).
    col = jax.lax.broadcasted_iota(jnp.int32, (1, HW), 1) % W
    m_neg = col >= 1            # source column w-1 is in bounds
    m_pos = col < (W - 1)       # source column w+1 is in bounds

    # Zero only the halo lanes; the image interior is fully rewritten below.
    xpad1[:, :_HALO] = jnp.zeros((Cin, _HALO), jnp.float32)
    xpad1[:, _HALO + HW:] = jnp.zeros((Cin, _HALO), jnp.float32)
    xpad2[:, :_HALO] = jnp.zeros((Cout, _HALO), jnp.float32)
    xpad2[:, _HALO + HW:] = jnp.zeros((Cout, _HALO), jnp.float32)

    # ---- layer 1: conv3x3 -> GroupNorm -> ReLU (channels-first) ----
    xpad1[:, _HALO:_HALO + HW] = x_ref[0]                       # (Cin, HW), aligned
    acc1 = _conv3x3_cf(xpad1, w1_ref, W=W, HW=HW,
                       m_neg=m_neg, m_pos=m_pos) + b1_ref[...]  # (Cout, HW)
    y1 = _group_norm_relu_cf(acc1, n_groups=n_groups, eps=eps)

    # ---- layer 2: conv3x3 -> GroupNorm -> ReLU (channels-first) ----
    xpad2[:, _HALO:_HALO + HW] = y1                             # (Cout, HW), aligned
    acc2 = _conv3x3_cf(xpad2, w2_ref, W=W, HW=HW,
                       m_neg=m_neg, m_pos=m_pos) + b2_ref[...]  # (Cout, HW)
    o_ref[0] = _group_norm_relu_cf(acc2, n_groups=n_groups, eps=eps)


# ------------------------------ wrapper ------------------------------

def double_conv(x_nchw, params, *, n_groups=32, eps=1e-5):
    """Pallas implementation of Double_conv.forward. Input/output NCHW."""
    N, Cin, H, W = x_nchw.shape
    Cout = params["w1"].shape[-1]
    assert Cout % n_groups == 0, "num_channels must be divisible by num_groups"
    HW = H * W

    # Metadata-only reshape (NCHW is already channels-first); no transposes.
    x = x_nchw.reshape(N, Cin, HW).astype(jnp.float32)
    # Per-tap weights, channels-first: w[t] = W_hwio[ky, kx].T  (Cout, Cin).
    w1 = jnp.transpose(params["w1"], (0, 1, 3, 2)).reshape(9, Cout, Cin).astype(jnp.float32)
    b1 = params["b1"].reshape(Cout, 1).astype(jnp.float32)
    w2 = jnp.transpose(params["w2"], (0, 1, 3, 2)).reshape(9, Cout, Cout).astype(jnp.float32)
    b2 = params["b2"].reshape(Cout, 1).astype(jnp.float32)

    kernel = functools.partial(_double_conv_kernel, H=H, W=W, Cin=Cin,
                               Cout=Cout, n_groups=n_groups, eps=eps)
    # NOTE: on single-TC chips (v5e/v6e) both images could be folded into one
    # grid step; grid=(N,) "parallel" is kept so v7x's two TensorCores each
    # take one image.
    out = pl.pallas_call(
        kernel,
        out_shape=jax.ShapeDtypeStruct((N, Cout, HW), jnp.float32),
        grid=(N,),
        in_specs=[
            pl.BlockSpec((1, Cin, HW), lambda n: (n, 0, 0)),
            pl.BlockSpec((9, Cout, Cin), lambda n: (0, 0, 0)),
            pl.BlockSpec((Cout, 1), lambda n: (0, 0)),
            pl.BlockSpec((9, Cout, Cout), lambda n: (0, 0, 0)),
            pl.BlockSpec((Cout, 1), lambda n: (0, 0)),
        ],
        out_specs=pl.BlockSpec((1, Cout, HW), lambda n: (n, 0, 0)),
        scratch_shapes=[
            pltpu.VMEM((Cin, 2 * _HALO + HW), jnp.float32),    # haloed image, layer 1
            pltpu.VMEM((Cout, 2 * _HALO + HW), jnp.float32),   # haloed image, layer 2
        ],
        compiler_params=pltpu.CompilerParams(
            dimension_semantics=("parallel",)),
    )(x, w1, b1, w2, b2)
    return out.reshape(N, Cout, H, W)                # metadata-only lane split


# ------------------------- reference (plain JAX) -------------------------

def _gn_ref(x, n_groups, eps=1e-5):
    N, H, W, C = x.shape
    G = C // n_groups
    xr = x.reshape(N, H, W, n_groups, G)
    mean = xr.mean(axis=(1, 2, 4), keepdims=True)
    var = xr.var(axis=(1, 2, 4), keepdims=True)
    return ((xr - mean) / jnp.sqrt(var + eps)).reshape(N, H, W, C)


def _conv_ref(x, w, b):
    y = jax.lax.conv_general_dilated(
        x, w, window_strides=(1, 1), padding="SAME",
        dimension_numbers=("NHWC", "HWIO", "NHWC"))
    return y + b[None, None, None, :]


def double_conv_ref(x_nchw, params):
    x = jnp.transpose(x_nchw, (0, 2, 3, 1)).astype(jnp.float32)
    x = jnp.maximum(_gn_ref(_conv_ref(x, params["w1"], params["b1"]), 32), 0.0)
    x = jnp.maximum(_gn_ref(_conv_ref(x, params["w2"], params["b2"]), 32), 0.0)
    return jnp.transpose(x, (0, 3, 1, 2))


# ------------------------------- main -------------------------------

if __name__ == "__main__":
    in_ch, out_ch = 4, 32          # out_ch must be divisible by num_groups=32
    N, H, W = 2, 16, 16

    key = jax.random.PRNGKey(0)
    kx, kw1, kb1, kw2, kb2 = jax.random.split(key, 5)

    x = jax.random.normal(kx, (N, in_ch, H, W), dtype=jnp.float32)   # NCHW

    # Deterministic Conv2d-style init (uniform +/- 1/sqrt(fan_in)); HWIO layout.
    bound1 = 1.0 / jnp.sqrt(in_ch * 9.0)
    bound2 = 1.0 / jnp.sqrt(out_ch * 9.0)
    params = {
        "w1": jax.random.uniform(kw1, (3, 3, in_ch, out_ch), jnp.float32,
                                 -bound1, bound1),
        "b1": jax.random.uniform(kb1, (out_ch,), jnp.float32, -bound1, bound1),
        "w2": jax.random.uniform(kw2, (3, 3, out_ch, out_ch), jnp.float32,
                                 -bound2, bound2),
        "b2": jax.random.uniform(kb2, (out_ch,), jnp.float32, -bound2, bound2),
    }

    out = jax.block_until_ready(double_conv(x, params))
    ref = jax.block_until_ready(double_conv_ref(x, params))

    assert out.shape == (N, out_ch, H, W), out.shape
    assert jnp.allclose(out, ref, atol=1e-4, rtol=1e-4), float(
        jnp.max(jnp.abs(out - ref)))
    print("KERNEL_OK")
</pallas_src>

<mosaic_0001>
module attributes {stable_mosaic.version = 11 : i64} {
  func.func @_double_conv_kernel(%arg0: i32, %arg1: memref<1x4x256xf32, #tpu.memory_space<vmem>>, %arg2: memref<9x32x4xf32, #tpu.memory_space<vmem>>, %arg3: memref<32x1xf32, #tpu.memory_space<vmem>>, %arg4: memref<9x32x32xf32, #tpu.memory_space<vmem>>, %arg5: memref<32x1xf32, #tpu.memory_space<vmem>>, %arg6: memref<1x32x256xf32, #tpu.memory_space<vmem>>, %arg7: memref<4x512xf32, #tpu.memory_space<vmem>>, %arg8: memref<32x512xf32, #tpu.memory_space<vmem>>) attributes {dimension_semantics = [#tpu.dimension_semantics<parallel>], iteration_bounds = array<i64: 2>, scalar_prefetch = 0 : i64, scratch_operands = 2 : i64, tpu.core_type = #tpu.core_type<tc>, window_params = [{transform_indices = @transform_0, window_bounds = array<i64: 1, 4, 256>}, {pipeline_mode = #tpu.pipeline_mode<synchronous>, transform_indices = @transform_1, window_bounds = array<i64: 9, 32, 4>}, {pipeline_mode = #tpu.pipeline_mode<synchronous>, transform_indices = @transform_2, window_bounds = array<i64: 32, 1>}, {pipeline_mode = #tpu.pipeline_mode<synchronous>, transform_indices = @transform_3, window_bounds = array<i64: 9, 32, 32>}, {pipeline_mode = #tpu.pipeline_mode<synchronous>, transform_indices = @transform_4, window_bounds = array<i64: 32, 1>}, {transform_indices = @transform_5, window_bounds = array<i64: 1, 32, 256>}]} {
    %0 = tpu.iota {dimensions = array<i32: 1>} : vector<1x256xi32>
    %c16_i32 = arith.constant 16 : i32
    %c0_i32 = arith.constant 0 : i32
    %1 = arith.cmpi eq, %c16_i32, %c0_i32 : i32
    %c1_i32 = arith.constant 1 : i32
    %2 = arith.select %1, %c1_i32, %c16_i32 : i32
    %3 = vector.broadcast %2 : i32 to vector<1x256xi32>
    %4 = arith.remsi %0, %3 : vector<1x256xi32>
    %c0_i32_0 = arith.constant 0 : i32
    %5 = vector.broadcast %c0_i32_0 : i32 to vector<1x256xi32>
    %6 = arith.cmpi ne, %4, %5 : vector<1x256xi32>
    %c0_i32_1 = arith.constant 0 : i32
    %7 = vector.broadcast %c0_i32_1 : i32 to vector<1x256xi32>
    %8 = arith.cmpi slt, %4, %7 : vector<1x256xi32>
    %c0_i32_2 = arith.constant 0 : i32
    %9 = arith.cmpi slt, %2, %c0_i32_2 : i32
    %10 = vector.broadcast %9 : i1 to vector<1x256xi1>
    %11 = vector.broadcast %10 : vector<1x256xi1> to vector<1x256xi1>
    %12 = arith.xori %8, %11 : vector<1x256xi1>
    %13 = arith.andi %12, %6 : vector<1x256xi1>
    %14 = vector.broadcast %2 : i32 to vector<1x256xi32>
    %15 = arith.addi %4, %14 : vector<1x256xi32>
    %16 = arith.select %13, %15, %4 : vector<1x256xi1>, vector<1x256xi32>
    %c1_i32_3 = arith.constant 1 : i32
    %17 = vector.broadcast %c1_i32_3 : i32 to vector<1x256xi32>
    %18 = arith.cmpi sge, %16, %17 : vector<1x256xi32>
    %c15_i32 = arith.constant 15 : i32
    %19 = vector.broadcast %c15_i32 : i32 to vector<1x256xi32>
    %20 = arith.cmpi slt, %16, %19 : vector<1x256xi32>
    %cst = arith.constant 0.000000e+00 : f32
    %21 = vector.broadcast %cst : f32 to vector<4x128xf32>
    %c0 = arith.constant 0 : index
    %c0_4 = arith.constant 0 : index
    %22 = vector.load %arg7[%c0, %c0_4] : memref<4x512xf32, #tpu.memory_space<vmem>>, vector<4x128xf32>
    tpu.vector_store %arg7[%c0, %c0_4], %21 {strides = array<i32>} : memref<4x512xf32, #tpu.memory_space<vmem>>, vector<4x128xf32>,
    %cst_5 = arith.constant 0.000000e+00 : f32
    %23 = vector.broadcast %cst_5 : f32 to vector<4x128xf32>
    %c0_6 = arith.constant 0 : index
    %c384 = arith.constant 384 : index
    %24 = vector.load %arg7[%c0_6, %c384] : memref<4x512xf32, #tpu.memory_space<vmem>>, vector<4x128xf32>
    tpu.vector_store %arg7[%c0_6, %c384], %23 {strides = array<i32>} : memref<4x512xf32, #tpu.memory_space<vmem>>, vector<4x128xf32>,
    %cst_7 = arith.constant 0.000000e+00 : f32
    %25 = vector.broadcast %cst_7 : f32 to vector<32x128xf32>
    %c0_8 = arith.constant 0 : index
    %c0_9 = arith.constant 0 : index
    %26 = vector.load %arg8[%c0_8, %c0_9] : memref<32x512xf32, #tpu.memory_space<vmem>>, vector<32x128xf32>
    tpu.vector_store %arg8[%c0_8, %c0_9], %25 {strides = array<i32>} : memref<32x512xf32, #tpu.memory_space<vmem>>, vector<32x128xf32>,
    %cst_10 = arith.constant 0.000000e+00 : f32
    %27 = vector.broadcast %cst_10 : f32 to vector<32x128xf32>
    %c0_11 = arith.constant 0 : index
    %c384_12 = arith.constant 384 : index
    %28 = vector.load %arg8[%c0_11, %c384_12] : memref<32x512xf32, #tpu.memory_space<vmem>>, vector<32x128xf32>
    tpu.vector_store %arg8[%c0_11, %c384_12], %27 {strides = array<i32>} : memref<32x512xf32, #tpu.memory_space<vmem>>, vector<32x128xf32>,
    %c0_13 = arith.constant 0 : index
    %c0_14 = arith.constant 0 : index
    %c0_15 = arith.constant 0 : index
    %29 = vector.load %arg1[%c0_13, %c0_14, %c0_15] : memref<1x4x256xf32, #tpu.memory_space<vmem>>, vector<1x4x256xf32>
    %30 = vector.shape_cast %29 : vector<1x4x256xf32> to vector<4x256xf32>
    %c0_16 = arith.constant 0 : index
    %c128 = arith.constant 128 : index
    %31 = vector.load %arg7[%c0_16, %c128] : memref<4x512xf32, #tpu.memory_space<vmem>>, vector<4x256xf32>
    tpu.vector_store %arg7[%c0_16, %c128], %30 {strides = array<i32>} : memref<4x512xf32, #tpu.memory_space<vmem>>, vector<4x256xf32>,
    %c0_17 = arith.constant 0 : index
    %c111 = arith.constant 111 : index
    %32 = vector.load %arg7[%c0_17, %c111] : memref<4x512xf32, #tpu.memory_space<vmem>>, vector<4x256xf32>
    %cst_18 = arith.constant 0.000000e+00 : f32
    %33 = vector.shape_cast %18 : vector<1x256xi1> to vector<1x256xi1>
    %34 = vector.broadcast %33 : vector<1x256xi1> to vector<4x256xi1>
    %35 = vector.broadcast %cst_18 : f32 to vector<4x256xf32>
    %36 = arith.select %34, %32, %35 : vector<4x256xi1>, vector<4x256xf32>
    %c0_19 = arith.constant 0 : index
    %c0_20 = arith.constant 0 : index
    %c0_21 = arith.constant 0 : index
    %37 = vector.load %arg2[%c0_19, %c0_20, %c0_21] : memref<9x32x4xf32, #tpu.memory_space<vmem>>, vector<1x32x4xf32>
    %38 = vector.shape_cast %37 : vector<1x32x4xf32> to vector<32x4xf32>
    %cst_22 = arith.constant dense<0.000000e+00> : vector<32x256xf32>
    %39 = tpu.matmul %38, %36, %cst_22 {dimension_numbers = #tpu.dot_dimension_numbers<[1], [0], [0], [1], [0, 0, 1, 1], [], []>} : vector<32x4xf32>, vector<4x256xf32>, vector<32x256xf32> -> vector<32x256xf32>
    %c0_23 = arith.constant 0 : index
    %c112 = arith.constant 112 : index
    %40 = vector.load %arg7[%c0_23, %c112] : memref<4x512xf32, #tpu.memory_space<vmem>>, vector<4x256xf32>
    %c1 = arith.constant 1 : index
    %c0_24 = arith.constant 0 : index
    %c0_25 = arith.constant 0 : index
    %41 = vector.load %arg2[%c1, %c0_24, %c0_25] : memref<9x32x4xf32, #tpu.memory_space<vmem>>, vector<1x32x4xf32>
    %42 = vector.shape_cast %41 : vector<1x32x4xf32> to vector<32x4xf32>
    %cst_26 = arith.constant dense<0.000000e+00> : vector<32x256xf32>
    %43 = tpu.matmul %42, %40, %cst_26 {dimension_numbers = #tpu.dot_dimension_numbers<[1], [0], [0], [1], [0, 0, 1, 1], [], []>} : vector<32x4xf32>, vector<4x256xf32>, vector<32x256xf32> -> vector<32x256xf32>
    %44 = arith.addf %39, %43 : vector<32x256xf32>
    %c0_27 = arith.constant 0 : index
    %c113 = arith.constant 113 : index
    %45 = vector.load %arg7[%c0_27, %c113] : memref<4x512xf32, #tpu.memory_space<vmem>>, vector<4x256xf32>
    %cst_28 = arith.constant 0.000000e+00 : f32
    %46 = vector.shape_cast %20 : vector<1x256xi1> to vector<1x256xi1>
    %47 = vector.broadcast %46 : vector<1x256xi1> to vector<4x256xi1>
    %48 = vector.broadcast %cst_28 : f32 to vector<4x256xf32>
    %49 = arith.select %47, %45, %48 : vector<4x256xi1>, vector<4x256xf32>
    %c2 = arith.constant 2 : index
    %c0_29 = arith.constant 0 : index
    %c0_30 = arith.constant 0 : index
    %50 = vector.load %arg2[%c2, %c0_29, %c0_30] : memref<9x32x4xf32, #tpu.memory_space<vmem>>, vector<1x32x4xf32>
    %51 = vector.shape_cast %50 : vector<1x32x4xf32> to vector<32x4xf32>
    %cst_31 = arith.constant dense<0.000000e+00> : vector<32x256xf32>
    %52 = tpu.matmul %51, %49, %cst_31 {dimension_numbers = #tpu.dot_dimension_numbers<[1], [0], [0], [1], [0, 0, 1, 1], [], []>} : vector<32x4xf32>, vector<4x256xf32>, vector<32x256xf32> -> vector<32x256xf32>
    %53 = arith.addf %44, %52 : vector<32x256xf32>
    %c0_32 = arith.constant 0 : index
    %c127 = arith.constant 127 : index
    %54 = vector.load %arg7[%c0_32, %c127] : memref<4x512xf32, #tpu.memory_space<vmem>>, vector<4x256xf32>
    %cst_33 = arith.constant 0.000000e+00 : f32
    %55 = vector.shape_cast %18 : vector<1x256xi1> to vector<1x256xi1>
    %56 = vector.broadcast %55 : vector<1x256xi1> to vector<4x256xi1>
    %57 = vector.broadcast %cst_33 : f32 to vector<4x256xf32>
    %58 = arith.select %56, %54, %57 : vector<4x256xi1>, vector<4x256xf32>
    %c3 = arith.constant 3 : index
    %c0_34 = arith.constant 0 : index
    %c0_35 = arith.constant 0 : index
    %59 = vector.load %arg2[%c3, %c0_34, %c0_35] : memref<9x32x4xf32, #tpu.memory_space<vmem>>, vector<1x32x4xf32>
    %60 = vector.shape_cast %59 : vector<1x32x4xf32> to vector<32x4xf32>
    %cst_36 = arith.constant dense<0.000000e+00> : vector<32x256xf32>
    %61 = tpu.matmul %60, %58, %cst_36 {dimension_numbers = #tpu.dot_dimension_numbers<[1], [0], [0], [1], [0, 0, 1, 1], [], []>} : vector<32x4xf32>, vector<4x256xf32>, vector<32x256xf32> -> vector<32x256xf32>
    %62 = arith.addf %53, %61 : vector<32x256xf32>
    %c0_37 = arith.constant 0 : index
    %c128_38 = arith.constant 128 : index
    %63 = vector.load %arg7[%c0_37, %c128_38] : memref<4x512xf32, #tpu.memory_space<vmem>>, vector<4x256xf32>
    %c4 = arith.constant 4 : index
    %c0_39 = arith.constant 0 : index
    %c0_40 = arith.constant 0 : index
    %64 = vector.load %arg2[%c4, %c0_39, %c0_40] : memref<9x32x4xf32, #tpu.memory_space<vmem>>, vector<1x32x4xf32>
    %65 = vector.shape_cast %64 : vector<1x32x4xf32> to vector<32x4xf32>
    %cst_41 = arith.constant dense<0.000000e+00> : vector<32x256xf32>
    %66 = tpu.matmul %65, %63, %cst_41 {dimension_numbers = #tpu.dot_dimension_numbers<[1], [0], [0], [1], [0, 0, 1, 1], [], []>} : vector<32x4xf32>, vector<4x256xf32>, vector<32x256xf32> -> vector<32x256xf32>
    %67 = arith.addf %62, %66 : vector<32x256xf32>
    %c0_42 = arith.constant 0 : index
    %c129 = arith.constant 129 : index
    %68 = vector.load %arg7[%c0_42, %c129] : memref<4x512xf32, #tpu.memory_space<vmem>>, vector<4x256xf32>
    %cst_43 = arith.constant 0.000000e+00 : f32
    %69 = vector.shape_cast %20 : vector<1x256xi1> to vector<1x256xi1>
    %70 = vector.broadcast %69 : vector<1x256xi1> to vector<4x256xi1>
    %71 = vector.broadcast %cst_43 : f32 to vector<4x256xf32>
    %72 = arith.select %70, %68, %71 : vector<4x256xi1>, vector<4x256xf32>
    %c5 = arith.constant 5 : index
    %c0_44 = arith.constant 0 : index
    %c0_45 = arith.constant 0 : index
    %73 = vector.load %arg2[%c5, %c0_44, %c0_45] : memref<9x32x4xf32, #tpu.memory_space<vmem>>, vector<1x32x4xf32>
    %74 = vector.shape_cast %73 : vector<1x32x4xf32> to vector<32x4xf32>
    %cst_46 = arith.constant dense<0.000000e+00> : vector<32x256xf32>
    %75 = tpu.matmul %74, %72, %cst_46 {dimension_numbers = #tpu.dot_dimension_numbers<[1], [0], [0], [1], [0, 0, 1, 1], [], []>} : vector<32x4xf32>, vector<4x256xf32>, vector<32x256xf32> -> vector<32x256xf32>
    %76 = arith.addf %67, %75 : vector<32x256xf32>
    %c0_47 = arith.constant 0 : index
    %c143 = arith.constant 143 : index
    %77 = vector.load %arg7[%c0_47, %c143] : memref<4x512xf32, #tpu.memory_space<vmem>>, vector<4x256xf32>
    %cst_48 = arith.constant 0.000000e+00 : f32
    %78 = vector.shape_cast %18 : vector<1x256xi1> to vector<1x256xi1>
    %79 = vector.broadcast %78 : vector<1x256xi1> to vector<4x256xi1>
    %80 = vector.broadcast %cst_48 : f32 to vector<4x256xf32>
    %81 = arith.select %79, %77, %80 : vector<4x256xi1>, vector<4x256xf32>
    %c6 = arith.constant 6 : index
    %c0_49 = arith.constant 0 : index
    %c0_50 = arith.constant 0 : index
    %82 = vector.load %arg2[%c6, %c0_49, %c0_50] : memref<9x32x4xf32, #tpu.memory_space<vmem>>, vector<1x32x4xf32>
    %83 = vector.shape_cast %82 : vector<1x32x4xf32> to vector<32x4xf32>
    %cst_51 = arith.constant dense<0.000000e+00> : vector<32x256xf32>
    %84 = tpu.matmul %83, %81, %cst_51 {dimension_numbers = #tpu.dot_dimension_numbers<[1], [0], [0], [1], [0, 0, 1, 1], [], []>} : vector<32x4xf32>, vector<4x256xf32>, vector<32x256xf32> -> vector<32x256xf32>
    %85 = arith.addf %76, %84 : vector<32x256xf32>
    %c0_52 = arith.constant 0 : index
    %c144 = arith.constant 144 : index
    %86 = vector.load %arg7[%c0_52, %c144] : memref<4x512xf32, #tpu.memory_space<vmem>>, vector<4x256xf32>
    %c7 = arith.constant 7 : index
    %c0_53 = arith.constant 0 : index
    %c0_54 = arith.constant 0 : index
    %87 = vector.load %arg2[%c7, %c0_53, %c0_54] : memref<9x32x4xf32, #tpu.memory_space<vmem>>, vector<1x32x4xf32>
    %88 = vector.shape_cast %87 : vector<1x32x4xf32> to vector<32x4xf32>
    %cst_55 = arith.constant dense<0.000000e+00> : vector<32x256xf32>
    %89 = tpu.matmul %88, %86, %cst_55 {dimension_numbers = #tpu.dot_dimension_numbers<[1], [0], [0], [1], [0, 0, 1, 1], [], []>} : vector<32x4xf32>, vector<4x256xf32>, vector<32x256xf32> -> vector<32x256xf32>
    %90 = arith.addf %85, %89 : vector<32x256xf32>
    %c0_56 = arith.constant 0 : index
    %c145 = arith.constant 145 : index
    %91 = vector.load %arg7[%c0_56, %c145] : memref<4x512xf32, #tpu.memory_space<vmem>>, vector<4x256xf32>
    %cst_57 = arith.constant 0.000000e+00 : f32
    %92 = vector.shape_cast %20 : vector<1x256xi1> to vector<1x256xi1>
    %93 = vector.broadcast %92 : vector<1x256xi1> to vector<4x256xi1>
    %94 = vector.broadcast %cst_57 : f32 to vector<4x256xf32>
    %95 = arith.select %93, %91, %94 : vector<4x256xi1>, vector<4x256xf32>
    %c8 = arith.constant 8 : index
    %c0_58 = arith.constant 0 : index
    %c0_59 = arith.constant 0 : index
    %96 = vector.load %arg2[%c8, %c0_58, %c0_59] : memref<9x32x4xf32, #tpu.memory_space<vmem>>, vector<1x32x4xf32>
    %97 = vector.shape_cast %96 : vector<1x32x4xf32> to vector<32x4xf32>
    %cst_60 = arith.constant dense<0.000000e+00> : vector<32x256xf32>
    %98 = tpu.matmul %97, %95, %cst_60 {dimension_numbers = #tpu.dot_dimension_numbers<[1], [0], [0], [1], [0, 0, 1, 1], [], []>} : vector<32x4xf32>, vector<4x256xf32>, vector<32x256xf32> -> vector<32x256xf32>
    %99 = arith.addf %90, %98 : vector<32x256xf32>
    %c0_61 = arith.constant 0 : index
    %c0_62 = arith.constant 0 : index
    %100 = vector.load %arg3[%c0_61, %c0_62] : memref<32x1xf32, #tpu.memory_space<vmem>>, vector<32x1xf32>
    %101 = vector.broadcast %100 : vector<32x1xf32> to vector<32x256xf32>
    %102 = arith.addf %99, %101 : vector<32x256xf32>
    %cst_63 = arith.constant dense<0.000000e+00> : vector<32xf32>
    %103 = vector.multi_reduction <add>, %102, %cst_63 [1] : vector<32x256xf32> to vector<32xf32>
    %104 = vector.shape_cast %103 : vector<32xf32> to vector<32x1xf32>
    %105 = arith.mulf %102, %102 : vector<32x256xf32>
    %cst_64 = arith.constant dense<0.000000e+00> : vector<32xf32>
    %106 = vector.multi_reduction <add>, %105, %cst_64 [1] : vector<32x256xf32> to vector<32xf32>
    %107 = vector.shape_cast %106 : vector<32xf32> to vector<32x1xf32>
    %cst_65 = arith.constant 3.906250e-03 : f32
    %108 = vector.broadcast %cst_65 : f32 to vector<32x1xf32>
    %109 = arith.mulf %104, %108 : vector<32x1xf32>
    %cst_66 = arith.constant 3.906250e-03 : f32
    %110 = vector.broadcast %cst_66 : f32 to vector<32x1xf32>
    %111 = arith.mulf %107, %110 : vector<32x1xf32>
    %112 = arith.mulf %109, %109 : vector<32x1xf32>
    %113 = arith.subf %111, %112 : vector<32x1xf32>
    %114 = vector.broadcast %109 : vector<32x1xf32> to vector<32x256xf32>
    %115 = arith.subf %102, %114 : vector<32x256xf32>
    %cst_67 = arith.constant 9.99999974E-6 : f32
    %116 = vector.broadcast %cst_67 : f32 to vector<32x1xf32>
    %117 = arith.addf %113, %116 : vector<32x1xf32>
    %118 = math.rsqrt %117 : vector<32x1xf32>
    %119 = vector.broadcast %118 : vector<32x1xf32> to vector<32x256xf32>
    %120 = arith.mulf %115, %119 : vector<32x256xf32>
    %cst_68 = arith.constant 0.000000e+00 : f32
    %121 = vector.broadcast %cst_68 : f32 to vector<32x256xf32>
    %122 = arith.maximumf %120, %121 : vector<32x256xf32>
    %c0_69 = arith.constant 0 : index
    %c128_70 = arith.constant 128 : index
    %123 = vector.load %arg8[%c0_69, %c128_70] : memref<32x512xf32, #tpu.memory_space<vmem>>, vector<32x256xf32>
    tpu.vector_store %arg8[%c0_69, %c128_70], %122 {strides = array<i32>} : memref<32x512xf32, #tpu.memory_space<vmem>>, vector<32x256xf32>,
    %c0_71 = arith.constant 0 : index
    %c111_72 = arith.constant 111 : index
    %124 = vector.load %arg8[%c0_71, %c111_72] : memref<32x512xf32, #tpu.memory_space<vmem>>, vector<32x256xf32>
    %cst_73 = arith.constant 0.000000e+00 : f32
    %125 = vector.shape_cast %18 : vector<1x256xi1> to vector<1x256xi1>
    %126 = vector.broadcast %125 : vector<1x256xi1> to vector<32x256xi1>
    %127 = vector.broadcast %cst_73 : f32 to vector<32x256xf32>
    %128 = arith.select %126, %124, %127 : vector<32x256xi1>, vector<32x256xf32>
    %c0_74 = arith.constant 0 : index
    %c0_75 = arith.constant 0 : index
    %c0_76 = arith.constant 0 : index
    %129 = vector.load %arg4[%c0_74, %c0_75, %c0_76] : memref<9x32x32xf32, #tpu.memory_space<vmem>>, vector<1x32x32xf32>
    %130 = vector.shape_cast %129 : vector<1x32x32xf32> to vector<32x32xf32>
    %cst_77 = arith.constant dense<0.000000e+00> : vector<32x256xf32>
    %131 = tpu.matmul %130, %128, %cst_77 {dimension_numbers = #tpu.dot_dimension_numbers<[1], [0], [0], [1], [0, 0, 1, 1], [], []>} : vector<32x32xf32>, vector<32x256xf32>, vector<32x256xf32> -> vector<32x256xf32>
    %c0_78 = arith.constant 0 : index
    %c112_79 = arith.constant 112 : index
    %132 = vector.load %arg8[%c0_78, %c112_79] : memref<32x512xf32, #tpu.memory_space<vmem>>, vector<32x256xf32>
    %c1_80 = arith.constant 1 : index
    %c0_81 = arith.constant 0 : index
    %c0_82 = arith.constant 0 : index
    %133 = vector.load %arg4[%c1_80, %c0_81, %c0_82] : memref<9x32x32xf32, #tpu.memory_space<vmem>>, vector<1x32x32xf32>
    %134 = vector.shape_cast %133 : vector<1x32x32xf32> to vector<32x32xf32>
    %cst_83 = arith.constant dense<0.000000e+00> : vector<32x256xf32>
    %135 = tpu.matmul %134, %132, %cst_83 {dimension_numbers = #tpu.dot_dimension_numbers<[1], [0], [0], [1], [0, 0, 1, 1], [], []>} : vector<32x32xf32>, vector<32x256xf32>, vector<32x256xf32> -> vector<32x256xf32>
    %136 = arith.addf %131, %135 : vector<32x256xf32>
    %c0_84 = arith.constant 0 : index
    %c113_85 = arith.constant 113 : index
    %137 = vector.load %arg8[%c0_84, %c113_85] : memref<32x512xf32, #tpu.memory_space<vmem>>, vector<32x256xf32>
    %cst_86 = arith.constant 0.000000e+00 : f32
    %138 = vector.shape_cast %20 : vector<1x256xi1> to vector<1x256xi1>
    %139 = vector.broadcast %138 : vector<1x256xi1> to vector<32x256xi1>
    %140 = vector.broadcast %cst_86 : f32 to vector<32x256xf32>
    %141 = arith.select %139, %137, %140 : vector<32x256xi1>, vector<32x256xf32>
    %c2_87 = arith.constant 2 : index
    %c0_88 = arith.constant 0 : index
    %c0_89 = arith.constant 0 : index
    %142 = vector.load %arg4[%c2_87, %c0_88, %c0_89] : memref<9x32x32xf32, #tpu.memory_space<vmem>>, vector<1x32x32xf32>
    %143 = vector.shape_cast %142 : vector<1x32x32xf32> to vector<32x32xf32>
    %cst_90 = arith.constant dense<0.000000e+00> : vector<32x256xf32>
    %144 = tpu.matmul %143, %141, %cst_90 {dimension_numbers = #tpu.dot_dimension_numbers<[1], [0], [0], [1], [0, 0, 1, 1], [], []>} : vector<32x32xf32>, vector<32x256xf32>, vector<32x256xf32> -> vector<32x256xf32>
    %145 = arith.addf %136, %144 : vector<32x256xf32>
    %c0_91 = arith.constant 0 : index
    %c127_92 = arith.constant 127 : index
    %146 = vector.load %arg8[%c0_91, %c127_92] : memref<32x512xf32, #tpu.memory_space<vmem>>, vector<32x256xf32>
    %cst_93 = arith.constant 0.000000e+00 : f32
    %147 = vector.shape_cast %18 : vector<1x256xi1> to vector<1x256xi1>
    %148 = vector.broadcast %147 : vector<1x256xi1> to vector<32x256xi1>
    %149 = vector.broadcast %cst_93 : f32 to vector<32x256xf32>
    %150 = arith.select %148, %146, %149 : vector<32x256xi1>, vector<32x256xf32>
    %c3_94 = arith.constant 3 : index
    %c0_95 = arith.constant 0 : index
    %c0_96 = arith.constant 0 : index
    %151 = vector.load %arg4[%c3_94, %c0_95, %c0_96] : memref<9x32x32xf32, #tpu.memory_space<vmem>>, vector<1x32x32xf32>
    %152 = vector.shape_cast %151 : vector<1x32x32xf32> to vector<32x32xf32>
    %cst_97 = arith.constant dense<0.000000e+00> : vector<32x256xf32>
    %153 = tpu.matmul %152, %150, %cst_97 {dimension_numbers = #tpu.dot_dimension_numbers<[1], [0], [0], [1], [0, 0, 1, 1], [], []>} : vector<32x32xf32>, vector<32x256xf32>, vector<32x256xf32> -> vector<32x256xf32>
    %154 = arith.addf %145, %153 : vector<32x256xf32>
    %c0_98 = arith.constant 0 : index
    %c128_99 = arith.constant 128 : index
    %155 = vector.load %arg8[%c0_98, %c128_99] : memref<32x512xf32, #tpu.memory_space<vmem>>, vector<32x256xf32>
    %c4_100 = arith.constant 4 : index
    %c0_101 = arith.constant 0 : index
    %c0_102 = arith.constant 0 : index
    %156 = vector.load %arg4[%c4_100, %c0_101, %c0_102] : memref<9x32x32xf32, #tpu.memory_space<vmem>>, vector<1x32x32xf32>
    %157 = vector.shape_cast %156 : vector<1x32x32xf32> to vector<32x32xf32>
    %cst_103 = arith.constant dense<0.000000e+00> : vector<32x256xf32>
    %158 = tpu.matmul %157, %155, %cst_103 {dimension_numbers = #tpu.dot_dimension_numbers<[1], [0], [0], [1], [0, 0, 1, 1], [], []>} : vector<32x32xf32>, vector<32x256xf32>, vector<32x256xf32> -> vector<32x256xf32>
    %159 = arith.addf %154, %158 : vector<32x256xf32>
    %c0_104 = arith.constant 0 : index
    %c129_105 = arith.constant 129 : index
    %160 = vector.load %arg8[%c0_104, %c129_105] : memref<32x512xf32, #tpu.memory_space<vmem>>, vector<32x256xf32>
    %cst_106 = arith.constant 0.000000e+00 : f32
    %161 = vector.shape_cast %20 : vector<1x256xi1> to vector<1x256xi1>
    %162 = vector.broadcast %161 : vector<1x256xi1> to vector<32x256xi1>
    %163 = vector.broadcast %cst_106 : f32 to vector<32x256xf32>
    %164 = arith.select %162, %160, %163 : vector<32x256xi1>, vector<32x256xf32>
    %c5_107 = arith.constant 5 : index
    %c0_108 = arith.constant 0 : index
    %c0_109 = arith.constant 0 : index
    %165 = vector.load %arg4[%c5_107, %c0_108, %c0_109] : memref<9x32x32xf32, #tpu.memory_space<vmem>>, vector<1x32x32xf32>
    %166 = vector.shape_cast %165 : vector<1x32x32xf32> to vector<32x32xf32>
    %cst_110 = arith.constant dense<0.000000e+00> : vector<32x256xf32>
    %167 = tpu.matmul %166, %164, %cst_110 {dimension_numbers = #tpu.dot_dimension_numbers<[1], [0], [0], [1], [0, 0, 1, 1], [], []>} : vector<32x32xf32>, vector<32x256xf32>, vector<32x256xf32> -> vector<32x256xf32>
    %168 = arith.addf %159, %167 : vector<32x256xf32>
    %c0_111 = arith.constant 0 : index
    %c143_112 = arith.constant 143 : index
    %169 = vector.load %arg8[%c0_111, %c143_112] : memref<32x512xf32, #tpu.memory_space<vmem>>, vector<32x256xf32>
    %cst_113 = arith.constant 0.000000e+00 : f32
    %170 = vector.shape_cast %18 : vector<1x256xi1> to vector<1x256xi1>
    %171 = vector.broadcast %170 : vector<1x256xi1> to vector<32x256xi1>
    %172 = vector.broadcast %cst_113 : f32 to vector<32x256xf32>
    %173 = arith.select %171, %169, %172 : vector<32x256xi1>, vector<32x256xf32>
    %c6_114 = arith.constant 6 : index
    %c0_115 = arith.constant 0 : index
    %c0_116 = arith.constant 0 : index
    %174 = vector.load %arg4[%c6_114, %c0_115, %c0_116] : memref<9x32x32xf32, #tpu.memory_space<vmem>>, vector<1x32x32xf32>
    %175 = vector.shape_cast %174 : vector<1x32x32xf32> to vector<32x32xf32>
    %cst_117 = arith.constant dense<0.000000e+00> : vector<32x256xf32>
    %176 = tpu.matmul %175, %173, %cst_117 {dimension_numbers = #tpu.dot_dimension_numbers<[1], [0], [0], [1], [0, 0, 1, 1], [], []>} : vector<32x32xf32>, vector<32x256xf32>, vector<32x256xf32> -> vector<32x256xf32>
    %177 = arith.addf %168, %176 : vector<32x256xf32>
    %c0_118 = arith.constant 0 : index
    %c144_119 = arith.constant 144 : index
    %178 = vector.load %arg8[%c0_118, %c144_119] : memref<32x512xf32, #tpu.memory_space<vmem>>, vector<32x256xf32>
    %c7_120 = arith.constant 7 : index
    %c0_121 = arith.constant 0 : index
    %c0_122 = arith.constant 0 : index
    %179 = vector.load %arg4[%c7_120, %c0_121, %c0_122] : memref<9x32x32xf32, #tpu.memory_space<vmem>>, vector<1x32x32xf32>
    %180 = vector.shape_cast %179 : vector<1x32x32xf32> to vector<32x32xf32>
    %cst_123 = arith.constant dense<0.000000e+00> : vector<32x256xf32>
    %181 = tpu.matmul %180, %178, %cst_123 {dimension_numbers = #tpu.dot_dimension_numbers<[1], [0], [0], [1], [0, 0, 1, 1], [], []>} : vector<32x32xf32>, vector<32x256xf32>, vector<32x256xf32> -> vector<32x256xf32>
    %182 = arith.addf %177, %181 : vector<32x256xf32>
    %c0_124 = arith.constant 0 : index
    %c145_125 = arith.constant 145 : index
    %183 = vector.load %arg8[%c0_124, %c145_125] : memref<32x512xf32, #tpu.memory_space<vmem>>, vector<32x256xf32>
    %cst_126 = arith.constant 0.000000e+00 : f32
    %184 = vector.shape_cast %20 : vector<1x256xi1> to vector<1x256xi1>
    %185 = vector.broadcast %184 : vector<1x256xi1> to vector<32x256xi1>
    %186 = vector.broadcast %cst_126 : f32 to vector<32x256xf32>
    %187 = arith.select %185, %183, %186 : vector<32x256xi1>, vector<32x256xf32>
    %c8_127 = arith.constant 8 : index
    %c0_128 = arith.constant 0 : index
    %c0_129 = arith.constant 0 : index
    %188 = vector.load %arg4[%c8_127, %c0_128, %c0_129] : memref<9x32x32xf32, #tpu.memory_space<vmem>>, vector<1x32x32xf32>
    %189 = vector.shape_cast %188 : vector<1x32x32xf32> to vector<32x32xf32>
    %cst_130 = arith.constant dense<0.000000e+00> : vector<32x256xf32>
    %190 = tpu.matmul %189, %187, %cst_130 {dimension_numbers = #tpu.dot_dimension_numbers<[1], [0], [0], [1], [0, 0, 1, 1], [], []>} : vector<32x32xf32>, vector<32x256xf32>, vector<32x256xf32> -> vector<32x256xf32>
    %191 = arith.addf %182, %190 : vector<32x256xf32>
    %c0_131 = arith.constant 0 : index
    %c0_132 = arith.constant 0 : index
    %192 = vector.load %arg5[%c0_131, %c0_132] : memref<32x1xf32, #tpu.memory_space<vmem>>, vector<32x1xf32>
    %193 = vector.broadcast %192 : vector<32x1xf32> to vector<32x256xf32>
    %194 = arith.addf %191, %193 : vector<32x256xf32>
    %cst_133 = arith.constant dense<0.000000e+00> : vector<32xf32>
    %195 = vector.multi_reduction <add>, %194, %cst_133 [1] : vector<32x256xf32> to vector<32xf32>
    %196 = vector.shape_cast %195 : vector<32xf32> to vector<32x1xf32>
    %197 = arith.mulf %194, %194 : vector<32x256xf32>
    %cst_134 = arith.constant dense<0.000000e+00> : vector<32xf32>
    %198 = vector.multi_reduction <add>, %197, %cst_134 [1] : vector<32x256xf32> to vector<32xf32>
    %199 = vector.shape_cast %198 : vector<32xf32> to vector<32x1xf32>
    %cst_135 = arith.constant 3.906250e-03 : f32
    %200 = vector.broadcast %cst_135 : f32 to vector<32x1xf32>
    %201 = arith.mulf %196, %200 : vector<32x1xf32>
    %cst_136 = arith.constant 3.906250e-03 : f32
    %202 = vector.broadcast %cst_136 : f32 to vector<32x1xf32>
    %203 = arith.mulf %199, %202 : vector<32x1xf32>
    %204 = arith.mulf %201, %201 : vector<32x1xf32>
    %205 = arith.subf %203, %204 : vector<32x1xf32>
    %206 = vector.broadcast %201 : vector<32x1xf32> to vector<32x256xf32>
    %207 = arith.subf %194, %206 : vector<32x256xf32>
    %cst_137 = arith.constant 9.99999974E-6 : f32
    %208 = vector.broadcast %cst_137 : f32 to vector<32x1xf32>
    %209 = arith.addf %205, %208 : vector<32x1xf32>
    %210 = math.rsqrt %209 : vector<32x1xf32>
    %211 = vector.broadcast %210 : vector<32x1xf32> to vector<32x256xf32>
    %212 = arith.mulf %207, %211 : vector<32x256xf32>
    %cst_138 = arith.constant 0.000000e+00 : f32
    %213 = vector.broadcast %cst_138 : f32 to vector<32x256xf32>
    %214 = arith.maximumf %212, %213 : vector<32x256xf32>
    %c0_139 = arith.constant 0 : index
    %c0_140 = arith.constant 0 : index
    %c0_141 = arith.constant 0 : index
    %215 = vector.load %arg6[%c0_139, %c0_140, %c0_141] : memref<1x32x256xf32, #tpu.memory_space<vmem>>, vector<1x32x256xf32>
    %216 = vector.shape_cast %215 : vector<1x32x256xf32> to vector<32x256xf32>
    %217 = vector.shape_cast %214 : vector<32x256xf32> to vector<1x32x256xf32>
    tpu.vector_store %arg6[%c0_139, %c0_140, %c0_141], %217 {strides = array<i32>} : memref<1x32x256xf32, #tpu.memory_space<vmem>>, vector<1x32x256xf32>,
    return
  }
  func.func @transform_0(%arg0: i32) -> (i32, i32, i32) {
    %c0_i32 = arith.constant 0 : i32
    %c0_i32_0 = arith.constant 0 : i32
    %c0_i32_1 = arith.constant 0 : i32
    return %arg0, %c0_i32, %c0_i32_0 : i32, i32, i32
  }
  func.func @transform_1(%arg0: i32) -> (i32, i32, i32) {
    %c0_i32 = arith.constant 0 : i32
    %c0_i32_0 = arith.constant 0 : i32
    %c0_i32_1 = arith.constant 0 : i32
    %c0_i32_2 = arith.constant 0 : i32
    return %c0_i32, %c0_i32_0, %c0_i32_1 : i32, i32, i32
  }
  func.func @transform_2(%arg0: i32) -> (i32, i32) {
    %c0_i32 = arith.constant 0 : i32
    %c0_i32_0 = arith.constant 0 : i32
    %c0_i32_1 = arith.constant 0 : i32
    return %c0_i32, %c0_i32_0 : i32, i32
  }
  func.func @transform_3(%arg0: i32) -> (i32, i32, i32) {
    %c0_i32 = arith.constant 0 : i32
    %c0_i32_0 = arith.constant 0 : i32
    %c0_i32_1 = arith.constant 0 : i32
    %c0_i32_2 = arith.constant 0 : i32
    return %c0_i32, %c0_i32_0, %c0_i32_1 : i32, i32, i32
  }
  func.func @transform_4(%arg0: i32) -> (i32, i32) {
    %c0_i32 = arith.constant 0 : i32
    %c0_i32_0 = arith.constant 0 : i32
    %c0_i32_1 = arith.constant 0 : i32
    return %c0_i32, %c0_i32_0 : i32, i32
  }
  func.func @transform_5(%arg0: i32) -> (i32, i32, i32) {
    %c0_i32 = arith.constant 0 : i32
    %c0_i32_0 = arith.constant 0 : i32
    %c0_i32_1 = arith.constant 0 : i32
    return %arg0, %c0_i32, %c0_i32_0 : i32, i32, i32
  }
}

</mosaic_0001>

<llo_original>
// kernel: tpu_custom_call.1
$region0: #{tpu_custom_call.1}
  #allocation0 [shape = 'u32[]', space=smem, size = 0x4, offset = 0x4, fixed_abs, tag = 'smem constant byte address 0x4 - core index']
  #allocation1 [shape = 'u32[144,128]{1,0:T(1,128)}', space=vmem, size = 0x12000, scoped, tag = 'internal scratch']
  #allocation2 [shape = 'f32[4,512]{1,0:T(4,128)}', space=vmem, size = 0x2000, scoped, tag = 'scratch operand']
  #allocation3 [shape = 'f32[32,512]{1,0:T(8,128)}', space=vmem, size = 0x10000, scoped, tag = 'scratch operand']
  %s0 = inlined_call_operand.vmem [shape: f32[2,4,256], index: 0, kind: input, shape index: {}]
  %s1 = inlined_call_operand.vmem [shape: f32[9,32,4], index: 1, kind: input, shape index: {}]
  %s2 = inlined_call_operand.vmem [shape: f32[32,1], index: 2, kind: input, shape index: {}]
  %s3 = inlined_call_operand.vmem [shape: f32[9,32,32], index: 3, kind: input, shape index: {}]
  %s4 = inlined_call_operand.vmem [shape: f32[32,1], index: 4, kind: input, shape index: {}]
  %s5 = inlined_call_operand.hbm [shape: f32[2,32,256], index: 5, kind: output, shape index: {}]
  %s6 = sld [smem:[#allocation0]]
  $region53: #{tpu_custom_call.1} parent=0
    _
  %s8 = ssub.s32 1, %s6
  %s9 = scalar_select 0, %s8, %s6
  $region1: #{tpu_custom_call.1} parent=0
    #allocation4 [shape = 'u8[65536]{0}', space=vmem, size = 0x10000, scoped, tag = 'output window, operand 0']
    #allocation5 [shape = 's32[2]{0}', space=sflag, size = 0x8, scoped, tag = 'scoped memory for tpu_custom_call.1']
    %10 = vsyncpa [#allocation5], 0
    %s11 = scalar_lea.sflag [#allocation5], 1
    %12 = vsyncpa %s11, 0
    loop: start=0, step=1, limit=4
    $region2: #{tpu_custom_call.1} parent=1 // loop_pre_header
      _
    $region3: #{tpu_custom_call.1} parent=1 // loop_header
      %s14 = sphi 0, %s18
      %p15 = scmp.ge.s32.totalorder %s14, 4
      %s24 = sphi 0, %s26
      %s27 = sphi 0, %s24
      %s28 = sphi 0, %s27
      %s44 = sphi 0, %s28
      %s48 = sphi 0, %s48
      %s50 = sphi 0, %s48
      %s51 = sphi 0, %s50
      %s65 = sphi 0, %s51
      %s69 = sphi 0, %s69
      %s71 = sphi 0, %s69
      %s72 = sphi 0, %s71
      %s86 = sphi 0, %s72
      %s90 = sphi 0, %s90
      %s92 = sphi 0, %s90
      %s93 = sphi 0, %s92
      %s107 = sphi 0, %s93
      %s111 = sphi 0, %s111
      %s113 = sphi 0, %s111
      %s114 = sphi 0, %s113
      %s128 = sphi 0, %s114
      %s134 = sphi 0, %s136
      %s137 = sphi 0, %s134
      %s138 = sphi 0, %s137
      %s154 = sphi 0, %s138
    $region4: #{tpu_custom_call.1} parent=1 // loop_header_branch
      %17 = sbr.rel (%p15) target = $region8
    $region5: #{tpu_custom_call.1} parent=1 // loop_body
      %s19 = ssub.s32 %s14, 1
      %s20 = ssub.s32 %s14, 2
      %s21 = sadd.s32 %s14, 1
      %s22 = ssub.s32 %s14, %s21
      %p23 = scmp.eq.s32.totalorder %s22, 0
      %s25 = sadd.s32 %s24, 1
      %s26 = scalar_select %p23, %s24, %s25
      %p29 = pneg %p23
      %p30 = scmp.eq.s32.totalorder %s14, 1
      %p31 = por %p29, %p30
      %p32 = scmp.ne.s32.totalorder %s24, %s27
      %p33 = scmp.eq.s32.totalorder %s14, 0
      %p34 = por %p32, %p33
      %p35 = scmp.ne.s32.totalorder %s24, %s27
      %p36 = scmp.eq.s32.totalorder %s19, 1
      %p37 = por %p35, %p36
      %p38 = scmp.ne.s32.totalorder %s27, %s28
      %p39 = scmp.eq.s32.totalorder %s19, 0
      %p40 = por %p38, %p39
      %p41 = scmp.ne.s32.totalorder %s27, %s28
      %p42 = scmp.eq.s32.totalorder %s20, 1
      %p43 = por %p41, %p42
      %p45 = scmp.ne.s32.totalorder %s28, %s44
      %p46 = scmp.eq.s32.totalorder %s20, 0
      %p47 = por %p45, %p46
      %s49 = sadd.s32 %s48, 1
      %p52 = scmp.eq.s32.totalorder %s14, 1
      %p53 = scmp.ne.s32.totalorder %s48, %s50
      %p54 = scmp.eq.s32.totalorder %s14, 0
      %p55 = por %p53, %p54
      %p56 = scmp.ne.s32.totalorder %s48, %s50
      %p57 = scmp.eq.s32.totalorder %s19, 1
      %p58 = por %p56, %p57
      %p59 = scmp.ne.s32.totalorder %s50, %s51
      %p60 = scmp.eq.s32.totalorder %s19, 0
      %p61 = por %p59, %p60
      %p62 = scmp.ne.s32.totalorder %s50, %s51
      %p63 = scmp.eq.s32.totalorder %s20, 1
      %p64 = por %p62, %p63
      %p66 = scmp.ne.s32.totalorder %s51, %s65
      %p67 = scmp.eq.s32.totalorder %s20, 0
      %p68 = por %p66, %p67
      %s70 = sadd.s32 %s69, 1
      %p73 = scmp.eq.s32.totalorder %s14, 1
      %p74 = scmp.ne.s32.totalorder %s69, %s71
      %p75 = scmp.eq.s32.totalorder %s14, 0
      %p76 = por %p74, %p75
      %p77 = scmp.ne.s32.totalorder %s69, %s71
      %p78 = scmp.eq.s32.totalorder %s19, 1
      %p79 = por %p77, %p78
      %p80 = scmp.ne.s32.totalorder %s71, %s72
      %p81 = scmp.eq.s32.totalorder %s19, 0
      %p82 = por %p80, %p81
      %p83 = scmp.ne.s32.totalorder %s71, %s72
      %p84 = scmp.eq.s32.totalorder %s20, 1
      %p85 = por %p83, %p84
      %p87 = scmp.ne.s32.totalorder %s72, %s86
      %p88 = scmp.eq.s32.totalorder %s20, 0
      %p89 = por %p87, %p88
      %s91 = sadd.s32 %s90, 1
      %p94 = scmp.eq.s32.totalorder %s14, 1
      %p95 = scmp.ne.s32.totalorder %s90, %s92
      %p96 = scmp.eq.s32.totalorder %s14, 0
      %p97 = por %p95, %p96
      %p98 = scmp.ne.s32.totalorder %s90, %s92
      %p99 = scmp.eq.s32.totalorder %s19, 1
      %p100 = por %p98, %p99
      %p101 = scmp.ne.s32.totalorder %s92, %s93
      %p102 = scmp.eq.s32.totalorder %s19, 0
      %p103 = por %p101, %p102
      %p104 = scmp.ne.s32.totalorder %s92, %s93
      %p105 = scmp.eq.s32.totalorder %s20, 1
      %p106 = por %p104, %p105
      %p108 = scmp.ne.s32.totalorder %s93, %s107
      %p109 = scmp.eq.s32.totalorder %s20, 0
      %p110 = por %p108, %p109
      %s112 = sadd.s32 %s111, 1
      %p115 = scmp.eq.s32.totalorder %s14, 1
      %p116 = scmp.ne.s32.totalorder %s111, %s113
      %p117 = scmp.eq.s32.totalorder %s14, 0
      %p118 = por %p116, %p117
      %p119 = scmp.ne.s32.totalorder %s111, %s113
      %p120 = scmp.eq.s32.totalorder %s19, 1
      %p121 = por %p119, %p120
      %p122 = scmp.ne.s32.totalorder %s113, %s114
      %p123 = scmp.eq.s32.totalorder %s19, 0
      %p124 = por %p122, %p123
      %p125 = scmp.ne.s32.totalorder %s113, %s114
      %p126 = scmp.eq.s32.totalorder %s20, 1
      %p127 = por %p125, %p126
      %p129 = scmp.ne.s32.totalorder %s114, %s128
      %p130 = scmp.eq.s32.totalorder %s20, 0
      %p131 = por %p129, %p130
      %s132 = ssub.s32 %s14, %s21
      %p133 = scmp.eq.s32.totalorder %s132, 0
      %s135 = sadd.s32 %s134, 1
      %s136 = scalar_select %p133, %s134, %s135
      %p139 = pneg %p133
      %p140 = scmp.eq.s32.totalorder %s14, 1
      %p141 = por %p139, %p140
      %p142 = scmp.ne.s32.totalorder %s134, %s137
      %p143 = scmp.eq.s32.totalorder %s14, 0
      %p144 = por %p142, %p143
      %p145 = scmp.ne.s32.totalorder %s134, %s137
      %p146 = scmp.eq.s32.totalorder %s19, 1
      %p147 = por %p145, %p146
      %p148 = scmp.ne.s32.totalorder %s137, %s138
      %p149 = scmp.eq.s32.totalorder %s19, 0
      %p150 = por %p148, %p149
      %p151 = scmp.ne.s32.totalorder %s137, %s138
      %p152 = scmp.eq.s32.totalorder %s20, 1
      %p153 = por %p151, %p152
      %p155 = scmp.ne.s32.totalorder %s138, %s154
      %p156 = scmp.eq.s32.totalorder %s20, 0
      %p157 = por %p155, %p156
      %p158 = scmp.le.s32.totalorder 1, %s14
      %p159 = scmp.lt.s32.totalorder %s14, 3
      %p160 = pnand %p158, %p159
      %p161 = pneg %p160
      // Predicated region
      $region9: #{tpu_custom_call.1} parent=5 // pred_check
        _
      $region10: #{tpu_custom_call.1} parent=5 // pred_check_branch
        %163 = sbr.rel (%p160) target = $region12
      $region11: #{tpu_custom_call.1} parent=5 // pred_region
        %s164 = ssub.s32 %s14, 1
        // Predicated region
        $region13: #{tpu_custom_call.1} parent=11 // pred_check
          %p165 = pneg %p61
        $region14: #{tpu_custom_call.1} parent=11 // pred_check_branch
          %167 = sbr.rel (%p165) target = $region16
        $region15: #{tpu_custom_call.1} parent=11 // pred_region
          _
        $region16: #{tpu_custom_call.1} parent=11 // pred_fallthru
          _
        // Predicated region
        $region17: #{tpu_custom_call.1} parent=11 // pred_check
          %p168 = pneg %p82
        $region18: #{tpu_custom_call.1} parent=11 // pred_check_branch
          %170 = sbr.rel (%p168) target = $region20
        $region19: #{tpu_custom_call.1} parent=11 // pred_region
          _
        $region20: #{tpu_custom_call.1} parent=11 // pred_fallthru
          _
        // Predicated region
        $region21: #{tpu_custom_call.1} parent=11 // pred_check
          %p171 = pneg %p103
        $region22: #{tpu_custom_call.1} parent=11 // pred_check_branch
          %173 = sbr.rel (%p171) target = $region24
        $region23: #{tpu_custom_call.1} parent=11 // pred_region
          _
        $region24: #{tpu_custom_call.1} parent=11 // pred_fallthru
          _
        // Predicated region
        $region25: #{tpu_custom_call.1} parent=11 // pred_check
          %p174 = pneg %p124
        $region26: #{tpu_custom_call.1} parent=11 // pred_check_branch
          %176 = sbr.rel (%p174) target = $region28
        $region27: #{tpu_custom_call.1} parent=11 // pred_region
          _
        $region28: #{tpu_custom_call.1} parent=11 // pred_fallthru
          _
      $region12: #{tpu_custom_call.1} parent=5 // pred_fallthru
        _
      %p177 = scmp.lt.s32.totalorder %s14, 2
      // Predicated region
      $region29: #{tpu_custom_call.1} parent=5 // pred_check
        %p178 = pneg %p177
      $region30: #{tpu_custom_call.1} parent=5 // pred_check_branch
        %180 = sbr.rel (%p178) target = $region32
      $region31: #{tpu_custom_call.1} parent=5 // pred_region
        // Predicated region
        $region33: #{tpu_custom_call.1} parent=31 // pred_check
          %p181 = pneg %p34
        $region34: #{tpu_custom_call.1} parent=31 // pred_check_branch
          %183 = sbr.rel (%p181) target = $region36
        $region35: #{tpu_custom_call.1} parent=31 // pred_region
          %p184 = scmp.lt.s32.totalorder %s14, 1
          %s185 = scalar_select %p184, %s14, 1
          %s186 = smul.addr %s185, 2
          %s187 = smul.addr %s186, 4
          %s188 = scalar_lea.vmem %s0, %s187
        $region36: #{tpu_custom_call.1} parent=31 // pred_fallthru
          _
      $region32: #{tpu_custom_call.1} parent=5 // pred_fallthru
        _
      %p189 = scmp.le.s32.totalorder 1, %s14
      %p190 = scmp.lt.s32.totalorder %s14, 3
      %p191 = pnand %p189, %p190
      %p192 = pneg %p191
      // Predicated region
      $region37: #{tpu_custom_call.1} parent=5 // pred_check
        _
      $region38: #{tpu_custom_call.1} parent=5 // pred_check_branch
        %194 = sbr.rel (%p191) target = $region40
      $region39: #{tpu_custom_call.1} parent=5 // pred_region
        %s195 = ssub.s32 %s14, 1
        %p196 = scmp.lt.s32.totalorder %s19, 1
        %s197 = scalar_select %p196, %s19, 1
        %s198 = smul.addr %s197, 2
        %s199 = smul.addr %s198, 4
        %s200 = scalar_lea.vmem %s0, %s199
        %p201 = pneg %p40
        %p202 = pneg %p37
        %p203 = pneg %p61
        %p204 = pneg %p58
        %p205 = pneg %p82
        %p206 = pneg %p79
        %p207 = pneg %p103
        %p208 = pneg %p100
        %p209 = pneg %p124
        %p210 = pneg %p121
        %p211 = pneg %p150
        %p212 = pneg %p147
        %s213 = sand.u32 %s137, 1
        %s214 = scalar_lea.sflag [#allocation5], %s213
        %s215 = sand.u32 %s137, 1
        %s216 = smul.addr %s215, 64
        %s217 = scalar_lea.vmem [#allocation4], %s216
        %p218 = scmp.lt.s32.totalorder %s19, 1
        %s219 = scalar_select %p218, %s19, 1
        %s220 = smul.addr %s219, 2
        %s221 = smul.addr %s220, 4
        %s222 = scalar_lea.vmem %s0, %s221
        %v223 = vlaneseq
        %v224 = vand.u32 %v223, 127
        %v225 = vadd.s32 %v224, 128
        %vm226 = vcmp.lt.s32.totalorder %v224, 0
        %v227 = vsub.s32 0, %v224
        %v228 = vsel %vm226, %v227, %v224
        %v229 = vshrl.u32 %v228, 4
        %v230 = vand.u32 %v228, 15
        %v231 = vsub.s32 0, %v230
        %v232 = vsel %vm226, %v231, %v230
        %vm233 = vcmp.lt.s32.totalorder %v225, 0
        %v234 = vsub.s32 0, %v225
        %v235 = vsel %vm233, %v234, %v225
        %v236 = vshrl.u32 %v235, 4
        %v237 = vand.u32 %v235, 15
        %v238 = vsub.s32 0, %v237
        %v239 = vsel %vm233, %v238, %v237
        %vm240 = vcmp.ne.s32.totalorder %v232, 0
        %vm241 = vcmp.ne.s32.totalorder %v239, 0
        %vm242 = vcmp.lt.s32.totalorder %v232, 0
        %vm243 = vcmp.lt.s32.totalorder %v239, 0
        %vm244 = vmand %vm242, %vm240
        %vm245 = vmand %vm243, %vm241
        %v246 = vadd.s32 %v232, 16
        %v247 = vadd.s32 %v239, 16
        %v248 = vsel %vm244, %v246, %v232
        %v249 = vsel %vm245, %v247, %v239
        %vm250 = vcmp.ge.s32.totalorder %v248, 1
        %vm251 = vcmp.ge.s32.totalorder %v249, 1
        %vm252 = vcmp.lt.s32.totalorder %v248, 15
        %vm253 = vcmp.lt.s32.totalorder %v249, 15
        %254 = vst [vmem:[#allocation2] sm:$0xf] 0.0
        %255 = vst [vmem:[#allocation2 + $0xc] sm:$0xf] 0.0
        %256 = vst [vmem:[#allocation3] sm:$0xff] 0.0
        %257 = vst [vmem:[#allocation3 + $0x20] sm:$0xff] 0.0
        %258 = vst [vmem:[#allocation3 + $0x40] sm:$0xff] 0.0
        %259 = vst [vmem:[#allocation3 + $0x60] sm:$0xff] 0.0
        %260 = vst [vmem:[#allocation3 + $0x18] sm:$0xff] 0.0
        %261 = vst [vmem:[#allocation3 + $0x38] sm:$0xff] 0.0
        %262 = vst [vmem:[#allocation3 + $0x58] sm:$0xff] 0.0
        %263 = vst [vmem:[#allocation3 + $0x78] sm:$0xff] 0.0
        %v264 = vld [vmem:[%s222] sm:$0xff]
        %265 = vst [vmem:[#allocation2 + $0x4] sm:$0xff] %v264
        %v266 = vld [vmem:[#allocation2] sm:$0xff]
        %v267 = vld [vmem:[#allocation2 + $0x8] sm:$0xf]
        %v268 = vsel %vm250, 1, 0
        %v269 = vsel %vm251, 1, 0
        %vm270 = vcmp.eq.s32.totalorder %v268, 1
        %vm271 = vcmp.eq.s32.totalorder %v269, 1
        %v274 = vcombine.high %v266, %v266
        %275 = vrot.lane.b32.xlu0 %v266, 17
        %v276 = vpop.permute.xlu0 %275
        %277 = vrot.lane.b32.xlu0 %v274, 17
        %v278 = vpop.permute.xlu0 %277
        %279 = vrot.lane.b32.xlu0 %v267, 17
        %v280 = vpop.permute.xlu0 %279
        %vm281 = vcmask 138240
        %v282 = vsel %vm281, %v276, %v278
        %v283 = vsel %vm281, %v278, %v280
        %v286 = vsel %vm270, %v282, 0.0
        %v287 = vsel %vm271, %v283, 0.0
        %v288 = vld [vmem:[%s1] sm:$0xff]
        %v289 = vld [vmem:[%s1 + $0x8] sm:$0xff]
        %v290 = vld [vmem:[%s1 + $0x10] sm:$0xff]
        %v291 = vld [vmem:[%s1 + $0x18] sm:$0xff]
        %s292 = scalar_lea.vmem %s1, 32
        %v293 = vld [vmem:[%s292] sm:$0xff]
        %v294 = vld [vmem:[%s292 + $0x8] sm:$0xff]
        %v295 = vld [vmem:[%s292 + $0x10] sm:$0xff]
        %v296 = vld [vmem:[%s292 + $0x18] sm:$0xff]
        %297 = vrot.lane.b32.xlu0 %v266, 16
        %v298 = vpop.permute.xlu0 %297
        %299 = vrot.lane.b32.xlu0 %v274, 16
        %v300 = vpop.permute.xlu0 %299
        %301 = vrot.lane.b32.xlu0 %v267, 16
        %v302 = vpop.permute.xlu0 %301
        %vm303 = vcmask 130048
        %v304 = vsel %vm303, %v298, %v300
        %v305 = vsel %vm303, %v300, %v302
        %vm306 = vcmask 31744
        %v308 = vsel %vm306, %v293, 0
        %v311 = vsel %vm306, %v294, 0
        %v314 = vsel %vm306, %v295, 0
        %v317 = vsel %vm306, %v296, 0
        %vm319 = vcmask 1043456
        %v320 = vsel %vm319, %v304, 0
        %v322 = vsel %vm319, %v305, 0
        %324 = vmatprep.subr.mxu0 %v322
        %325 = vmatpush1.msra.mxu0 %v320
        %326 = vmatprep.subr.mxu0 0.0
        %327 = vmatpush1.msra.mxu0 0.0
        %328 = vmatprep.subr.mxu0 0.0
        %329 = vmatpush1.msra.mxu0 0.0
        %330 = vmatprep.subr.mxu0 0.0
        %331 = vmatpush1.msra.mxu0 0.0
        %332 = vmatprep.subr.mxu0 0.0
        %333 = vmatpush1.msra.mxu0 0.0
        %334 = vmatprep.subr.mxu0 0.0
        %335 = vmatpush1.msra.mxu0 0.0
        %336 = vmatprep.subr.mxu0 0.0
        %337 = vmatpush1.msra.mxu0 0.0
        %338 = vmatprep.subr.mxu0 0.0
        %339 = vmatpush1.msra.mxu0 0.0
        %340 = vmatprep.subr.mxu0 0.0
        %341 = vmatpush1.msra.mxu0 0.0
        %342 = vmatprep.subr.mxu0 0.0
        %343 = vmatpush1.msra.mxu0 0.0
        %344 = vmatprep.subr.mxu0 0.0
        %345 = vmatpush1.msra.mxu0 0.0
        %346 = vmatprep.subr.mxu0 0.0
        %347 = vmatpush1.msra.mxu0 0.0
        %348 = vmatprep.subr.mxu0 0.0
        %349 = vmatpush1.msra.mxu0 0.0
        %350 = vmatprep.subr.mxu0 0.0
        %351 = vmatpush1.msra.mxu0 0.0
        %352 = vmatprep.subr.mxu0 0.0
        %353 = vmatpush1.msra.mxu0 0.0
        %354 = vmatprep.subr.mxu0 0.0
        %355 = vmatpush1.msra.mxu0 0.0
        %356 = vmatprep.subr.mxu0 0.0
        %357 = vmatpush1.msra.mxu0 0.0
        %358 = vmatprep.subr.mxu0 0.0
        %359 = vmatpush1.msra.mxu0 0.0
        %360 = vmatprep.subr.mxu0 0.0
        %361 = vmatpush1.msra.mxu0 0.0
        %362 = vmatprep.subr.mxu0 0.0
        %363 = vmatpush1.msra.mxu0 0.0
        %364 = vmatprep.subr.mxu0 0.0
        %365 = vmatpush1.msra.mxu0 0.0
        %366 = vmatprep.subr.mxu0 0.0
        %367 = vmatpush1.msra.mxu0 0.0
        %368 = vmatprep.subr.mxu0 0.0
        %369 = vmatpush1.msra.mxu0 0.0
        %370 = vmatprep.subr.mxu0 0.0
        %371 = vmatpush1.msra.mxu0 0.0
        %372 = vmatprep.subr.mxu0 0.0
        %373 = vmatpush1.msra.mxu0 0.0
        %374 = vmatprep.subr.mxu0 0.0
        %375 = vmatpush1.msra.mxu0 0.0
        %376 = vmatprep.subr.mxu0 0.0
        %377 = vmatpush1.msra.mxu0 0.0
        %378 = vmatprep.subr.mxu0 0.0
        %379 = vmatpush1.msra.mxu0 0.0
        %380 = vmatprep.subr.mxu0 0.0
        %381 = vmatpush1.msra.mxu0 0.0
        %382 = vmatprep.subr.mxu0 0.0
        %383 = vmatpush1.msra.mxu0 0.0
        %384 = vmatprep.subr.mxu0 0.0
        %385 = vmatpush1.msra.mxu0 0.0
        %386 = vmatprep.subr.mxu0 0.0
        %387 = vmatpush1.msra.mxu0 0.0
        %388 = vmatprep.mubr.f32.mxu0 0.0
        %389 = vmatmul.mubr.f32.gmra.mrb[0].mxu0 %v308
        %v390 = vpop.f32.mrb[0].mxu0
        %v391 = vadd.f32 0.0, %v390
        %v392 = vpop.f32.mrb[0].mxu0
        %v393 = vadd.f32 0.0, %v392
        %394 = vmatprep.mubr.f32.mxu0 0.0
        %395 = vmatmul.mubr.f32.gmra.mrb[0].mxu0 %v311
        %v396 = vpop.f32.mrb[0].mxu0
        %v397 = vadd.f32 0.0, %v396
        %v398 = vpop.f32.mrb[0].mxu0
        %v399 = vadd.f32 0.0, %v398
        %400 = vmatprep.mubr.f32.mxu0 0.0
        %401 = vmatmul.mubr.f32.gmra.mrb[0].mxu0 %v314
        %v402 = vpop.f32.mrb[0].mxu0
        %v403 = vadd.f32 0.0, %v402
        %v404 = vpop.f32.mrb[0].mxu0
        %v405 = vadd.f32 0.0, %v404
        %406 = vmatprep.mubr.f32.mxu0 0.0
        %407 = vmatmul.mubr.f32.gmra.mrb[0].mxu0 %v317
        %v408 = vpop.f32.mrb[0].mxu0
        %v409 = vadd.f32 0.0, %v408
        %v410 = vpop.f32.mrb[0].mxu0
        %v411 = vadd.f32 0.0, %v410
        %412 = vdwg.mxu0
        %v414 = vsel %vm306, %v288, 0
        %v417 = vsel %vm306, %v289, 0
        %v420 = vsel %vm306, %v290, 0
        %v423 = vsel %vm306, %v291, 0
        %v426 = vsel %vm319, %v286, 0
        %v429 = vsel %vm319, %v287, 0
        %431 = vmatprep.subr.mxu0 %v429
        %432 = vmatpush1.msra.mxu0 %v426
        %433 = vmatprep.subr.mxu0 0.0
        %434 = vmatpush1.msra.mxu0 0.0
        %435 = vmatprep.subr.mxu0 0.0
        %436 = vmatpush1.msra.mxu0 0.0
        %437 = vmatprep.subr.mxu0 0.0
        %438 = vmatpush1.msra.mxu0 0.0
        %439 = vmatprep.subr.mxu0 0.0
        %440 = vmatpush1.msra.mxu0 0.0
        %441 = vmatprep.subr.mxu0 0.0
        %442 = vmatpush1.msra.mxu0 0.0
        %443 = vmatprep.subr.mxu0 0.0
        %444 = vmatpush1.msra.mxu0 0.0
        %445 = vmatprep.subr.mxu0 0.0
        %446 = vmatpush1.msra.mxu0 0.0
        %447 = vmatprep.subr.mxu0 0.0
        %448 = vmatpush1.msra.mxu0 0.0
        %449 = vmatprep.subr.mxu0 0.0
        %450 = vmatpush1.msra.mxu0 0.0
        %451 = vmatprep.subr.mxu0 0.0
        %452 = vmatpush1.msra.mxu0 0.0
        %453 = vmatprep.subr.mxu0 0.0
        %454 = vmatpush1.msra.mxu0 0.0
        %455 = vmatprep.subr.mxu0 0.0
        %456 = vmatpush1.msra.mxu0 0.0
        %457 = vmatprep.subr.mxu0 0.0
        %458 = vmatpush1.msra.mxu0 0.0
        %459 = vmatprep.subr.mxu0 0.0
        %460 = vmatpush1.msra.mxu0 0.0
        %461 = vmatprep.subr.mxu0 0.0
        %462 = vmatpush1.msra.mxu0 0.0
        %463 = vmatprep.subr.mxu0 0.0
        %464 = vmatpush1.msra.mxu0 0.0
        %465 = vmatprep.subr.mxu0 0.0
        %466 = vmatpush1.msra.mxu0 0.0
        %467 = vmatprep.subr.mxu0 0.0
        %468 = vmatpush1.msra.mxu0 0.0
        %469 = vmatprep.subr.mxu0 0.0
        %470 = vmatpush1.msra.mxu0 0.0
        %471 = vmatprep.subr.mxu0 0.0
        %472 = vmatpush1.msra.mxu0 0.0
        %473 = vmatprep.subr.mxu0 0.0
        %474 = vmatpush1.msra.mxu0 0.0
        %475 = vmatprep.subr.mxu0 0.0
        %476 = vmatpush1.msra.mxu0 0.0
        %477 = vmatprep.subr.mxu0 0.0
        %478 = vmatpush1.msra.mxu0 0.0
        %479 = vmatprep.subr.mxu0 0.0
        %480 = vmatpush1.msra.mxu0 0.0
        %481 = vmatprep.subr.mxu0 0.0
        %482 = vmatpush1.msra.mxu0 0.0
        %483 = vmatprep.subr.mxu0 0.0
        %484 = vmatpush1.msra.mxu0 0.0
        %485 = vmatprep.subr.mxu0 0.0
        %486 = vmatpush1.msra.mxu0 0.0
        %487 = vmatprep.subr.mxu0 0.0
        %488 = vmatpush1.msra.mxu0 0.0
        %489 = vmatprep.subr.mxu0 0.0
        %490 = vmatpush1.msra.mxu0 0.0
        %491 = vmatprep.subr.mxu0 0.0
        %492 = vmatpush1.msra.mxu0 0.0
        %493 = vmatprep.subr.mxu0 0.0
        %494 = vmatpush1.msra.mxu0 0.0
        %495 = vmatprep.mubr.f32.mxu0 0.0
        %496 = vmatmul.mubr.f32.gmra.mrb[0].mxu0 %v414
        %v497 = vpop.f32.mrb[0].mxu0
        %v498 = vadd.f32 %v391, %v497
        %v499 = vpop.f32.mrb[0].mxu0
        %v500 = vadd.f32 %v393, %v499
        %501 = vmatprep.mubr.f32.mxu0 0.0
        %502 = vmatmul.mubr.f32.gmra.mrb[0].mxu0 %v417
        %v503 = vpop.f32.mrb[0].mxu0
        %v504 = vadd.f32 %v397, %v503
        %v505 = vpop.f32.mrb[0].mxu0
        %v506 = vadd.f32 %v399, %v505
        %507 = vmatprep.mubr.f32.mxu0 0.0
        %508 = vmatmul.mubr.f32.gmra.mrb[0].mxu0 %v420
        %v509 = vpop.f32.mrb[0].mxu0
        %v510 = vadd.f32 %v403, %v509
        %v511 = vpop.f32.mrb[0].mxu0
        %v512 = vadd.f32 %v405, %v511
        %513 = vmatprep.mubr.f32.mxu0 0.0
        %514 = vmatmul.mubr.f32.gmra.mrb[0].mxu0 %v423
        %v515 = vpop.f32.mrb[0].mxu0
        %v516 = vadd.f32 %v409, %v515
        %v517 = vpop.f32.mrb[0].mxu0
        %v518 = vadd.f32 %v411, %v517
        %519 = vdwg.mxu0
        %v520 = vld [vmem:[#allocation2] sm:$0xff]
        %v521 = vld [vmem:[#allocation2 + $0x8] sm:$0xf]
        %v522 = vsel %vm252, 1, 0
        %v523 = vsel %vm253, 1, 0
        %vm524 = vcmp.eq.s32.totalorder %v522, 1
        %vm525 = vcmp.eq.s32.totalorder %v523, 1
        %v528 = vcombine.high %v520, %v520
        %529 = vrot.lane.b32.xlu0 %v520, 15
        %v530 = vpop.permute.xlu0 %529
        %531 = vrot.lane.b32.xlu0 %v528, 15
        %v532 = vpop.permute.xlu0 %531
        %533 = vrot.lane.b32.xlu0 %v521, 15
        %v534 = vpop.permute.xlu0 %533
        %vm535 = vcmask 121856
        %v536 = vsel %vm535, %v530, %v532
        %v537 = vsel %vm535, %v532, %v534
        %v540 = vsel %vm524, %v536, 0.0
        %v541 = vsel %vm525, %v537, 0.0
        %s542 = scalar_lea.vmem %s1, 64
        %v543 = vld [vmem:[%s542] sm:$0xff]
        %v544 = vld [vmem:[%s542 + $0x8] sm:$0xff]
        %v545 = vld [vmem:[%s542 + $0x10] sm:$0xff]
        %v546 = vld [vmem:[%s542 + $0x18] sm:$0xff]
        %v548 = vsel %vm306, %v543, 0
        %v551 = vsel %vm306, %v544, 0
        %v554 = vsel %vm306, %v545, 0
        %v557 = vsel %vm306, %v546, 0
        %v560 = vsel %vm319, %v540, 0
        %v563 = vsel %vm319, %v541, 0
        %565 = vmatprep.subr.mxu0 %v563
        %566 = vmatpush1.msra.mxu0 %v560
        %567 = vmatprep.subr.mxu0 0.0
        %568 = vmatpush1.msra.mxu0 0.0
        %569 = vmatprep.subr.mxu0 0.0
        %570 = vmatpush1.msra.mxu0 0.0
        %571 = vmatprep.subr.mxu0 0.0
        %572 = vmatpush1.msra.mxu0 0.0
        %573 = vmatprep.subr.mxu0 0.0
        %574 = vmatpush1.msra.mxu0 0.0
        %575 = vmatprep.subr.mxu0 0.0
        %576 = vmatpush1.msra.mxu0 0.0
        %577 = vmatprep.subr.mxu0 0.0
        %578 = vmatpush1.msra.mxu0 0.0
        %579 = vmatprep.subr.mxu0 0.0
        %580 = vmatpush1.msra.mxu0 0.0
        %581 = vmatprep.subr.mxu0 0.0
        %582 = vmatpush1.msra.mxu0 0.0
        %583 = vmatprep.subr.mxu0 0.0
        %584 = vmatpush1.msra.mxu0 0.0
        %585 = vmatprep.subr.mxu0 0.0
        %586 = vmatpush1.msra.mxu0 0.0
        %587 = vmatprep.subr.mxu0 0.0
        %588 = vmatpush1.msra.mxu0 0.0
        %589 = vmatprep.subr.mxu0 0.0
        %590 = vmatpush1.msra.mxu0 0.0
        %591 = vmatprep.subr.mxu0 0.0
        %592 = vmatpush1.msra.mxu0 0.0
        %593 = vmatprep.subr.mxu0 0.0
        %594 = vmatpush1.msra.mxu0 0.0
        %595 = vmatprep.subr.mxu0 0.0
        %596 = vmatpush1.msra.mxu0 0.0
        %597 = vmatprep.subr.mxu0 0.0
        %598 = vmatpush1.msra.mxu0 0.0
        %599 = vmatprep.subr.mxu0 0.0
        %600 = vmatpush1.msra.mxu0 0.0
        %601 = vmatprep.subr.mxu0 0.0
        %602 = vmatpush1.msra.mxu0 0.0
        %603 = vmatprep.subr.mxu0 0.0
        %604 = vmatpush1.msra.mxu0 0.0
        %605 = vmatprep.subr.mxu0 0.0
        %606 = vmatpush1.msra.mxu0 0.0
        %607 = vmatprep.subr.mxu0 0.0
        %608 = vmatpush1.msra.mxu0 0.0
        %609 = vmatprep.subr.mxu0 0.0
        %610 = vmatpush1.msra.mxu0 0.0
        %611 = vmatprep.subr.mxu0 0.0
        %612 = vmatpush1.msra.mxu0 0.0
        %613 = vmatprep.subr.mxu0 0.0
        %614 = vmatpush1.msra.mxu0 0.0
        %615 = vmatprep.subr.mxu0 0.0
        %616 = vmatpush1.msra.mxu0 0.0
        %617 = vmatprep.subr.mxu0 0.0
        %618 = vmatpush1.msra.mxu0 0.0
        %619 = vmatprep.subr.mxu0 0.0
        %620 = vmatpush1.msra.mxu0 0.0
        %621 = vmatprep.subr.mxu0 0.0
        %622 = vmatpush1.msra.mxu0 0.0
        %623 = vmatprep.subr.mxu0 0.0
        %624 = vmatpush1.msra.mxu0 0.0
        %625 = vmatprep.subr.mxu0 0.0
        %626 = vmatpush1.msra.mxu0 0.0
        %627 = vmatprep.subr.mxu0 0.0
        %628 = vmatpush1.msra.mxu0 0.0
        %629 = vmatprep.mubr.f32.mxu0 0.0
        %630 = vmatmul.mubr.f32.gmra.mrb[0].mxu0 %v548
        %v631 = vpop.f32.mrb[0].mxu0
        %v632 = vadd.f32 0.0, %v631
        %v633 = vpop.f32.mrb[0].mxu0
        %v634 = vadd.f32 0.0, %v633
        %635 = vmatprep.mubr.f32.mxu0 0.0
        %636 = vmatmul.mubr.f32.gmra.mrb[0].mxu0 %v551
        %v637 = vpop.f32.mrb[0].mxu0
        %v638 = vadd.f32 0.0, %v637
        %v639 = vpop.f32.mrb[0].mxu0
        %v640 = vadd.f32 0.0, %v639
        %641 = vmatprep.mubr.f32.mxu0 0.0
        %642 = vmatmul.mubr.f32.gmra.mrb[0].mxu0 %v554
        %v643 = vpop.f32.mrb[0].mxu0
        %v644 = vadd.f32 0.0, %v643
        %v645 = vpop.f32.mrb[0].mxu0
        %v646 = vadd.f32 0.0, %v645
        %647 = vmatprep.mubr.f32.mxu0 0.0
        %648 = vmatmul.mubr.f32.gmra.mrb[0].mxu0 %v557
        %v649 = vpop.f32.mrb[0].mxu0
        %v650 = vadd.f32 0.0, %v649
        %v651 = vpop.f32.mrb[0].mxu0
        %v652 = vadd.f32 0.0, %v651
        %653 = vdwg.mxu0
        %v654 = vadd.f32 %v498, %v632
        %v655 = vadd.f32 %v500, %v634
        %v656 = vadd.f32 %v504, %v638
        %v657 = vadd.f32 %v506, %v640
        %v658 = vadd.f32 %v510, %v644
        %v659 = vadd.f32 %v512, %v646
        %v660 = vadd.f32 %v516, %v650
        %v661 = vadd.f32 %v518, %v652
        %v662 = vld [vmem:[#allocation2] sm:$0xff]
        %v663 = vld [vmem:[#allocation2 + $0x8] sm:$0xf]
        %v666 = vcombine.high %v662, %v662
        %667 = vrot.lane.b32.xlu0 %v662, 1
        %v668 = vpop.permute.xlu0 %667
        %669 = vrot.lane.b32.xlu0 %v666, 1
        %v670 = vpop.permute.xlu0 %669
        %671 = vrot.lane.b32.xlu0 %v663, 1
        %v672 = vpop.permute.xlu0 %671
        %vm673 = vcmask 7168
        %v674 = vsel %vm673, %v668, %v670
        %v675 = vsel %vm673, %v670, %v672
        %v678 = vsel %vm270, %v674, 0.0
        %v679 = vsel %vm271, %v675, 0.0
        %s680 = scalar_lea.vmem %s1, 96
        %v681 = vld [vmem:[%s680] sm:$0xff]
        %v682 = vld [vmem:[%s680 + $0x8] sm:$0xff]
        %v683 = vld [vmem:[%s680 + $0x10] sm:$0xff]
        %v684 = vld [vmem:[%s680 + $0x18] sm:$0xff]
        %v686 = vsel %vm306, %v681, 0
        %v689 = vsel %vm306, %v682, 0
        %v692 = vsel %vm306, %v683, 0
        %v695 = vsel %vm306, %v684, 0
        %v698 = vsel %vm319, %v678, 0
        %v701 = vsel %vm319, %v679, 0
        %703 = vmatprep.subr.mxu0 %v701
        %704 = vmatpush1.msra.mxu0 %v698
        %705 = vmatprep.subr.mxu0 0.0
        %706 = vmatpush1.msra.mxu0 0.0
        %707 = vmatprep.subr.mxu0 0.0
        %708 = vmatpush1.msra.mxu0 0.0
        %709 = vmatprep.subr.mxu0 0.0
        %710 = vmatpush1.msra.mxu0 0.0
        %711 = vmatprep.subr.mxu0 0.0
        %712 = vmatpush1.msra.mxu0 0.0
        %713 = vmatprep.subr.mxu0 0.0
        %714 = vmatpush1.msra.mxu0 0.0
        %715 = vmatprep.subr.mxu0 0.0
        %716 = vmatpush1.msra.mxu0 0.0
        %717 = vmatprep.subr.mxu0 0.0
        %718 = vmatpush1.msra.mxu0 0.0
        %719 = vmatprep.subr.mxu0 0.0
        %720 = vmatpush1.msra.mxu0 0.0
        %721 = vmatprep.subr.mxu0 0.0
        %722 = vmatpush1.msra.mxu0 0.0
        %723 = vmatprep.subr.mxu0 0.0
        %724 = vmatpush1.msra.mxu0 0.0
        %725 = vmatprep.subr.mxu0 0.0
        %726 = vmatpush1.msra.mxu0 0.0
        %727 = vmatprep.subr.mxu0 0.0
        %728 = vmatpush1.msra.mxu0 0.0
        %729 = vmatprep.subr.mxu0 0.0
        %730 = vmatpush1.msra.mxu0 0.0
        %731 = vmatprep.subr.mxu0 0.0
        %732 = vmatpush1.msra.mxu0 0.0
        %733 = vmatprep.subr.mxu0 0.0
        %734 = vmatpush1.msra.mxu0 0.0
        %735 = vmatprep.subr.mxu0 0.0
        %736 = vmatpush1.msra.mxu0 0.0
        %737 = vmatprep.subr.mxu0 0.0
        %738 = vmatpush1.msra.mxu0 0.0
        %739 = vmatprep.subr.mxu0 0.0
        %740 = vmatpush1.msra.mxu0 0.0
        %741 = vmatprep.subr.mxu0 0.0
        %742 = vmatpush1.msra.mxu0 0.0
        %743 = vmatprep.subr.mxu0 0.0
        %744 = vmatpush1.msra.mxu0 0.0
        %745 = vmatprep.subr.mxu0 0.0
        %746 = vmatpush1.msra.mxu0 0.0
        %747 = vmatprep.subr.mxu0 0.0
        %748 = vmatpush1.msra.mxu0 0.0
        %749 = vmatprep.subr.mxu0 0.0
        %750 = vmatpush1.msra.mxu0 0.0
        %751 = vmatprep.subr.mxu0 0.0
        %752 = vmatpush1.msra.mxu0 0.0
        %753 = vmatprep.subr.mxu0 0.0
        %754 = vmatpush1.msra.mxu0 0.0
        %755 = vmatprep.subr.mxu0 0.0
        %756 = vmatpush1.msra.mxu0 0.0
        %757 = vmatprep.subr.mxu0 0.0
        %758 = vmatpush1.msra.mxu0 0.0
        %759 = vmatprep.subr.mxu0 0.0
        %760 = vmatpush1.msra.mxu0 0.0
        %761 = vmatprep.subr.mxu0 0.0
        %762 = vmatpush1.msra.mxu0 0.0
        %763 = vmatprep.subr.mxu0 0.0
        %764 = vmatpush1.msra.mxu0 0.0
        %765 = vmatprep.subr.mxu0 0.0
        %766 = vmatpush1.msra.mxu0 0.0
        %767 = vmatprep.mubr.f32.mxu0 0.0
        %768 = vmatmul.mubr.f32.gmra.mrb[0].mxu0 %v686
        %v769 = vpop.f32.mrb[0].mxu0
        %v770 = vadd.f32 0.0, %v769
        %v771 = vpop.f32.mrb[0].mxu0
        %v772 = vadd.f32 0.0, %v771
        %773 = vmatprep.mubr.f32.mxu0 0.0
        %774 = vmatmul.mubr.f32.gmra.mrb[0].mxu0 %v689
        %v775 = vpop.f32.mrb[0].mxu0
        %v776 = vadd.f32 0.0, %v775
        %v777 = vpop.f32.mrb[0].mxu0
        %v778 = vadd.f32 0.0, %v777
        %779 = vmatprep.mubr.f32.mxu0 0.0
        %780 = vmatmul.mubr.f32.gmra.mrb[0].mxu0 %v692
        %v781 = vpop.f32.mrb[0].mxu0
        %v782 = vadd.f32 0.0, %v781
        %v783 = vpop.f32.mrb[0].mxu0
        %v784 = vadd.f32 0.0, %v783
        %785 = vmatprep.mubr.f32.mxu0 0.0
        %786 = vmatmul.mubr.f32.gmra.mrb[0].mxu0 %v695
        %v787 = vpop.f32.mrb[0].mxu0
        %v788 = vadd.f32 0.0, %v787
        %v789 = vpop.f32.mrb[0].mxu0
        %v790 = vadd.f32 0.0, %v789
        %791 = vdwg.mxu0
        %v792 = vadd.f32 %v654, %v770
        %v793 = vadd.f32 %v655, %v772
        %v794 = vadd.f32 %v656, %v776
        %v795 = vadd.f32 %v657, %v778
        %v796 = vadd.f32 %v658, %v782
        %v797 = vadd.f32 %v659, %v784
        %v798 = vadd.f32 %v660, %v788
        %v799 = vadd.f32 %v661, %v790
        %v800 = vld [vmem:[#allocation2 + $0x4] sm:$0xff]
        %s801 = scalar_lea.vmem %s1, 128
        %v802 = vld [vmem:[%s801] sm:$0xff]
        %v803 = vld [vmem:[%s801 + $0x8] sm:$0xff]
        %v804 = vld [vmem:[%s801 + $0x10] sm:$0xff]
        %v805 = vld [vmem:[%s801 + $0x18] sm:$0xff]
        %v807 = vcombine.high %v800, %v800
        %v809 = vsel %vm306, %v802, 0
        %v812 = vsel %vm306, %v803, 0
        %v815 = vsel %vm306, %v804, 0
        %v818 = vsel %vm306, %v805, 0
        %v820 = vsel %vm319, %v800, 0
        %v822 = vsel %vm319, %v807, 0
        %824 = vmatprep.subr.mxu0 %v822
        %825 = vmatpush1.msra.mxu0 %v820
        %826 = vmatprep.subr.mxu0 0.0
        %827 = vmatpush1.msra.mxu0 0.0
        %828 = vmatprep.subr.mxu0 0.0
        %829 = vmatpush1.msra.mxu0 0.0
        %830 = vmatprep.subr.mxu0 0.0
        %831 = vmatpush1.msra.mxu0 0.0
        %832 = vmatprep.subr.mxu0 0.0
        %833 = vmatpush1.msra.mxu0 0.0
        %834 = vmatprep.subr.mxu0 0.0
        %835 = vmatpush1.msra.mxu0 0.0
        %836 = vmatprep.subr.mxu0 0.0
        %837 = vmatpush1.msra.mxu0 0.0
        %838 = vmatprep.subr.mxu0 0.0
        %839 = vmatpush1.msra.mxu0 0.0
        %840 = vmatprep.subr.mxu0 0.0
        %841 = vmatpush1.msra.mxu0 0.0
        %842 = vmatprep.subr.mxu0 0.0
        %843 = vmatpush1.msra.mxu0 0.0
        %844 = vmatprep.subr.mxu0 0.0
        %845 = vmatpush1.msra.mxu0 0.0
        %846 = vmatprep.subr.mxu0 0.0
        %847 = vmatpush1.msra.mxu0 0.0
        %848 = vmatprep.subr.mxu0 0.0
        %849 = vmatpush1.msra.mxu0 0.0
        %850 = vmatprep.subr.mxu0 0.0
        %851 = vmatpush1.msra.mxu0 0.0
        %852 = vmatprep.subr.mxu0 0.0
        %853 = vmatpush1.msra.mxu0 0.0
        %854 = vmatprep.subr.mxu0 0.0
        %855 = vmatpush1.msra.mxu0 0.0
        %856 = vmatprep.subr.mxu0 0.0
        %857 = vmatpush1.msra.mxu0 0.0
        %858 = vmatprep.subr.mxu0 0.0
        %859 = vmatpush1.msra.mxu0 0.0
        %860 = vmatprep.subr.mxu0 0.0
        %861 = vmatpush1.msra.mxu0 0.0
        %862 = vmatprep.subr.mxu0 0.0
        %863 = vmatpush1.msra.mxu0 0.0
        %864 = vmatprep.subr.mxu0 0.0
        %865 = vmatpush1.msra.mxu0 0.0
        %866 = vmatprep.subr.mxu0 0.0
        %867 = vmatpush1.msra.mxu0 0.0
        %868 = vmatprep.subr.mxu0 0.0
        %869 = vmatpush1.msra.mxu0 0.0
        %870 = vmatprep.subr.mxu0 0.0
        %871 = vmatpush1.msra.mxu0 0.0
        %872 = vmatprep.subr.mxu0 0.0
        %873 = vmatpush1.msra.mxu0 0.0
        %874 = vmatprep.subr.mxu0 0.0
        %875 = vmatpush1.msra.mxu0 0.0
        %876 = vmatprep.subr.mxu0 0.0
        %877 = vmatpush1.msra.mxu0 0.0
        %878 = vmatprep.subr.mxu0 0.0
        %879 = vmatpush1.msra.mxu0 0.0
        %880 = vmatprep.subr.mxu0 0.0
        %881 = vmatpush1.msra.mxu0 0.0
        %882 = vmatprep.subr.mxu0 0.0
        %883 = vmatpush1.msra.mxu0 0.0
        %884 = vmatprep.subr.mxu0 0.0
        %885 = vmatpush1.msra.mxu0 0.0
        %886 = vmatprep.subr.mxu0 0.0
        %887 = vmatpush1.msra.mxu0 0.0
        %888 = vmatprep.mubr.f32.mxu0 0.0
        %889 = vmatmul.mubr.f32.gmra.mrb[0].mxu0 %v809
        %v890 = vpop.f32.mrb[0].mxu0
        %v891 = vadd.f32 0.0, %v890
        %v892 = vpop.f32.mrb[0].mxu0
        %v893 = vadd.f32 0.0, %v892
        %894 = vmatprep.mubr.f32.mxu0 0.0
        %895 = vmatmul.mubr.f32.gmra.mrb[0].mxu0 %v812
        %v896 = vpop.f32.mrb[0].mxu0
        %v897 = vadd.f32 0.0, %v896
        %v898 = vpop.f32.mrb[0].mxu0
        %v899 = vadd.f32 0.0, %v898
        %900 = vmatprep.mubr.f32.mxu0 0.0
        %901 = vmatmul.mubr.f32.gmra.mrb[0].mxu0 %v815
        %v902 = vpop.f32.mrb[0].mxu0
        %v903 = vadd.f32 0.0, %v902
        %v904 = vpop.f32.mrb[0].mxu0
        %v905 = vadd.f32 0.0, %v904
        %906 = vmatprep.mubr.f32.mxu0 0.0
        %907 = vmatmul.mubr.f32.gmra.mrb[0].mxu0 %v818
        %v908 = vpop.f32.mrb[0].mxu0
        %v909 = vadd.f32 0.0, %v908
        %v910 = vpop.f32.mrb[0].mxu0
        %v911 = vadd.f32 0.0, %v910
        %912 = vdwg.mxu0
        %v913 = vadd.f32 %v792, %v891
        %v914 = vadd.f32 %v793, %v893
        %v915 = vadd.f32 %v794, %v897
        %v916 = vadd.f32 %v795, %v899
        %v917 = vadd.f32 %v796, %v903
        %v918 = vadd.f32 %v797, %v905
        %v919 = vadd.f32 %v798, %v909
        %v920 = vadd.f32 %v799, %v911
        %v921 = vld [vmem:[#allocation2 + $0x4] sm:$0xff]
        %v922 = vld [vmem:[#allocation2 + $0xc] sm:$0xf]
        %v925 = vcombine.high %v921, %v921
        %926 = vrot.lane.b32.xlu0 %v921, 127
        %v927 = vpop.permute.xlu0 %926
        %928 = vrot.lane.b32.xlu0 %v925, 127
        %v929 = vpop.permute.xlu0 %928
        %930 = vrot.lane.b32.xlu0 %v922, 127
        %v931 = vpop.permute.xlu0 %930
        %vm932 = vcmask 1039360
        %v933 = vsel %vm932, %v927, %v929
        %v934 = vsel %vm932, %v929, %v931
        %v937 = vsel %vm524, %v933, 0.0
        %v938 = vsel %vm525, %v934, 0.0
        %s939 = scalar_lea.vmem %s1, 160
        %v940 = vld [vmem:[%s939] sm:$0xff]
        %v941 = vld [vmem:[%s939 + $0x8] sm:$0xff]
        %v942 = vld [vmem:[%s939 + $0x10] sm:$0xff]
        %v943 = vld [vmem:[%s939 + $0x18] sm:$0xff]
        %v945 = vsel %vm306, %v940, 0
        %v948 = vsel %vm306, %v941, 0
        %v951 = vsel %vm306, %v942, 0
        %v954 = vsel %vm306, %v943, 0
        %v957 = vsel %vm319, %v937, 0
        %v960 = vsel %vm319, %v938, 0
        %962 = vmatprep.subr.mxu0 %v960
        %963 = vmatpush1.msra.mxu0 %v957
        %964 = vmatprep.subr.mxu0 0.0
        %965 = vmatpush1.msra.mxu0 0.0
        %966 = vmatprep.subr.mxu0 0.0
        %967 = vmatpush1.msra.mxu0 0.0
        %968 = vmatprep.subr.mxu0 0.0
        %969 = vmatpush1.msra.mxu0 0.0
        %970 = vmatprep.subr.mxu0 0.0
        %971 = vmatpush1.msra.mxu0 0.0
        %972 = vmatprep.subr.mxu0 0.0
        %973 = vmatpush1.msra.mxu0 0.0
        %974 = vmatprep.subr.mxu0 0.0
        %975 = vmatpush1.msra.mxu0 0.0
        %976 = vmatprep.subr.mxu0 0.0
        %977 = vmatpush1.msra.mxu0 0.0
        %978 = vmatprep.subr.mxu0 0.0
        %979 = vmatpush1.msra.mxu0 0.0
        %980 = vmatprep.subr.mxu0 0.0
        %981 = vmatpush1.msra.mxu0 0.0
        %982 = vmatprep.subr.mxu0 0.0
        %983 = vmatpush1.msra.mxu0 0.0
        %984 = vmatprep.subr.mxu0 0.0
        %985 = vmatpush1.msra.mxu0 0.0
        %986 = vmatprep.subr.mxu0 0.0
        %987 = vmatpush1.msra.mxu0 0.0
        %988 = vmatprep.subr.mxu0 0.0
        %989 = vmatpush1.msra.mxu0 0.0
        %990 = vmatprep.subr.mxu0 0.0
        %991 = vmatpush1.msra.mxu0 0.0
        %992 = vmatprep.subr.mxu0 0.0
        %993 = vmatpush1.msra.mxu0 0.0
        %994 = vmatprep.subr.mxu0 0.0
        %995 = vmatpush1.msra.mxu0 0.0
        %996 = vmatprep.subr.mxu0 0.0
        %997 = vmatpush1.msra.mxu0 0.0
        %998 = vmatprep.subr.mxu0 0.0
        %999 = vmatpush1.msra.mxu0 0.0
        %1000 = vmatprep.subr.mxu0 0.0
        %1001 = vmatpush1.msra.mxu0 0.0
        %1002 = vmatprep.subr.mxu0 0.0
        %1003 = vmatpush1.msra.mxu0 0.0
        %1004 = vmatprep.subr.mxu0 0.0
        %1005 = vmatpush1.msra.mxu0 0.0
        %1006 = vmatprep.subr.mxu0 0.0
        %1007 = vmatpush1.msra.mxu0 0.0
        %1008 = vmatprep.subr.mxu0 0.0
        %1009 = vmatpush1.msra.mxu0 0.0
        %1010 = vmatprep.subr.mxu0 0.0
        %1011 = vmatpush1.msra.mxu0 0.0
        %1012 = vmatprep.subr.mxu0 0.0
        %1013 = vmatpush1.msra.mxu0 0.0
        %1014 = vmatprep.subr.mxu0 0.0
        %1015 = vmatpush1.msra.mxu0 0.0
        %1016 = vmatprep.subr.mxu0 0.0
        %1017 = vmatpush1.msra.mxu0 0.0
        %1018 = vmatprep.subr.mxu0 0.0
        %1019 = vmatpush1.msra.mxu0 0.0
        %1020 = vmatprep.subr.mxu0 0.0
        %1021 = vmatpush1.msra.mxu0 0.0
        %1022 = vmatprep.subr.mxu0 0.0
        %1023 = vmatpush1.msra.mxu0 0.0
        %1024 = vmatprep.subr.mxu0 0.0
        %1025 = vmatpush1.msra.mxu0 0.0
        %1026 = vmatprep.mubr.f32.mxu0 0.0
        %1027 = vmatmul.mubr.f32.gmra.mrb[0].mxu0 %v945
        %v1028 = vpop.f32.mrb[0].mxu0
        %v1029 = vadd.f32 0.0, %v1028
        %v1030 = vpop.f32.mrb[0].mxu0
        %v1031 = vadd.f32 0.0, %v1030
        %1032 = vmatprep.mubr.f32.mxu0 0.0
        %1033 = vmatmul.mubr.f32.gmra.mrb[0].mxu0 %v948
        %v1034 = vpop.f32.mrb[0].mxu0
        %v1035 = vadd.f32 0.0, %v1034
        %v1036 = vpop.f32.mrb[0].mxu0
        %v1037 = vadd.f32 0.0, %v1036
        %1038 = vmatprep.mubr.f32.mxu0 0.0
        %1039 = vmatmul.mubr.f32.gmra.mrb[0].mxu0 %v951
        %v1040 = vpop.f32.mrb[0].mxu0
        %v1041 = vadd.f32 0.0, %v1040
        %v1042 = vpop.f32.mrb[0].mxu0
        %v1043 = vadd.f32 0.0, %v1042
        %1044 = vmatprep.mubr.f32.mxu0 0.0
        %1045 = vmatmul.mubr.f32.gmra.mrb[0].mxu0 %v954
        %v1046 = vpop.f32.mrb[0].mxu0
        %v1047 = vadd.f32 0.0, %v1046
        %v1048 = vpop.f32.mrb[0].mxu0
        %v1049 = vadd.f32 0.0, %v1048
        %1050 = vdwg.mxu0
        %v1051 = vadd.f32 %v913, %v1029
        %v1052 = vadd.f32 %v914, %v1031
        %v1053 = vadd.f32 %v915, %v1035
        %v1054 = vadd.f32 %v916, %v1037
        %v1055 = vadd.f32 %v917, %v1041
        %v1056 = vadd.f32 %v918, %v1043
        %v1057 = vadd.f32 %v919, %v1047
        %v1058 = vadd.f32 %v920, %v1049
        %v1059 = vld [vmem:[#allocation2 + $0x4] sm:$0xff]
        %v1060 = vld [vmem:[#allocation2 + $0xc] sm:$0xf]
        %v1063 = vcombine.high %v1059, %v1059
        %1064 = vrot.lane.b32.xlu0 %v1059, 113
        %v1065 = vpop.permute.xlu0 %1064
        %1066 = vrot.lane.b32.xlu0 %v1063, 113
        %v1067 = vpop.permute.xlu0 %1066
        %1068 = vrot.lane.b32.xlu0 %v1060, 113
        %v1069 = vpop.permute.xlu0 %1068
        %vm1070 = vcmask 924672
        %v1071 = vsel %vm1070, %v1065, %v1067
        %v1072 = vsel %vm1070, %v1067, %v1069
        %v1075 = vsel %vm270, %v1071, 0.0
        %v1076 = vsel %vm271, %v1072, 0.0
        %s1077 = scalar_lea.vmem %s1, 192
        %v1078 = vld [vmem:[%s1077] sm:$0xff]
        %v1079 = vld [vmem:[%s1077 + $0x8] sm:$0xff]
        %v1080 = vld [vmem:[%s1077 + $0x10] sm:$0xff]
        %v1081 = vld [vmem:[%s1077 + $0x18] sm:$0xff]
        %v1083 = vsel %vm306, %v1078, 0
        %v1086 = vsel %vm306, %v1079, 0
        %v1089 = vsel %vm306, %v1080, 0
        %v1092 = vsel %vm306, %v1081, 0
        %v1095 = vsel %vm319, %v1075, 0
        %v1098 = vsel %vm319, %v1076, 0
        %1100 = vmatprep.subr.mxu0 %v1098
        %1101 = vmatpush1.msra.mxu0 %v1095
        %1102 = vmatprep.subr.mxu0 0.0
        %1103 = vmatpush1.msra.mxu0 0.0
        %1104 = vmatprep.subr.mxu0 0.0
        %1105 = vmatpush1.msra.mxu0 0.0
        %1106 = vmatprep.subr.mxu0 0.0
        %1107 = vmatpush1.msra.mxu0 0.0
        %1108 = vmatprep.subr.mxu0 0.0
        %1109 = vmatpush1.msra.mxu0 0.0
        %1110 = vmatprep.subr.mxu0 0.0
        %1111 = vmatpush1.msra.mxu0 0.0
        %1112 = vmatprep.subr.mxu0 0.0
        %1113 = vmatpush1.msra.mxu0 0.0
        %1114 = vmatprep.subr.mxu0 0.0
        %1115 = vmatpush1.msra.mxu0 0.0
        %1116 = vmatprep.subr.mxu0 0.0
        %1117 = vmatpush1.msra.mxu0 0.0
        %1118 = vmatprep.subr.mxu0 0.0
        %1119 = vmatpush1.msra.mxu0 0.0
        %1120 = vmatprep.subr.mxu0 0.0
        %1121 = vmatpush1.msra.mxu0 0.0
        %1122 = vmatprep.subr.mxu0 0.0
        %1123 = vmatpush1.msra.mxu0 0.0
        %1124 = vmatprep.subr.mxu0 0.0
        %1125 = vmatpush1.msra.mxu0 0.0
        %1126 = vmatprep.subr.mxu0 0.0
        %1127 = vmatpush1.msra.mxu0 0.0
        %1128 = vmatprep.subr.mxu0 0.0
        %1129 = vmatpush1.msra.mxu0 0.0
        %1130 = vmatprep.subr.mxu0 0.0
        %1131 = vmatpush1.msra.mxu0 0.0
        %1132 = vmatprep.subr.mxu0 0.0
        %1133 = vmatpush1.msra.mxu0 0.0
        %1134 = vmatprep.subr.mxu0 0.0
        %1135 = vmatpush1.msra.mxu0 0.0
        %1136 = vmatprep.subr.mxu0 0.0
        %1137 = vmatpush1.msra.mxu0 0.0
        %1138 = vmatprep.subr.mxu0 0.0
        %1139 = vmatpush1.msra.mxu0 0.0
        %1140 = vmatprep.subr.mxu0 0.0
        %1141 = vmatpush1.msra.mxu0 0.0
        %1142 = vmatprep.subr.mxu0 0.0
        %1143 = vmatpush1.msra.mxu0 0.0
        %1144 = vmatprep.subr.mxu0 0.0
        %1145 = vmatpush1.msra.mxu0 0.0
        %1146 = vmatprep.subr.mxu0 0.0
        %1147 = vmatpush1.msra.mxu0 0.0
        %1148 = vmatprep.subr.mxu0 0.0
        %1149 = vmatpush1.msra.mxu0 0.0
        %1150 = vmatprep.subr.mxu0 0.0
        %1151 = vmatpush1.msra.mxu0 0.0
        %1152 = vmatprep.subr.mxu0 0.0
        %1153 = vmatpush1.msra.mxu0 0.0
        %1154 = vmatprep.subr.mxu0 0.0
        %1155 = vmatpush1.msra.mxu0 0.0
        %1156 = vmatprep.subr.mxu0 0.0
        %1157 = vmatpush1.msra.mxu0 0.0
        %1158 = vmatprep.subr.mxu0 0.0
        %1159 = vmatpush1.msra.mxu0 0.0
        %1160 = vmatprep.subr.mxu0 0.0
        %1161 = vmatpush1.msra.mxu0 0.0
        %1162 = vmatprep.subr.mxu0 0.0
        %1163 = vmatpush1.msra.mxu0 0.0
        %1164 = vmatprep.mubr.f32.mxu0 0.0
        %1165 = vmatmul.mubr.f32.gmra.mrb[0].mxu0 %v1083
        %v1166 = vpop.f32.mrb[0].mxu0
        %v1167 = vadd.f32 0.0, %v1166
        %v1168 = vpop.f32.mrb[0].mxu0
        %v1169 = vadd.f32 0.0, %v1168
        %1170 = vmatprep.mubr.f32.mxu0 0.0
        %1171 = vmatmul.mubr.f32.gmra.mrb[0].mxu0 %v1086
        %v1172 = vpop.f32.mrb[0].mxu0
        %v1173 = vadd.f32 0.0, %v1172
        %v1174 = vpop.f32.mrb[0].mxu0
        %v1175 = vadd.f32 0.0, %v1174
        %1176 = vmatprep.mubr.f32.mxu0 0.0
        %1177 = vmatmul.mubr.f32.gmra.mrb[0].mxu0 %v1089
        %v1178 = vpop.f32.mrb[0].mxu0
        %v1179 = vadd.f32 0.0, %v1178
        %v1180 = vpop.f32.mrb[0].mxu0
        %v1181 = vadd.f32 0.0, %v1180
        %1182 = vmatprep.mubr.f32.mxu0 0.0
        %1183 = vmatmul.mubr.f32.gmra.mrb[0].mxu0 %v1092
        %v1184 = vpop.f32.mrb[0].mxu0
        %v1185 = vadd.f32 0.0, %v1184
        %v1186 = vpop.f32.mrb[0].mxu0
        %v1187 = vadd.f32 0.0, %v1186
        %1188 = vdwg.mxu0
        %v1189 = vadd.f32 %v1051, %v1167
        %v1190 = vadd.f32 %v1052, %v1169
        %v1191 = vadd.f32 %v1053, %v1173
        %v1192 = vadd.f32 %v1054, %v1175
        %v1193 = vadd.f32 %v1055, %v1179
        %v1194 = vadd.f32 %v1056, %v1181
        %v1195 = vadd.f32 %v1057, %v1185
        %v1196 = vadd.f32 %v1058, %v1187
        %v1197 = vld [vmem:[#allocation2 + $0x4] sm:$0xff]
        %v1198 = vld [vmem:[#allocation2 + $0xc] sm:$0xf]
        %s1199 = scalar_lea.vmem %s1, 224
        %v1200 = vld [vmem:[%s1199] sm:$0xff]
        %v1201 = vld [vmem:[%s1199 + $0x8] sm:$0xff]
        %v1202 = vld [vmem:[%s1199 + $0x10] sm:$0xff]
        %v1203 = vld [vmem:[%s1199 + $0x18] sm:$0xff]
        %v1206 = vcombine.high %v1197, %v1197
        %1207 = vrot.lane.b32.xlu0 %v1197, 112
        %v1208 = vpop.permute.xlu0 %1207
        %1209 = vrot.lane.b32.xlu0 %v1206, 112
        %v1210 = vpop.permute.xlu0 %1209
        %1211 = vrot.lane.b32.xlu0 %v1198, 112
        %v1212 = vpop.permute.xlu0 %1211
        %vm1213 = vcmask 916480
        %v1214 = vsel %vm1213, %v1208, %v1210
        %v1215 = vsel %vm1213, %v1210, %v1212
        %v1217 = vsel %vm306, %v1200, 0
        %v1220 = vsel %vm306, %v1201, 0
        %v1223 = vsel %vm306, %v1202, 0
        %v1226 = vsel %vm306, %v1203, 0
        %v1228 = vsel %vm319, %v1214, 0
        %v1230 = vsel %vm319, %v1215, 0
        %1232 = vmatprep.subr.mxu0 %v1230
        %1233 = vmatpush1.msra.mxu0 %v1228
        %1234 = vmatprep.subr.mxu0 0.0
        %1235 = vmatpush1.msra.mxu0 0.0
        %1236 = vmatprep.subr.mxu0 0.0
        %1237 = vmatpush1.msra.mxu0 0.0
        %1238 = vmatprep.subr.mxu0 0.0
        %1239 = vmatpush1.msra.mxu0 0.0
        %1240 = vmatprep.subr.mxu0 0.0
        %1241 = vmatpush1.msra.mxu0 0.0
        %1242 = vmatprep.subr.mxu0 0.0
        %1243 = vmatpush1.msra.mxu0 0.0
        %1244 = vmatprep.subr.mxu0 0.0
        %1245 = vmatpush1.msra.mxu0 0.0
        %1246 = vmatprep.subr.mxu0 0.0
        %1247 = vmatpush1.msra.mxu0 0.0
        %1248 = vmatprep.subr.mxu0 0.0
        %1249 = vmatpush1.msra.mxu0 0.0
        %1250 = vmatprep.subr.mxu0 0.0
        %1251 = vmatpush1.msra.mxu0 0.0
        %1252 = vmatprep.subr.mxu0 0.0
        %1253 = vmatpush1.msra.mxu0 0.0
        %1254 = vmatprep.subr.mxu0 0.0
        %1255 = vmatpush1.msra.mxu0 0.0
        %1256 = vmatprep.subr.mxu0 0.0
        %1257 = vmatpush1.msra.mxu0 0.0
        %1258 = vmatprep.subr.mxu0 0.0
        %1259 = vmatpush1.msra.mxu0 0.0
        %1260 = vmatprep.subr.mxu0 0.0
        %1261 = vmatpush1.msra.mxu0 0.0
        %1262 = vmatprep.subr.mxu0 0.0
        %1263 = vmatpush1.msra.mxu0 0.0
        %1264 = vmatprep.subr.mxu0 0.0
        %1265 = vmatpush1.msra.mxu0 0.0
        %1266 = vmatprep.subr.mxu0 0.0
        %1267 = vmatpush1.msra.mxu0 0.0
        %1268 = vmatprep.subr.mxu0 0.0
        %1269 = vmatpush1.msra.mxu0 0.0
        %1270 = vmatprep.subr.mxu0 0.0
        %1271 = vmatpush1.msra.mxu0 0.0
        %1272 = vmatprep.subr.mxu0 0.0
        %1273 = vmatpush1.msra.mxu0 0.0
        %1274 = vmatprep.subr.mxu0 0.0
        %1275 = vmatpush1.msra.mxu0 0.0
        %1276 = vmatprep.subr.mxu0 0.0
        %1277 = vmatpush1.msra.mxu0 0.0
        %1278 = vmatprep.subr.mxu0 0.0
        %1279 = vmatpush1.msra.mxu0 0.0
        %1280 = vmatprep.subr.mxu0 0.0
        %1281 = vmatpush1.msra.mxu0 0.0
        %1282 = vmatprep.subr.mxu0 0.0
        %1283 = vmatpush1.msra.mxu0 0.0
        %1284 = vmatprep.subr.mxu0 0.0
        %1285 = vmatpush1.msra.mxu0 0.0
        %1286 = vmatprep.subr.mxu0 0.0
        %1287 = vmatpush1.msra.mxu0 0.0
        %1288 = vmatprep.subr.mxu0 0.0
        %1289 = vmatpush1.msra.mxu0 0.0
        %1290 = vmatprep.subr.mxu0 0.0
        %1291 = vmatpush1.msra.mxu0 0.0
        %1292 = vmatprep.subr.mxu0 0.0
        %1293 = vmatpush1.msra.mxu0 0.0
        %1294 = vmatprep.subr.mxu0 0.0
        %1295 = vmatpush1.msra.mxu0 0.0
        %1296 = vmatprep.mubr.f32.mxu0 0.0
        %1297 = vmatmul.mubr.f32.gmra.mrb[0].mxu0 %v1217
        %v1298 = vpop.f32.mrb[0].mxu0
        %v1299 = vadd.f32 0.0, %v1298
        %v1300 = vpop.f32.mrb[0].mxu0
        %v1301 = vadd.f32 0.0, %v1300
        %1302 = vmatprep.mubr.f32.mxu0 0.0
        %1303 = vmatmul.mubr.f32.gmra.mrb[0].mxu0 %v1220
        %v1304 = vpop.f32.mrb[0].mxu0
        %v1305 = vadd.f32 0.0, %v1304
        %v1306 = vpop.f32.mrb[0].mxu0
        %v1307 = vadd.f32 0.0, %v1306
        %1308 = vmatprep.mubr.f32.mxu0 0.0
        %1309 = vmatmul.mubr.f32.gmra.mrb[0].mxu0 %v1223
        %v1310 = vpop.f32.mrb[0].mxu0
        %v1311 = vadd.f32 0.0, %v1310
        %v1312 = vpop.f32.mrb[0].mxu0
        %v1313 = vadd.f32 0.0, %v1312
        %1314 = vmatprep.mubr.f32.mxu0 0.0
        %1315 = vmatmul.mubr.f32.gmra.mrb[0].mxu0 %v1226
        %v1316 = vpop.f32.mrb[0].mxu0
        %v1317 = vadd.f32 0.0, %v1316
        %v1318 = vpop.f32.mrb[0].mxu0
        %v1319 = vadd.f32 0.0, %v1318
        %1320 = vdwg.mxu0
        %v1321 = vadd.f32 %v1189, %v1299
        %v1322 = vadd.f32 %v1190, %v1301
        %v1323 = vadd.f32 %v1191, %v1305
        %v1324 = vadd.f32 %v1192, %v1307
        %v1325 = vadd.f32 %v1193, %v1311
        %v1326 = vadd.f32 %v1194, %v1313
        %v1327 = vadd.f32 %v1195, %v1317
        %v1328 = vadd.f32 %v1196, %v1319
        %v1329 = vld [vmem:[#allocation2 + $0x4] sm:$0xff]
        %v1330 = vld [vmem:[#allocation2 + $0xc] sm:$0xf]
        %v1333 = vcombine.high %v1329, %v1329
        %1334 = vrot.lane.b32.xlu0 %v1329, 111
        %v1335 = vpop.permute.xlu0 %1334
        %1336 = vrot.lane.b32.xlu0 %v1333, 111
        %v1337 = vpop.permute.xlu0 %1336
        %1338 = vrot.lane.b32.xlu0 %v1330, 111
        %v1339 = vpop.permute.xlu0 %1338
        %vm1340 = vcmask 908288
        %v1341 = vsel %vm1340, %v1335, %v1337
        %v1342 = vsel %vm1340, %v1337, %v1339
        %v1345 = vsel %vm524, %v1341, 0.0
        %v1346 = vsel %vm525, %v1342, 0.0
        %s1347 = scalar_lea.vmem %s1, 256
        %v1348 = vld [vmem:[%s1347] sm:$0xff]
        %v1349 = vld [vmem:[%s1347 + $0x8] sm:$0xff]
        %v1350 = vld [vmem:[%s1347 + $0x10] sm:$0xff]
        %v1351 = vld [vmem:[%s1347 + $0x18] sm:$0xff]
        %v1353 = vsel %vm306, %v1348, 0
        %v1356 = vsel %vm306, %v1349, 0
        %v1359 = vsel %vm306, %v1350, 0
        %v1362 = vsel %vm306, %v1351, 0
        %v1365 = vsel %vm319, %v1345, 0
        %v1368 = vsel %vm319, %v1346, 0
        %1370 = vmatprep.subr.mxu0 %v1368
        %1371 = vmatpush1.msra.mxu0 %v1365
        %1372 = vmatprep.subr.mxu0 0.0
        %1373 = vmatpush1.msra.mxu0 0.0
        %1374 = vmatprep.subr.mxu0 0.0
        %1375 = vmatpush1.msra.mxu0 0.0
        %1376 = vmatprep.subr.mxu0 0.0
        %1377 = vmatpush1.msra.mxu0 0.0
        %1378 = vmatprep.subr.mxu0 0.0
        %1379 = vmatpush1.msra.mxu0 0.0
        %1380 = vmatprep.subr.mxu0 0.0
        %1381 = vmatpush1.msra.mxu0 0.0
        %1382 = vmatprep.subr.mxu0 0.0
        %1383 = vmatpush1.msra.mxu0 0.0
        %1384 = vmatprep.subr.mxu0 0.0
        %1385 = vmatpush1.msra.mxu0 0.0
        %1386 = vmatprep.subr.mxu0 0.0
        %1387 = vmatpush1.msra.mxu0 0.0
        %1388 = vmatprep.subr.mxu0 0.0
        %1389 = vmatpush1.msra.mxu0 0.0
        %1390 = vmatprep.subr.mxu0 0.0
        %1391 = vmatpush1.msra.mxu0 0.0
        %1392 = vmatprep.subr.mxu0 0.0
        %1393 = vmatpush1.msra.mxu0 0.0
        %1394 = vmatprep.subr.mxu0 0.0
        %1395 = vmatpush1.msra.mxu0 0.0
        %1396 = vmatprep.subr.mxu0 0.0
        %1397 = vmatpush1.msra.mxu0 0.0
        %1398 = vmatprep.subr.mxu0 0.0
        %1399 = vmatpush1.msra.mxu0 0.0
        %1400 = vmatprep.subr.mxu0 0.0
        %1401 = vmatpush1.msra.mxu0 0.0
        %1402 = vmatprep.subr.mxu0 0.0
        %1403 = vmatpush1.msra.mxu0 0.0
        %1404 = vmatprep.subr.mxu0 0.0
        %1405 = vmatpush1.msra.mxu0 0.0
        %1406 = vmatprep.subr.mxu0 0.0
        %1407 = vmatpush1.msra.mxu0 0.0
        %1408 = vmatprep.subr.mxu0 0.0
        %1409 = vmatpush1.msra.mxu0 0.0
        %1410 = vmatprep.subr.mxu0 0.0
        %1411 = vmatpush1.msra.mxu0 0.0
        %1412 = vmatprep.subr.mxu0 0.0
        %1413 = vmatpush1.msra.mxu0 0.0
        %1414 = vmatprep.subr.mxu0 0.0
        %1415 = vmatpush1.msra.mxu0 0.0
        %1416 = vmatprep.subr.mxu0 0.0
        %1417 = vmatpush1.msra.mxu0 0.0
        %1418 = vmatprep.subr.mxu0 0.0
        %1419 = vmatpush1.msra.mxu0 0.0
        %1420 = vmatprep.subr.mxu0 0.0
        %1421 = vmatpush1.msra.mxu0 0.0
        %1422 = vmatprep.subr.mxu0 0.0
        %1423 = vmatpush1.msra.mxu0 0.0
        %1424 = vmatprep.subr.mxu0 0.0
        %1425 = vmatpush1.msra.mxu0 0.0
        %1426 = vmatprep.subr.mxu0 0.0
        %1427 = vmatpush1.msra.mxu0 0.0
        %1428 = vmatprep.subr.mxu0 0.0
        %1429 = vmatpush1.msra.mxu0 0.0
        %1430 = vmatprep.subr.mxu0 0.0
        %1431 = vmatpush1.msra.mxu0 0.0
        %1432 = vmatprep.subr.mxu0 0.0
        %1433 = vmatpush1.msra.mxu0 0.0
        %1434 = vmatprep.mubr.f32.mxu0 0.0
        %1435 = vmatmul.mubr.f32.gmra.mrb[0].mxu0 %v1353
        %v1436 = vpop.f32.mrb[0].mxu0
        %v1437 = vadd.f32 0.0, %v1436
        %v1438 = vpop.f32.mrb[0].mxu0
        %v1439 = vadd.f32 0.0, %v1438
        %1440 = vmatprep.mubr.f32.mxu0 0.0
        %1441 = vmatmul.mubr.f32.gmra.mrb[0].mxu0 %v1356
        %v1442 = vpop.f32.mrb[0].mxu0
        %v1443 = vadd.f32 0.0, %v1442
        %v1444 = vpop.f32.mrb[0].mxu0
        %v1445 = vadd.f32 0.0, %v1444
        %1446 = vmatprep.mubr.f32.mxu0 0.0
        %1447 = vmatmul.mubr.f32.gmra.mrb[0].mxu0 %v1359
        %v1448 = vpop.f32.mrb[0].mxu0
        %v1449 = vadd.f32 0.0, %v1448
        %v1450 = vpop.f32.mrb[0].mxu0
        %v1451 = vadd.f32 0.0, %v1450
        %1452 = vmatprep.mubr.f32.mxu0 0.0
        %1453 = vmatmul.mubr.f32.gmra.mrb[0].mxu0 %v1362
        %v1454 = vpop.f32.mrb[0].mxu0
        %v1455 = vadd.f32 0.0, %v1454
        %v1456 = vpop.f32.mrb[0].mxu0
        %v1457 = vadd.f32 0.0, %v1456
        %1458 = vdwg.mxu0
        %v1459 = vadd.f32 %v1321, %v1437
        %v1460 = vadd.f32 %v1322, %v1439
        %v1461 = vadd.f32 %v1323, %v1443
        %v1462 = vadd.f32 %v1324, %v1445
        %v1463 = vadd.f32 %v1325, %v1449
        %v1464 = vadd.f32 %v1326, %v1451
        %v1465 = vadd.f32 %v1327, %v1455
        %v1466 = vadd.f32 %v1328, %v1457
        %v1467 = vld [vmem:[%s2] sm:$0xff]
        %v1468 = vld [vmem:[%s2 + $0x8] sm:$0xff]
        %v1469 = vld [vmem:[%s2 + $0x10] sm:$0xff]
        %v1470 = vld [vmem:[%s2 + $0x18] sm:$0xff]
        %1472 = vset.pattern.permute.xlu0 0
        %1473 = vperm.xlu0 %1472, %v1467
        %v1474 = vpop.permute.xlu0 %1473
        %1477 = vset.pattern.permute.xlu0 0
        %1478 = vperm.xlu0 %1477, %v1468
        %v1479 = vpop.permute.xlu0 %1478
        %1482 = vset.pattern.permute.xlu0 0
        %1483 = vperm.xlu0 %1482, %v1469
        %v1484 = vpop.permute.xlu0 %1483
        %1487 = vset.pattern.permute.xlu0 0
        %1488 = vperm.xlu0 %1487, %v1470
        %v1489 = vpop.permute.xlu0 %1488
        %v1491 = vadd.f32 %v1459, %v1474
        %v1492 = vadd.f32 %v1460, %v1474
        %v1493 = vadd.f32 %v1461, %v1479
        %v1494 = vadd.f32 %v1462, %v1479
        %v1495 = vadd.f32 %v1463, %v1484
        %v1496 = vadd.f32 %v1464, %v1484
        %v1497 = vadd.f32 %v1465, %v1489
        %v1498 = vadd.f32 %v1466, %v1489
        %v1499 = vadd.f32 %v1491, %v1492
        %1500 = vadd.xlane.f32.xlu0 %v1499
        %v1501 = vpop.xlane.xlu0 %1500
        %v1502 = vadd.f32 %v1493, %v1494
        %1503 = vadd.xlane.f32.xlu0 %v1502
        %v1504 = vpop.xlane.xlu0 %1503
        %v1505 = vadd.f32 %v1495, %v1496
        %1506 = vadd.xlane.f32.xlu0 %v1505
        %v1507 = vpop.xlane.xlu0 %1506
        %v1508 = vadd.f32 %v1497, %v1498
        %1509 = vadd.xlane.f32.xlu0 %v1508
        %v1510 = vpop.xlane.xlu0 %1509
        %v1511 = vmul.f32 %v1491, %v1491
        %v1512 = vmul.f32 %v1492, %v1492
        %v1513 = vmul.f32 %v1493, %v1493
        %v1514 = vmul.f32 %v1494, %v1494
        %v1515 = vmul.f32 %v1495, %v1495
        %v1516 = vmul.f32 %v1496, %v1496
        %v1517 = vmul.f32 %v1497, %v1497
        %v1518 = vmul.f32 %v1498, %v1498
        %v1519 = vadd.f32 %v1511, %v1512
        %1520 = vadd.xlane.f32.xlu0 %v1519
        %v1521 = vpop.xlane.xlu0 %1520
        %v1522 = vadd.f32 %v1513, %v1514
        %1523 = vadd.xlane.f32.xlu0 %v1522
        %v1524 = vpop.xlane.xlu0 %1523
        %v1525 = vadd.f32 %v1515, %v1516
        %1526 = vadd.xlane.f32.xlu0 %v1525
        %v1527 = vpop.xlane.xlu0 %1526
        %v1528 = vadd.f32 %v1517, %v1518
        %1529 = vadd.xlane.f32.xlu0 %v1528
        %v1530 = vpop.xlane.xlu0 %1529
        %v1531 = vmul.f32 %v1501, 0.00390625
        %v1532 = vmul.f32 %v1504, 0.00390625
        %v1533 = vmul.f32 %v1507, 0.00390625
        %v1534 = vmul.f32 %v1510, 0.00390625
        %v1535 = vmul.f32 %v1521, 0.00390625
        %v1536 = vmul.f32 %v1524, 0.00390625
        %v1537 = vmul.f32 %v1527, 0.00390625
        %v1538 = vmul.f32 %v1530, 0.00390625
        %v1539 = vmul.f32 %v1531, %v1531
        %v1540 = vmul.f32 %v1532, %v1532
        %v1541 = vmul.f32 %v1533, %v1533
        %v1542 = vmul.f32 %v1534, %v1534
        %v1543 = vsub.f32 %v1535, %v1539
        %v1544 = vsub.f32 %v1536, %v1540
        %v1545 = vsub.f32 %v1537, %v1541
        %v1546 = vsub.f32 %v1538, %v1542
        %v1547 = vsub.f32 %v1491, %v1531
        %v1548 = vsub.f32 %v1492, %v1531
        %v1549 = vsub.f32 %v1493, %v1532
        %v1550 = vsub.f32 %v1494, %v1532
        %v1551 = vsub.f32 %v1495, %v1533
        %v1552 = vsub.f32 %v1496, %v1533
        %v1553 = vsub.f32 %v1497, %v1534
        %v1554 = vsub.f32 %v1498, %v1534
        %v1555 = vadd.f32 %v1543, 1e-05
        %v1556 = vadd.f32 %v1544, 1e-05
        %v1557 = vadd.f32 %v1545, 1e-05
        %v1558 = vadd.f32 %v1546, 1e-05
        %v1559 = vrsqrt.pop %v1555
        %v1560 = vrsqrt.pop %v1556
        %v1561 = vrsqrt.pop %v1557
        %v1562 = vrsqrt.pop %v1558
        %v1563 = vmul.f32 %v1547, %v1559
        %v1564 = vmul.f32 %v1548, %v1559
        %v1565 = vmul.f32 %v1549, %v1560
        %v1566 = vmul.f32 %v1550, %v1560
        %v1567 = vmul.f32 %v1551, %v1561
        %v1568 = vmul.f32 %v1552, %v1561
        %v1569 = vmul.f32 %v1553, %v1562
        %v1570 = vmul.f32 %v1554, %v1562
        %v1571 = vmax.f32 %v1563, 0.0
        %v1572 = vmax.f32 %v1564, 0.0
        %v1573 = vmax.f32 %v1565, 0.0
        %v1574 = vmax.f32 %v1566, 0.0
        %v1575 = vmax.f32 %v1567, 0.0
        %v1576 = vmax.f32 %v1568, 0.0
        %v1577 = vmax.f32 %v1569, 0.0
        %v1578 = vmax.f32 %v1570, 0.0
        %1579 = vst [vmem:[#allocation3 + $0x8] sm:$0xff] %v1571
        %1580 = vst [vmem:[#allocation3 + $0x10] sm:$0xff] %v1572
        %1581 = vst [vmem:[#allocation3 + $0x28] sm:$0xff] %v1573
        %1582 = vst [vmem:[#allocation3 + $0x30] sm:$0xff] %v1574
        %1583 = vst [vmem:[#allocation3 + $0x48] sm:$0xff] %v1575
        %1584 = vst [vmem:[#allocation3 + $0x50] sm:$0xff] %v1576
        %1585 = vst [vmem:[#allocation3 + $0x68] sm:$0xff] %v1577
        %1586 = vst [vmem:[#allocation3 + $0x70] sm:$0xff] %v1578
        %v1587 = vld [vmem:[#allocation3] sm:$0xff]
        %v1588 = vld [vmem:[#allocation3 + $0x8] sm:$0xff]
        %v1589 = vld [vmem:[#allocation3 + $0x10] sm:$0xff]
        %v1590 = vld [vmem:[#allocation3 + $0x20] sm:$0xff]
        %v1591 = vld [vmem:[#allocation3 + $0x28] sm:$0xff]
        %v1592 = vld [vmem:[#allocation3 + $0x30] sm:$0xff]
        %v1593 = vld [vmem:[#allocation3 + $0x40] sm:$0xff]
        %v1594 = vld [vmem:[#allocation3 + $0x48] sm:$0xff]
        %v1595 = vld [vmem:[#allocation3 + $0x50] sm:$0xff]
        %v1596 = vld [vmem:[#allocation3 + $0x60] sm:$0xff]
        %v1597 = vld [vmem:[#allocation3 + $0x68] sm:$0xff]
        %v1598 = vld [vmem:[#allocation3 + $0x70] sm:$0xff]
        %1611 = vrot.lane.b32.xlu0 %v1587, 17
        %v1612 = vpop.permute.xlu0 %1611
        %1613 = vrot.lane.b32.xlu0 %v1588, 17
        %v1614 = vpop.permute.xlu0 %1613
        %1615 = vrot.lane.b32.xlu0 %v1589, 17
        %v1616 = vpop.permute.xlu0 %1615
        %1617 = vrot.lane.b32.xlu0 %v1590, 17
        %v1618 = vpop.permute.xlu0 %1617
        %1619 = vrot.lane.b32.xlu0 %v1591, 17
        %v1620 = vpop.permute.xlu0 %1619
        %1621 = vrot.lane.b32.xlu0 %v1592, 17
        %v1622 = vpop.permute.xlu0 %1621
        %1623 = vrot.lane.b32.xlu0 %v1593, 17
        %v1624 = vpop.permute.xlu0 %1623
        %1625 = vrot.lane.b32.xlu0 %v1594, 17
        %v1626 = vpop.permute.xlu0 %1625
        %1627 = vrot.lane.b32.xlu0 %v1595, 17
        %v1628 = vpop.permute.xlu0 %1627
        %1629 = vrot.lane.b32.xlu0 %v1596, 17
        %v1630 = vpop.permute.xlu0 %1629
        %1631 = vrot.lane.b32.xlu0 %v1597, 17
        %v1632 = vpop.permute.xlu0 %1631
        %1633 = vrot.lane.b32.xlu0 %v1598, 17
        %v1634 = vpop.permute.xlu0 %1633
        %v1635 = vsel %vm281, %v1612, %v1614
        %v1636 = vsel %vm281, %v1614, %v1616
        %v1637 = vsel %vm281, %v1618, %v1620
        %v1638 = vsel %vm281, %v1620, %v1622
        %v1639 = vsel %vm281, %v1624, %v1626
        %v1640 = vsel %vm281, %v1626, %v1628
        %v1641 = vsel %vm281, %v1630, %v1632
        %v1642 = vsel %vm281, %v1632, %v1634
        %v1651 = vsel %vm270, %v1635, 0.0
        %v1652 = vsel %vm271, %v1636, 0.0
        %v1653 = vsel %vm270, %v1637, 0.0
        %v1654 = vsel %vm271, %v1638, 0.0
        %v1655 = vsel %vm270, %v1639, 0.0
        %v1656 = vsel %vm271, %v1640, 0.0
        %v1657 = vsel %vm270, %v1641, 0.0
        %v1658 = vsel %vm271, %v1642, 0.0
        %v1659 = vld [vmem:[%s3] sm:$0xff]
        %v1660 = vld [vmem:[%s3 + $0x8] sm:$0xff]
        %v1661 = vld [vmem:[%s3 + $0x10] sm:$0xff]
        %v1662 = vld [vmem:[%s3 + $0x18] sm:$0xff]
        %s1663 = scalar_lea.vmem %s3, 32
        %v1664 = vld [vmem:[%s1663] sm:$0xff]
        %v1665 = vld [vmem:[%s1663 + $0x8] sm:$0xff]
        %v1666 = vld [vmem:[%s1663 + $0x10] sm:$0xff]
        %v1667 = vld [vmem:[%s1663 + $0x18] sm:$0xff]
        %1668 = vrot.lane.b32.xlu0 %v1587, 16
        %v1669 = vpop.permute.xlu0 %1668
        %1670 = vrot.lane.b32.xlu0 %v1588, 16
        %v1671 = vpop.permute.xlu0 %1670
        %1672 = vrot.lane.b32.xlu0 %v1589, 16
        %v1673 = vpop.permute.xlu0 %1672
        %1674 = vrot.lane.b32.xlu0 %v1590, 16
        %v1675 = vpop.permute.xlu0 %1674
        %1676 = vrot.lane.b32.xlu0 %v1591, 16
        %v1677 = vpop.permute.xlu0 %1676
        %1678 = vrot.lane.b32.xlu0 %v1592, 16
        %v1679 = vpop.permute.xlu0 %1678
        %1680 = vrot.lane.b32.xlu0 %v1593, 16
        %v1681 = vpop.permute.xlu0 %1680
        %1682 = vrot.lane.b32.xlu0 %v1594, 16
        %v1683 = vpop.permute.xlu0 %1682
        %1684 = vrot.lane.b32.xlu0 %v1595, 16
        %v1685 = vpop.permute.xlu0 %1684
        %1686 = vrot.lane.b32.xlu0 %v1596, 16
        %v1687 = vpop.permute.xlu0 %1686
        %1688 = vrot.lane.b32.xlu0 %v1597, 16
        %v1689 = vpop.permute.xlu0 %1688
        %1690 = vrot.lane.b32.xlu0 %v1598, 16
        %v1691 = vpop.permute.xlu0 %1690
        %v1692 = vsel %vm303, %v1669, %v1671
        %v1693 = vsel %vm303, %v1671, %v1673
        %v1694 = vsel %vm303, %v1675, %v1677
        %v1695 = vsel %vm303, %v1677, %v1679
        %v1696 = vsel %vm303, %v1681, %v1683
        %v1697 = vsel %vm303, %v1683, %v1685
        %v1698 = vsel %vm303, %v1687, %v1689
        %v1699 = vsel %vm303, %v1689, %v1691
        %vm1708 = vcmask 261120
        %v1710 = vsel %vm1708, %v1664, 0
        %v1713 = vsel %vm1708, %v1665, 0
        %v1716 = vsel %vm1708, %v1666, 0
        %v1719 = vsel %vm1708, %v1667, 0
        %1721 = vmatprep.subr.mxu0 %v1693
        %1722 = vmatpush1.msra.mxu0 %v1692
        %1723 = vmatprep.subr.mxu0 %v1695
        %1724 = vmatpush1.msra.mxu0 %v1694
        %1725 = vmatprep.subr.mxu0 %v1697
        %1726 = vmatpush1.msra.mxu0 %v1696
        %1727 = vmatprep.subr.mxu0 %v1699
        %1728 = vmatpush1.msra.mxu0 %v1698
        %1729 = vmatprep.subr.mxu0 0.0
        %1730 = vmatpush1.msra.mxu0 0.0
        %1731 = vmatprep.subr.mxu0 0.0
        %1732 = vmatpush1.msra.mxu0 0.0
        %1733 = vmatprep.subr.mxu0 0.0
        %1734 = vmatpush1.msra.mxu0 0.0
        %1735 = vmatprep.subr.mxu0 0.0
        %1736 = vmatpush1.msra.mxu0 0.0
        %1737 = vmatprep.subr.mxu0 0.0
        %1738 = vmatpush1.msra.mxu0 0.0
        %1739 = vmatprep.subr.mxu0 0.0
        %1740 = vmatpush1.msra.mxu0 0.0
        %1741 = vmatprep.subr.mxu0 0.0
        %1742 = vmatpush1.msra.mxu0 0.0
        %1743 = vmatprep.subr.mxu0 0.0
        %1744 = vmatpush1.msra.mxu0 0.0
        %1745 = vmatprep.subr.mxu0 0.0
        %1746 = vmatpush1.msra.mxu0 0.0
        %1747 = vmatprep.subr.mxu0 0.0
        %1748 = vmatpush1.msra.mxu0 0.0
        %1749 = vmatprep.subr.mxu0 0.0
        %1750 = vmatpush1.msra.mxu0 0.0
        %1751 = vmatprep.subr.mxu0 0.0
        %1752 = vmatpush1.msra.mxu0 0.0
        %1753 = vmatprep.subr.mxu0 0.0
        %1754 = vmatpush1.msra.mxu0 0.0
        %1755 = vmatprep.subr.mxu0 0.0
        %1756 = vmatpush1.msra.mxu0 0.0
        %1757 = vmatprep.subr.mxu0 0.0
        %1758 = vmatpush1.msra.mxu0 0.0
        %1759 = vmatprep.subr.mxu0 0.0
        %1760 = vmatpush1.msra.mxu0 0.0
        %1761 = vmatprep.subr.mxu0 0.0
        %1762 = vmatpush1.msra.mxu0 0.0
        %1763 = vmatprep.subr.mxu0 0.0
        %1764 = vmatpush1.msra.mxu0 0.0
        %1765 = vmatprep.subr.mxu0 0.0
        %1766 = vmatpush1.msra.mxu0 0.0
        %1767 = vmatprep.subr.mxu0 0.0
        %1768 = vmatpush1.msra.mxu0 0.0
        %1769 = vmatprep.subr.mxu0 0.0
        %1770 = vmatpush1.msra.mxu0 0.0
        %1771 = vmatprep.subr.mxu0 0.0
        %1772 = vmatpush1.msra.mxu0 0.0
        %1773 = vmatprep.subr.mxu0 0.0
        %1774 = vmatpush1.msra.mxu0 0.0
        %1775 = vmatprep.subr.mxu0 0.0
        %1776 = vmatpush1.msra.mxu0 0.0
        %1777 = vmatprep.subr.mxu0 0.0
        %1778 = vmatpush1.msra.mxu0 0.0
        %1779 = vmatprep.subr.mxu0 0.0
        %1780 = vmatpush1.msra.mxu0 0.0
        %1781 = vmatprep.subr.mxu0 0.0
        %1782 = vmatpush1.msra.mxu0 0.0
        %1783 = vmatprep.subr.mxu0 0.0
        %1784 = vmatpush1.msra.mxu0 0.0
        %1785 = vmatprep.mubr.f32.mxu0 0.0
        %1786 = vmatmul.mubr.f32.gmra.mrb[0].mxu0 %v1710
        %v1787 = vpop.f32.mrb[0].mxu0
        %v1788 = vadd.f32 0.0, %v1787
        %v1789 = vpop.f32.mrb[0].mxu0
        %v1790 = vadd.f32 0.0, %v1789
        %1791 = vmatprep.mubr.f32.mxu0 0.0
        %1792 = vmatmul.mubr.f32.gmra.mrb[0].mxu0 %v1713
        %v1793 = vpop.f32.mrb[0].mxu0
        %v1794 = vadd.f32 0.0, %v1793
        %v1795 = vpop.f32.mrb[0].mxu0
        %v1796 = vadd.f32 0.0, %v1795
        %1797 = vmatprep.mubr.f32.mxu0 0.0
        %1798 = vmatmul.mubr.f32.gmra.mrb[0].mxu0 %v1716
        %v1799 = vpop.f32.mrb[0].mxu0
        %v1800 = vadd.f32 0.0, %v1799
        %v1801 = vpop.f32.mrb[0].mxu0
        %v1802 = vadd.f32 0.0, %v1801
        %1803 = vmatprep.mubr.f32.mxu0 0.0
        %1804 = vmatmul.mubr.f32.gmra.mrb[0].mxu0 %v1719
        %v1805 = vpop.f32.mrb[0].mxu0
        %v1806 = vadd.f32 0.0, %v1805
        %v1807 = vpop.f32.mrb[0].mxu0
        %v1808 = vadd.f32 0.0, %v1807
        %1809 = vdwg.mxu0
        %v1811 = vsel %vm1708, %v1659, 0
        %v1814 = vsel %vm1708, %v1660, 0
        %v1817 = vsel %vm1708, %v1661, 0
        %v1820 = vsel %vm1708, %v1662, 0
        %1822 = vmatprep.subr.mxu0 %v1652
        %1823 = vmatpush1.msra.mxu0 %v1651
        %1824 = vmatprep.subr.mxu0 %v1654
        %1825 = vmatpush1.msra.mxu0 %v1653
        %1826 = vmatprep.subr.mxu0 %v1656
        %1827 = vmatpush1.msra.mxu0 %v1655
        %1828 = vmatprep.subr.mxu0 %v1658
        %1829 = vmatpush1.msra.mxu0 %v1657
        %1830 = vmatprep.subr.mxu0 0.0
        %1831 = vmatpush1.msra.mxu0 0.0
        %1832 = vmatprep.subr.mxu0 0.0
        %1833 = vmatpush1.msra.mxu0 0.0
        %1834 = vmatprep.subr.mxu0 0.0
        %1835 = vmatpush1.msra.mxu0 0.0
        %1836 = vmatprep.subr.mxu0 0.0
        %1837 = vmatpush1.msra.mxu0 0.0
        %1838 = vmatprep.subr.mxu0 0.0
        %1839 = vmatpush1.msra.mxu0 0.0
        %1840 = vmatprep.subr.mxu0 0.0
        %1841 = vmatpush1.msra.mxu0 0.0
        %1842 = vmatprep.subr.mxu0 0.0
        %1843 = vmatpush1.msra.mxu0 0.0
        %1844 = vmatprep.subr.mxu0 0.0
        %1845 = vmatpush1.msra.mxu0 0.0
        %1846 = vmatprep.subr.mxu0 0.0
        %1847 = vmatpush1.msra.mxu0 0.0
        %1848 = vmatprep.subr.mxu0 0.0
        %1849 = vmatpush1.msra.mxu0 0.0
        %1850 = vmatprep.subr.mxu0 0.0
        %1851 = vmatpush1.msra.mxu0 0.0
        %1852 = vmatprep.subr.mxu0 0.0
        %1853 = vmatpush1.msra.mxu0 0.0
        %1854 = vmatprep.subr.mxu0 0.0
        %1855 = vmatpush1.msra.mxu0 0.0
        %1856 = vmatprep.subr.mxu0 0.0
        %1857 = vmatpush1.msra.mxu0 0.0
        %1858 = vmatprep.subr.mxu0 0.0
        %1859 = vmatpush1.msra.mxu0 0.0
        %1860 = vmatprep.subr.mxu0 0.0
        %1861 = vmatpush1.msra.mxu0 0.0
        %1862 = vmatprep.subr.mxu0 0.0
        %1863 = vmatpush1.msra.mxu0 0.0
        %1864 = vmatprep.subr.mxu0 0.0
        %1865 = vmatpush1.msra.mxu0 0.0
        %1866 = vmatprep.subr.mxu0 0.0
        %1867 = vmatpush1.msra.mxu0 0.0
        %1868 = vmatprep.subr.mxu0 0.0
        %1869 = vmatpush1.msra.mxu0 0.0
        %1870 = vmatprep.subr.mxu0 0.0
        %1871 = vmatpush1.msra.mxu0 0.0
        %1872 = vmatprep.subr.mxu0 0.0
        %1873 = vmatpush1.msra.mxu0 0.0
        %1874 = vmatprep.subr.mxu0 0.0
        %1875 = vmatpush1.msra.mxu0 0.0
        %1876 = vmatprep.subr.mxu0 0.0
        %1877 = vmatpush1.msra.mxu0 0.0
        %1878 = vmatprep.subr.mxu0 0.0
        %1879 = vmatpush1.msra.mxu0 0.0
        %1880 = vmatprep.subr.mxu0 0.0
        %1881 = vmatpush1.msra.mxu0 0.0
        %1882 = vmatprep.subr.mxu0 0.0
        %1883 = vmatpush1.msra.mxu0 0.0
        %1884 = vmatprep.subr.mxu0 0.0
        %1885 = vmatpush1.msra.mxu0 0.0
        %1886 = vmatprep.mubr.f32.mxu0 0.0
        %1887 = vmatmul.mubr.f32.gmra.mrb[0].mxu0 %v1811
        %v1888 = vpop.f32.mrb[0].mxu0
        %v1889 = vadd.f32 %v1788, %v1888
        %v1890 = vpop.f32.mrb[0].mxu0
        %v1891 = vadd.f32 %v1790, %v1890
        %1892 = vmatprep.mubr.f32.mxu0 0.0
        %1893 = vmatmul.mubr.f32.gmra.mrb[0].mxu0 %v1814
        %v1894 = vpop.f32.mrb[0].mxu0
        %v1895 = vadd.f32 %v1794, %v1894
        %v1896 = vpop.f32.mrb[0].mxu0
        %v1897 = vadd.f32 %v1796, %v1896
        %1898 = vmatprep.mubr.f32.mxu0 0.0
        %1899 = vmatmul.mubr.f32.gmra.mrb[0].mxu0 %v1817
        %v1900 = vpop.f32.mrb[0].mxu0
        %v1901 = vadd.f32 %v1800, %v1900
        %v1902 = vpop.f32.mrb[0].mxu0
        %v1903 = vadd.f32 %v1802, %v1902
        %1904 = vmatprep.mubr.f32.mxu0 0.0
        %1905 = vmatmul.mubr.f32.gmra.mrb[0].mxu0 %v1820
        %v1906 = vpop.f32.mrb[0].mxu0
        %v1907 = vadd.f32 %v1806, %v1906
        %v1908 = vpop.f32.mrb[0].mxu0
        %v1909 = vadd.f32 %v1808, %v1908
        %1910 = vdwg.mxu0
        %1911 = vrot.lane.b32.xlu0 %v1587, 15
        %v1912 = vpop.permute.xlu0 %1911
        %1913 = vrot.lane.b32.xlu0 %v1588, 15
        %v1914 = vpop.permute.xlu0 %1913
        %1915 = vrot.lane.b32.xlu0 %v1589, 15
        %v1916 = vpop.permute.xlu0 %1915
        %1917 = vrot.lane.b32.xlu0 %v1590, 15
        %v1918 = vpop.permute.xlu0 %1917
        %1919 = vrot.lane.b32.xlu0 %v1591, 15
        %v1920 = vpop.permute.xlu0 %1919
        %1921 = vrot.lane.b32.xlu0 %v1592, 15
        %v1922 = vpop.permute.xlu0 %1921
        %1923 = vrot.lane.b32.xlu0 %v1593, 15
        %v1924 = vpop.permute.xlu0 %1923
        %1925 = vrot.lane.b32.xlu0 %v1594, 15
        %v1926 = vpop.permute.xlu0 %1925
        %1927 = vrot.lane.b32.xlu0 %v1595, 15
        %v1928 = vpop.permute.xlu0 %1927
        %1929 = vrot.lane.b32.xlu0 %v1596, 15
        %v1930 = vpop.permute.xlu0 %1929
        %1931 = vrot.lane.b32.xlu0 %v1597, 15
        %v1932 = vpop.permute.xlu0 %1931
        %1933 = vrot.lane.b32.xlu0 %v1598, 15
        %v1934 = vpop.permute.xlu0 %1933
        %v1935 = vsel %vm535, %v1912, %v1914
        %v1936 = vsel %vm535, %v1914, %v1916
        %v1937 = vsel %vm535, %v1918, %v1920
        %v1938 = vsel %vm535, %v1920, %v1922
        %v1939 = vsel %vm535, %v1924, %v1926
        %v1940 = vsel %vm535, %v1926, %v1928
        %v1941 = vsel %vm535, %v1930, %v1932
        %v1942 = vsel %vm535, %v1932, %v1934
        %v1951 = vsel %vm524, %v1935, 0.0
        %v1952 = vsel %vm525, %v1936, 0.0
        %v1953 = vsel %vm524, %v1937, 0.0
        %v1954 = vsel %vm525, %v1938, 0.0
        %v1955 = vsel %vm524, %v1939, 0.0
        %v1956 = vsel %vm525, %v1940, 0.0
        %v1957 = vsel %vm524, %v1941, 0.0
        %v1958 = vsel %vm525, %v1942, 0.0
        %s1959 = scalar_lea.vmem %s3, 64
        %v1960 = vld [vmem:[%s1959] sm:$0xff]
        %v1961 = vld [vmem:[%s1959 + $0x8] sm:$0xff]
        %v1962 = vld [vmem:[%s1959 + $0x10] sm:$0xff]
        %v1963 = vld [vmem:[%s1959 + $0x18] sm:$0xff]
        %v1965 = vsel %vm1708, %v1960, 0
        %v1968 = vsel %vm1708, %v1961, 0
        %v1971 = vsel %vm1708, %v1962, 0
        %v1974 = vsel %vm1708, %v1963, 0
        %1976 = vmatprep.subr.mxu0 %v1952
        %1977 = vmatpush1.msra.mxu0 %v1951
        %1978 = vmatprep.subr.mxu0 %v1954
        %1979 = vmatpush1.msra.mxu0 %v1953
        %1980 = vmatprep.subr.mxu0 %v1956
        %1981 = vmatpush1.msra.mxu0 %v1955
        %1982 = vmatprep.subr.mxu0 %v1958
        %1983 = vmatpush1.msra.mxu0 %v1957
        %1984 = vmatprep.subr.mxu0 0.0
        %1985 = vmatpush1.msra.mxu0 0.0
        %1986 = vmatprep.subr.mxu0 0.0
        %1987 = vmatpush1.msra.mxu0 0.0
        %1988 = vmatprep.subr.mxu0 0.0
        %1989 = vmatpush1.msra.mxu0 0.0
        %1990 = vmatprep.subr.mxu0 0.0
        %1991 = vmatpush1.msra.mxu0 0.0
        %1992 = vmatprep.subr.mxu0 0.0
        %1993 = vmatpush1.msra.mxu0 0.0
        %1994 = vmatprep.subr.mxu0 0.0
        %1995 = vmatpush1.msra.mxu0 0.0
        %1996 = vmatprep.subr.mxu0 0.0
        %1997 = vmatpush1.msra.mxu0 0.0
        %1998 = vmatprep.subr.mxu0 0.0
        %1999 = vmatpush1.msra.mxu0 0.0
        %2000 = vmatprep.subr.mxu0 0.0
        %2001 = vmatpush1.msra.mxu0 0.0
        %2002 = vmatprep.subr.mxu0 0.0
        %2003 = vmatpush1.msra.mxu0 0.0
        %2004 = vmatprep.subr.mxu0 0.0
        %2005 = vmatpush1.msra.mxu0 0.0
        %2006 = vmatprep.subr.mxu0 0.0
        %2007 = vmatpush1.msra.mxu0 0.0
        %2008 = vmatprep.subr.mxu0 0.0
        %2009 = vmatpush1.msra.mxu0 0.0
        %2010 = vmatprep.subr.mxu0 0.0
        %2011 = vmatpush1.msra.mxu0 0.0
        %2012 = vmatprep.subr.mxu0 0.0
        %2013 = vmatpush1.msra.mxu0 0.0
        %2014 = vmatprep.subr.mxu0 0.0
        %2015 = vmatpush1.msra.mxu0 0.0
        %2016 = vmatprep.subr.mxu0 0.0
        %2017 = vmatpush1.msra.mxu0 0.0
        %2018 = vmatprep.subr.mxu0 0.0
        %2019 = vmatpush1.msra.mxu0 0.0
        %2020 = vmatprep.subr.mxu0 0.0
        %2021 = vmatpush1.msra.mxu0 0.0
        %2022 = vmatprep.subr.mxu0 0.0
        %2023 = vmatpush1.msra.mxu0 0.0
        %2024 = vmatprep.subr.mxu0 0.0
        %2025 = vmatpush1.msra.mxu0 0.0
        %2026 = vmatprep.subr.mxu0 0.0
        %2027 = vmatpush1.msra.mxu0 0.0
        %2028 = vmatprep.subr.mxu0 0.0
        %2029 = vmatpush1.msra.mxu0 0.0
        %2030 = vmatprep.subr.mxu0 0.0
        %2031 = vmatpush1.msra.mxu0 0.0
        %2032 = vmatprep.subr.mxu0 0.0
        %2033 = vmatpush1.msra.mxu0 0.0
        %2034 = vmatprep.subr.mxu0 0.0
        %2035 = vmatpush1.msra.mxu0 0.0
        %2036 = vmatprep.subr.mxu0 0.0
        %2037 = vmatpush1.msra.mxu0 0.0
        %2038 = vmatprep.subr.mxu0 0.0
        %2039 = vmatpush1.msra.mxu0 0.0
        %2040 = vmatprep.mubr.f32.mxu0 0.0
        %2041 = vmatmul.mubr.f32.gmra.mrb[0].mxu0 %v1965
        %v2042 = vpop.f32.mrb[0].mxu0
        %v2043 = vadd.f32 0.0, %v2042
        %v2044 = vpop.f32.mrb[0].mxu0
        %v2045 = vadd.f32 0.0, %v2044
        %2046 = vmatprep.mubr.f32.mxu0 0.0
        %2047 = vmatmul.mubr.f32.gmra.mrb[0].mxu0 %v1968
        %v2048 = vpop.f32.mrb[0].mxu0
        %v2049 = vadd.f32 0.0, %v2048
        %v2050 = vpop.f32.mrb[0].mxu0
        %v2051 = vadd.f32 0.0, %v2050
        %2052 = vmatprep.mubr.f32.mxu0 0.0
        %2053 = vmatmul.mubr.f32.gmra.mrb[0].mxu0 %v1971
        %v2054 = vpop.f32.mrb[0].mxu0
        %v2055 = vadd.f32 0.0, %v2054
        %v2056 = vpop.f32.mrb[0].mxu0
        %v2057 = vadd.f32 0.0, %v2056
        %2058 = vmatprep.mubr.f32.mxu0 0.0
        %2059 = vmatmul.mubr.f32.gmra.mrb[0].mxu0 %v1974
        %v2060 = vpop.f32.mrb[0].mxu0
        %v2061 = vadd.f32 0.0, %v2060
        %v2062 = vpop.f32.mrb[0].mxu0
        %v2063 = vadd.f32 0.0, %v2062
        %2064 = vdwg.mxu0
        %v2065 = vadd.f32 %v1889, %v2043
        %v2066 = vadd.f32 %v1891, %v2045
        %v2067 = vadd.f32 %v1895, %v2049
        %v2068 = vadd.f32 %v1897, %v2051
        %v2069 = vadd.f32 %v1901, %v2055
        %v2070 = vadd.f32 %v1903, %v2057
        %v2071 = vadd.f32 %v1907, %v2061
        %v2072 = vadd.f32 %v1909, %v2063
        %2073 = vrot.lane.b32.xlu0 %v1587, 1
        %v2074 = vpop.permute.xlu0 %2073
        %2075 = vrot.lane.b32.xlu0 %v1588, 1
        %v2076 = vpop.permute.xlu0 %2075
        %2077 = vrot.lane.b32.xlu0 %v1589, 1
        %v2078 = vpop.permute.xlu0 %2077
        %2079 = vrot.lane.b32.xlu0 %v1590, 1
        %v2080 = vpop.permute.xlu0 %2079
        %2081 = vrot.lane.b32.xlu0 %v1591, 1
        %v2082 = vpop.permute.xlu0 %2081
        %2083 = vrot.lane.b32.xlu0 %v1592, 1
        %v2084 = vpop.permute.xlu0 %2083
        %2085 = vrot.lane.b32.xlu0 %v1593, 1
        %v2086 = vpop.permute.xlu0 %2085
        %2087 = vrot.lane.b32.xlu0 %v1594, 1
        %v2088 = vpop.permute.xlu0 %2087
        %2089 = vrot.lane.b32.xlu0 %v1595, 1
        %v2090 = vpop.permute.xlu0 %2089
        %2091 = vrot.lane.b32.xlu0 %v1596, 1
        %v2092 = vpop.permute.xlu0 %2091
        %2093 = vrot.lane.b32.xlu0 %v1597, 1
        %v2094 = vpop.permute.xlu0 %2093
        %2095 = vrot.lane.b32.xlu0 %v1598, 1
        %v2096 = vpop.permute.xlu0 %2095
        %v2097 = vsel %vm673, %v2074, %v2076
        %v2098 = vsel %vm673, %v2076, %v2078
        %v2099 = vsel %vm673, %v2080, %v2082
        %v2100 = vsel %vm673, %v2082, %v2084
        %v2101 = vsel %vm673, %v2086, %v2088
        %v2102 = vsel %vm673, %v2088, %v2090
        %v2103 = vsel %vm673, %v2092, %v2094
        %v2104 = vsel %vm673, %v2094, %v2096
        %v2113 = vsel %vm270, %v2097, 0.0
        %v2114 = vsel %vm271, %v2098, 0.0
        %v2115 = vsel %vm270, %v2099, 0.0
        %v2116 = vsel %vm271, %v2100, 0.0
        %v2117 = vsel %vm270, %v2101, 0.0
        %v2118 = vsel %vm271, %v2102, 0.0
        %v2119 = vsel %vm270, %v2103, 0.0
        %v2120 = vsel %vm271, %v2104, 0.0
        %s2121 = scalar_lea.vmem %s3, 96
        %v2122 = vld [vmem:[%s2121] sm:$0xff]
        %v2123 = vld [vmem:[%s2121 + $0x8] sm:$0xff]
        %v2124 = vld [vmem:[%s2121 + $0x10] sm:$0xff]
        %v2125 = vld [vmem:[%s2121 + $0x18] sm:$0xff]
        %v2127 = vsel %vm1708, %v2122, 0
        %v2130 = vsel %vm1708, %v2123, 0
        %v2133 = vsel %vm1708, %v2124, 0
        %v2136 = vsel %vm1708, %v2125, 0
        %2138 = vmatprep.subr.mxu0 %v2114
        %2139 = vmatpush1.msra.mxu0 %v2113
        %2140 = vmatprep.subr.mxu0 %v2116
        %2141 = vmatpush1.msra.mxu0 %v2115
        %2142 = vmatprep.subr.mxu0 %v2118
        %2143 = vmatpush1.msra.mxu0 %v2117
        %2144 = vmatprep.subr.mxu0 %v2120
        %2145 = vmatpush1.msra.mxu0 %v2119
        %2146 = vmatprep.subr.mxu0 0.0
        %2147 = vmatpush1.msra.mxu0 0.0
        %2148 = vmatprep.subr.mxu0 0.0
        %2149 = vmatpush1.msra.mxu0 0.0
        %2150 = vmatprep.subr.mxu0 0.0
        %2151 = vmatpush1.msra.mxu0 0.0
        %2152 = vmatprep.subr.mxu0 0.0
        %2153 = vmatpush1.msra.mxu0 0.0
        %2154 = vmatprep.subr.mxu0 0.0
        %2155 = vmatpush1.msra.mxu0 0.0
        %2156 = vmatprep.subr.mxu0 0.0
        %2157 = vmatpush1.msra.mxu0 0.0
        %2158 = vmatprep.subr.mxu0 0.0
        %2159 = vmatpush1.msra.mxu0 0.0
        %2160 = vmatprep.subr.mxu0 0.0
        %2161 = vmatpush1.msra.mxu0 0.0
        %2162 = vmatprep.subr.mxu0 0.0
        %2163 = vmatpush1.msra.mxu0 0.0
        %2164 = vmatprep.subr.mxu0 0.0
        %2165 = vmatpush1.msra.mxu0 0.0
        %2166 = vmatprep.subr.mxu0 0.0
        %2167 = vmatpush1.msra.mxu0 0.0
        %2168 = vmatprep.subr.mxu0 0.0
        %2169 = vmatpush1.msra.mxu0 0.0
        %2170 = vmatprep.subr.mxu0 0.0
        %2171 = vmatpush1.msra.mxu0 0.0
        %2172 = vmatprep.subr.mxu0 0.0
        %2173 = vmatpush1.msra.mxu0 0.0
        %2174 = vmatprep.subr.mxu0 0.0
        %2175 = vmatpush1.msra.mxu0 0.0
        %2176 = vmatprep.subr.mxu0 0.0
        %2177 = vmatpush1.msra.mxu0 0.0
        %2178 = vmatprep.subr.mxu0 0.0
        %2179 = vmatpush1.msra.mxu0 0.0
        %2180 = vmatprep.subr.mxu0 0.0
        %2181 = vmatpush1.msra.mxu0 0.0
        %2182 = vmatprep.subr.mxu0 0.0
        %2183 = vmatpush1.msra.mxu0 0.0
        %2184 = vmatprep.subr.mxu0 0.0
        %2185 = vmatpush1.msra.mxu0 0.0
        %2186 = vmatprep.subr.mxu0 0.0
        %2187 = vmatpush1.msra.mxu0 0.0
        %2188 = vmatprep.subr.mxu0 0.0
        %2189 = vmatpush1.msra.mxu0 0.0
        %2190 = vmatprep.subr.mxu0 0.0
        %2191 = vmatpush1.msra.mxu0 0.0
        %2192 = vmatprep.subr.mxu0 0.0
        %2193 = vmatpush1.msra.mxu0 0.0
        %2194 = vmatprep.subr.mxu0 0.0
        %2195 = vmatpush1.msra.mxu0 0.0
        %2196 = vmatprep.subr.mxu0 0.0
        %2197 = vmatpush1.msra.mxu0 0.0
        %2198 = vmatprep.subr.mxu0 0.0
        %2199 = vmatpush1.msra.mxu0 0.0
        %2200 = vmatprep.subr.mxu0 0.0
        %2201 = vmatpush1.msra.mxu0 0.0
        %2202 = vmatprep.mubr.f32.mxu0 0.0
        %2203 = vmatmul.mubr.f32.gmra.mrb[0].mxu0 %v2127
        %v2204 = vpop.f32.mrb[0].mxu0
        %v2205 = vadd.f32 0.0, %v2204
        %v2206 = vpop.f32.mrb[0].mxu0
        %v2207 = vadd.f32 0.0, %v2206
        %2208 = vmatprep.mubr.f32.mxu0 0.0
        %2209 = vmatmul.mubr.f32.gmra.mrb[0].mxu0 %v2130
        %v2210 = vpop.f32.mrb[0].mxu0
        %v2211 = vadd.f32 0.0, %v2210
        %v2212 = vpop.f32.mrb[0].mxu0
        %v2213 = vadd.f32 0.0, %v2212
        %2214 = vmatprep.mubr.f32.mxu0 0.0
        %2215 = vmatmul.mubr.f32.gmra.mrb[0].mxu0 %v2133
        %v2216 = vpop.f32.mrb[0].mxu0
        %v2217 = vadd.f32 0.0, %v2216
        %v2218 = vpop.f32.mrb[0].mxu0
        %v2219 = vadd.f32 0.0, %v2218
        %2220 = vmatprep.mubr.f32.mxu0 0.0
        %2221 = vmatmul.mubr.f32.gmra.mrb[0].mxu0 %v2136
        %v2222 = vpop.f32.mrb[0].mxu0
        %v2223 = vadd.f32 0.0, %v2222
        %v2224 = vpop.f32.mrb[0].mxu0
        %v2225 = vadd.f32 0.0, %v2224
        %2226 = vdwg.mxu0
        %v2227 = vadd.f32 %v2065, %v2205
        %v2228 = vadd.f32 %v2066, %v2207
        %v2229 = vadd.f32 %v2067, %v2211
        %v2230 = vadd.f32 %v2068, %v2213
        %v2231 = vadd.f32 %v2069, %v2217
        %v2232 = vadd.f32 %v2070, %v2219
        %v2233 = vadd.f32 %v2071, %v2223
        %v2234 = vadd.f32 %v2072, %v2225
        %s2235 = scalar_lea.vmem %s3, 128
        %v2236 = vld [vmem:[%s2235] sm:$0xff]
        %v2237 = vld [vmem:[%s2235 + $0x8] sm:$0xff]
        %v2238 = vld [vmem:[%s2235 + $0x10] sm:$0xff]
        %v2239 = vld [vmem:[%s2235 + $0x18] sm:$0xff]
        %v2241 = vsel %vm1708, %v2236, 0
        %v2244 = vsel %vm1708, %v2237, 0
        %v2247 = vsel %vm1708, %v2238, 0
        %v2250 = vsel %vm1708, %v2239, 0
        %2252 = vmatprep.subr.mxu0 %v1589
        %2253 = vmatpush1.msra.mxu0 %v1588
        %2254 = vmatprep.subr.mxu0 %v1592
        %2255 = vmatpush1.msra.mxu0 %v1591
        %2256 = vmatprep.subr.mxu0 %v1595
        %2257 = vmatpush1.msra.mxu0 %v1594
        %2258 = vmatprep.subr.mxu0 %v1598
        %2259 = vmatpush1.msra.mxu0 %v1597
        %2260 = vmatprep.subr.mxu0 0.0
        %2261 = vmatpush1.msra.mxu0 0.0
        %2262 = vmatprep.subr.mxu0 0.0
        %2263 = vmatpush1.msra.mxu0 0.0
        %2264 = vmatprep.subr.mxu0 0.0
        %2265 = vmatpush1.msra.mxu0 0.0
        %2266 = vmatprep.subr.mxu0 0.0
        %2267 = vmatpush1.msra.mxu0 0.0
        %2268 = vmatprep.subr.mxu0 0.0
        %2269 = vmatpush1.msra.mxu0 0.0
        %2270 = vmatprep.subr.mxu0 0.0
        %2271 = vmatpush1.msra.mxu0 0.0
        %2272 = vmatprep.subr.mxu0 0.0
        %2273 = vmatpush1.msra.mxu0 0.0
        %2274 = vmatprep.subr.mxu0 0.0
        %2275 = vmatpush1.msra.mxu0 0.0
        %2276 = vmatprep.subr.mxu0 0.0
        %2277 = vmatpush1.msra.mxu0 0.0
        %2278 = vmatprep.subr.mxu0 0.0
        %2279 = vmatpush1.msra.mxu0 0.0
        %2280 = vmatprep.subr.mxu0 0.0
        %2281 = vmatpush1.msra.mxu0 0.0
        %2282 = vmatprep.subr.mxu0 0.0
        %2283 = vmatpush1.msra.mxu0 0.0
        %2284 = vmatprep.subr.mxu0 0.0
        %2285 = vmatpush1.msra.mxu0 0.0
        %2286 = vmatprep.subr.mxu0 0.0
        %2287 = vmatpush1.msra.mxu0 0.0
        %2288 = vmatprep.subr.mxu0 0.0
        %2289 = vmatpush1.msra.mxu0 0.0
        %2290 = vmatprep.subr.mxu0 0.0
        %2291 = vmatpush1.msra.mxu0 0.0
        %2292 = vmatprep.subr.mxu0 0.0
        %2293 = vmatpush1.msra.mxu0 0.0
        %2294 = vmatprep.subr.mxu0 0.0
        %2295 = vmatpush1.msra.mxu0 0.0
        %2296 = vmatprep.subr.mxu0 0.0
        %2297 = vmatpush1.msra.mxu0 0.0
        %2298 = vmatprep.subr.mxu0 0.0
        %2299 = vmatpush1.msra.mxu0 0.0
        %2300 = vmatprep.subr.mxu0 0.0
        %2301 = vmatpush1.msra.mxu0 0.0
        %2302 = vmatprep.subr.mxu0 0.0
        %2303 = vmatpush1.msra.mxu0 0.0
        %2304 = vmatprep.subr.mxu0 0.0
        %2305 = vmatpush1.msra.mxu0 0.0
        %2306 = vmatprep.subr.mxu0 0.0
        %2307 = vmatpush1.msra.mxu0 0.0
        %2308 = vmatprep.subr.mxu0 0.0
        %2309 = vmatpush1.msra.mxu0 0.0
        %2310 = vmatprep.subr.mxu0 0.0
        %2311 = vmatpush1.msra.mxu0 0.0
        %2312 = vmatprep.subr.mxu0 0.0
        %2313 = vmatpush1.msra.mxu0 0.0
        %2314 = vmatprep.subr.mxu0 0.0
        %2315 = vmatpush1.msra.mxu0 0.0
        %2316 = vmatprep.mubr.f32.mxu0 0.0
        %2317 = vmatmul.mubr.f32.gmra.mrb[0].mxu0 %v2241
        %v2318 = vpop.f32.mrb[0].mxu0
        %v2319 = vadd.f32 0.0, %v2318
        %v2320 = vpop.f32.mrb[0].mxu0
        %v2321 = vadd.f32 0.0, %v2320
        %2322 = vmatprep.mubr.f32.mxu0 0.0
        %2323 = vmatmul.mubr.f32.gmra.mrb[0].mxu0 %v2244
        %v2324 = vpop.f32.mrb[0].mxu0
        %v2325 = vadd.f32 0.0, %v2324
        %v2326 = vpop.f32.mrb[0].mxu0
        %v2327 = vadd.f32 0.0, %v2326
        %2328 = vmatprep.mubr.f32.mxu0 0.0
        %2329 = vmatmul.mubr.f32.gmra.mrb[0].mxu0 %v2247
        %v2330 = vpop.f32.mrb[0].mxu0
        %v2331 = vadd.f32 0.0, %v2330
        %v2332 = vpop.f32.mrb[0].mxu0
        %v2333 = vadd.f32 0.0, %v2332
        %2334 = vmatprep.mubr.f32.mxu0 0.0
        %2335 = vmatmul.mubr.f32.gmra.mrb[0].mxu0 %v2250
        %v2336 = vpop.f32.mrb[0].mxu0
        %v2337 = vadd.f32 0.0, %v2336
        %v2338 = vpop.f32.mrb[0].mxu0
        %v2339 = vadd.f32 0.0, %v2338
        %2340 = vdwg.mxu0
        %v2341 = vadd.f32 %v2227, %v2319
        %v2342 = vadd.f32 %v2228, %v2321
        %v2343 = vadd.f32 %v2229, %v2325
        %v2344 = vadd.f32 %v2230, %v2327
        %v2345 = vadd.f32 %v2231, %v2331
        %v2346 = vadd.f32 %v2232, %v2333
        %v2347 = vadd.f32 %v2233, %v2337
        %v2348 = vadd.f32 %v2234, %v2339
        %v2349 = vld [vmem:[#allocation3 + $0x8] sm:$0xff]
        %v2350 = vld [vmem:[#allocation3 + $0x10] sm:$0xff]
        %v2351 = vld [vmem:[#allocation3 + $0x18] sm:$0xff]
        %v2352 = vld [vmem:[#allocation3 + $0x28] sm:$0xff]
        %v2353 = vld [vmem:[#allocation3 + $0x30] sm:$0xff]
        %v2354 = vld [vmem:[#allocation3 + $0x38] sm:$0xff]
        %v2355 = vld [vmem:[#allocation3 + $0x48] sm:$0xff]
        %v2356 = vld [vmem:[#allocation3 + $0x50] sm:$0xff]
        %v2357 = vld [vmem:[#allocation3 + $0x58] sm:$0xff]
        %v2358 = vld [vmem:[#allocation3 + $0x68] sm:$0xff]
        %v2359 = vld [vmem:[#allocation3 + $0x70] sm:$0xff]
        %v2360 = vld [vmem:[#allocation3 + $0x78] sm:$0xff]
        %2373 = vrot.lane.b32.xlu0 %v2349, 127
        %v2374 = vpop.permute.xlu0 %2373
        %2375 = vrot.lane.b32.xlu0 %v2350, 127
        %v2376 = vpop.permute.xlu0 %2375
        %2377 = vrot.lane.b32.xlu0 %v2351, 127
        %v2378 = vpop.permute.xlu0 %2377
        %2379 = vrot.lane.b32.xlu0 %v2352, 127
        %v2380 = vpop.permute.xlu0 %2379
        %2381 = vrot.lane.b32.xlu0 %v2353, 127
        %v2382 = vpop.permute.xlu0 %2381
        %2383 = vrot.lane.b32.xlu0 %v2354, 127
        %v2384 = vpop.permute.xlu0 %2383
        %2385 = vrot.lane.b32.xlu0 %v2355, 127
        %v2386 = vpop.permute.xlu0 %2385
        %2387 = vrot.lane.b32.xlu0 %v2356, 127
        %v2388 = vpop.permute.xlu0 %2387
        %2389 = vrot.lane.b32.xlu0 %v2357, 127
        %v2390 = vpop.permute.xlu0 %2389
        %2391 = vrot.lane.b32.xlu0 %v2358, 127
        %v2392 = vpop.permute.xlu0 %2391
        %2393 = vrot.lane.b32.xlu0 %v2359, 127
        %v2394 = vpop.permute.xlu0 %2393
        %2395 = vrot.lane.b32.xlu0 %v2360, 127
        %v2396 = vpop.permute.xlu0 %2395
        %v2397 = vsel %vm932, %v2374, %v2376
        %v2398 = vsel %vm932, %v2376, %v2378
        %v2399 = vsel %vm932, %v2380, %v2382
        %v2400 = vsel %vm932, %v2382, %v2384
        %v2401 = vsel %vm932, %v2386, %v2388
        %v2402 = vsel %vm932, %v2388, %v2390
        %v2403 = vsel %vm932, %v2392, %v2394
        %v2404 = vsel %vm932, %v2394, %v2396
        %v2413 = vsel %vm524, %v2397, 0.0
        %v2414 = vsel %vm525, %v2398, 0.0
        %v2415 = vsel %vm524, %v2399, 0.0
        %v2416 = vsel %vm525, %v2400, 0.0
        %v2417 = vsel %vm524, %v2401, 0.0
        %v2418 = vsel %vm525, %v2402, 0.0
        %v2419 = vsel %vm524, %v2403, 0.0
        %v2420 = vsel %vm525, %v2404, 0.0
        %s2421 = scalar_lea.vmem %s3, 160
        %v2422 = vld [vmem:[%s2421] sm:$0xff]
        %v2423 = vld [vmem:[%s2421 + $0x8] sm:$0xff]
        %v2424 = vld [vmem:[%s2421 + $0x10] sm:$0xff]
        %v2425 = vld [vmem:[%s2421 + $0x18] sm:$0xff]
        %v2427 = vsel %vm1708, %v2422, 0
        %v2430 = vsel %vm1708, %v2423, 0
        %v2433 = vsel %vm1708, %v2424, 0
        %v2436 = vsel %vm1708, %v2425, 0
        %2438 = vmatprep.subr.mxu0 %v2414
        %2439 = vmatpush1.msra.mxu0 %v2413
        %2440 = vmatprep.subr.mxu0 %v2416
        %2441 = vmatpush1.msra.mxu0 %v2415
        %2442 = vmatprep.subr.mxu0 %v2418
        %2443 = vmatpush1.msra.mxu0 %v2417
        %2444 = vmatprep.subr.mxu0 %v2420
        %2445 = vmatpush1.msra.mxu0 %v2419
        %2446 = vmatprep.subr.mxu0 0.0
        %2447 = vmatpush1.msra.mxu0 0.0
        %2448 = vmatprep.subr.mxu0 0.0
        %2449 = vmatpush1.msra.mxu0 0.0
        %2450 = vmatprep.subr.mxu0 0.0
        %2451 = vmatpush1.msra.mxu0 0.0
        %2452 = vmatprep.subr.mxu0 0.0
        %2453 = vmatpush1.msra.mxu0 0.0
        %2454 = vmatprep.subr.mxu0 0.0
        %2455 = vmatpush1.msra.mxu0 0.0
        %2456 = vmatprep.subr.mxu0 0.0
        %2457 = vmatpush1.msra.mxu0 0.0
        %2458 = vmatprep.subr.mxu0 0.0
        %2459 = vmatpush1.msra.mxu0 0.0
        %2460 = vmatprep.subr.mxu0 0.0
        %2461 = vmatpush1.msra.mxu0 0.0
        %2462 = vmatprep.subr.mxu0 0.0
        %2463 = vmatpush1.msra.mxu0 0.0
        %2464 = vmatprep.subr.mxu0 0.0
        %2465 = vmatpush1.msra.mxu0 0.0
        %2466 = vmatprep.subr.mxu0 0.0
        %2467 = vmatpush1.msra.mxu0 0.0
        %2468 = vmatprep.subr.mxu0 0.0
        %2469 = vmatpush1.msra.mxu0 0.0
        %2470 = vmatprep.subr.mxu0 0.0
        %2471 = vmatpush1.msra.mxu0 0.0
        %2472 = vmatprep.subr.mxu0 0.0
        %2473 = vmatpush1.msra.mxu0 0.0
        %2474 = vmatprep.subr.mxu0 0.0
        %2475 = vmatpush1.msra.mxu0 0.0
        %2476 = vmatprep.subr.mxu0 0.0
        %2477 = vmatpush1.msra.mxu0 0.0
        %2478 = vmatprep.subr.mxu0 0.0
        %2479 = vmatpush1.msra.mxu0 0.0
        %2480 = vmatprep.subr.mxu0 0.0
        %2481 = vmatpush1.msra.mxu0 0.0
        %2482 = vmatprep.subr.mxu0 0.0
        %2483 = vmatpush1.msra.mxu0 0.0
        %2484 = vmatprep.subr.mxu0 0.0
        %2485 = vmatpush1.msra.mxu0 0.0
        %2486 = vmatprep.subr.mxu0 0.0
        %2487 = vmatpush1.msra.mxu0 0.0
        %2488 = vmatprep.subr.mxu0 0.0
        %2489 = vmatpush1.msra.mxu0 0.0
        %2490 = vmatprep.subr.mxu0 0.0
        %2491 = vmatpush1.msra.mxu0 0.0
        %2492 = vmatprep.subr.mxu0 0.0
        %2493 = vmatpush1.msra.mxu0 0.0
        %2494 = vmatprep.subr.mxu0 0.0
        %2495 = vmatpush1.msra.mxu0 0.0
        %2496 = vmatprep.subr.mxu0 0.0
        %2497 = vmatpush1.msra.mxu0 0.0
        %2498 = vmatprep.subr.mxu0 0.0
        %2499 = vmatpush1.msra.mxu0 0.0
        %2500 = vmatprep.subr.mxu0 0.0
        %2501 = vmatpush1.msra.mxu0 0.0
        %2502 = vmatprep.mubr.f32.mxu0 0.0
        %2503 = vmatmul.mubr.f32.gmra.mrb[0].mxu0 %v2427
        %v2504 = vpop.f32.mrb[0].mxu0
        %v2505 = vadd.f32 0.0, %v2504
        %v2506 = vpop.f32.mrb[0].mxu0
        %v2507 = vadd.f32 0.0, %v2506
        %2508 = vmatprep.mubr.f32.mxu0 0.0
        %2509 = vmatmul.mubr.f32.gmra.mrb[0].mxu0 %v2430
        %v2510 = vpop.f32.mrb[0].mxu0
        %v2511 = vadd.f32 0.0, %v2510
        %v2512 = vpop.f32.mrb[0].mxu0
        %v2513 = vadd.f32 0.0, %v2512
        %2514 = vmatprep.mubr.f32.mxu0 0.0
        %2515 = vmatmul.mubr.f32.gmra.mrb[0].mxu0 %v2433
        %v2516 = vpop.f32.mrb[0].mxu0
        %v2517 = vadd.f32 0.0, %v2516
        %v2518 = vpop.f32.mrb[0].mxu0
        %v2519 = vadd.f32 0.0, %v2518
        %2520 = vmatprep.mubr.f32.mxu0 0.0
        %2521 = vmatmul.mubr.f32.gmra.mrb[0].mxu0 %v2436
        %v2522 = vpop.f32.mrb[0].mxu0
        %v2523 = vadd.f32 0.0, %v2522
        %v2524 = vpop.f32.mrb[0].mxu0
        %v2525 = vadd.f32 0.0, %v2524
        %2526 = vdwg.mxu0
        %v2527 = vadd.f32 %v2341, %v2505
        %v2528 = vadd.f32 %v2342, %v2507
        %v2529 = vadd.f32 %v2343, %v2511
        %v2530 = vadd.f32 %v2344, %v2513
        %v2531 = vadd.f32 %v2345, %v2517
        %v2532 = vadd.f32 %v2346, %v2519
        %v2533 = vadd.f32 %v2347, %v2523
        %v2534 = vadd.f32 %v2348, %v2525
        %2535 = vrot.lane.b32.xlu0 %v2349, 113
        %v2536 = vpop.permute.xlu0 %2535
        %2537 = vrot.lane.b32.xlu0 %v2350, 113
        %v2538 = vpop.permute.xlu0 %2537
        %2539 = vrot.lane.b32.xlu0 %v2351, 113
        %v2540 = vpop.permute.xlu0 %2539
        %2541 = vrot.lane.b32.xlu0 %v2352, 113
        %v2542 = vpop.permute.xlu0 %2541
        %2543 = vrot.lane.b32.xlu0 %v2353, 113
        %v2544 = vpop.permute.xlu0 %2543
        %2545 = vrot.lane.b32.xlu0 %v2354, 113
        %v2546 = vpop.permute.xlu0 %2545
        %2547 = vrot.lane.b32.xlu0 %v2355, 113
        %v2548 = vpop.permute.xlu0 %2547
        %2549 = vrot.lane.b32.xlu0 %v2356, 113
        %v2550 = vpop.permute.xlu0 %2549
        %2551 = vrot.lane.b32.xlu0 %v2357, 113
        %v2552 = vpop.permute.xlu0 %2551
        %2553 = vrot.lane.b32.xlu0 %v2358, 113
        %v2554 = vpop.permute.xlu0 %2553
        %2555 = vrot.lane.b32.xlu0 %v2359, 113
        %v2556 = vpop.permute.xlu0 %2555
        %2557 = vrot.lane.b32.xlu0 %v2360, 113
        %v2558 = vpop.permute.xlu0 %2557
        %v2559 = vsel %vm1070, %v2536, %v2538
        %v2560 = vsel %vm1070, %v2538, %v2540
        %v2561 = vsel %vm1070, %v2542, %v2544
        %v2562 = vsel %vm1070, %v2544, %v2546
        %v2563 = vsel %vm1070, %v2548, %v2550
        %v2564 = vsel %vm1070, %v2550, %v2552
        %v2565 = vsel %vm1070, %v2554, %v2556
        %v2566 = vsel %vm1070, %v2556, %v2558
        %v2575 = vsel %vm270, %v2559, 0.0
        %v2576 = vsel %vm271, %v2560, 0.0
        %v2577 = vsel %vm270, %v2561, 0.0
        %v2578 = vsel %vm271, %v2562, 0.0
        %v2579 = vsel %vm270, %v2563, 0.0
        %v2580 = vsel %vm271, %v2564, 0.0
        %v2581 = vsel %vm270, %v2565, 0.0
        %v2582 = vsel %vm271, %v2566, 0.0
        %s2583 = scalar_lea.vmem %s3, 192
        %v2584 = vld [vmem:[%s2583] sm:$0xff]
        %v2585 = vld [vmem:[%s2583 + $0x8] sm:$0xff]
        %v2586 = vld [vmem:[%s2583 + $0x10] sm:$0xff]
        %v2587 = vld [vmem:[%s2583 + $0x18] sm:$0xff]
        %v2589 = vsel %vm1708, %v2584, 0
        %v2592 = vsel %vm1708, %v2585, 0
        %v2595 = vsel %vm1708, %v2586, 0
        %v2598 = vsel %vm1708, %v2587, 0
        %2600 = vmatprep.subr.mxu0 %v2576
        %2601 = vmatpush1.msra.mxu0 %v2575
        %2602 = vmatprep.subr.mxu0 %v2578
        %2603 = vmatpush1.msra.mxu0 %v2577
        %2604 = vmatprep.subr.mxu0 %v2580
        %2605 = vmatpush1.msra.mxu0 %v2579
        %2606 = vmatprep.subr.mxu0 %v2582
        %2607 = vmatpush1.msra.mxu0 %v2581
        %2608 = vmatprep.subr.mxu0 0.0
        %2609 = vmatpush1.msra.mxu0 0.0
        %2610 = vmatprep.subr.mxu0 0.0
        %2611 = vmatpush1.msra.mxu0 0.0
        %2612 = vmatprep.subr.mxu0 0.0
        %2613 = vmatpush1.msra.mxu0 0.0
        %2614 = vmatprep.subr.mxu0 0.0
        %2615 = vmatpush1.msra.mxu0 0.0
        %2616 = vmatprep.subr.mxu0 0.0
        %2617 = vmatpush1.msra.mxu0 0.0
        %2618 = vmatprep.subr.mxu0 0.0
        %2619 = vmatpush1.msra.mxu0 0.0
        %2620 = vmatprep.subr.mxu0 0.0
        %2621 = vmatpush1.msra.mxu0 0.0
        %2622 = vmatprep.subr.mxu0 0.0
        %2623 = vmatpush1.msra.mxu0 0.0
        %2624 = vmatprep.subr.mxu0 0.0
        %2625 = vmatpush1.msra.mxu0 0.0
        %2626 = vmatprep.subr.mxu0 0.0
        %2627 = vmatpush1.msra.mxu0 0.0
        %2628 = vmatprep.subr.mxu0 0.0
        %2629 = vmatpush1.msra.mxu0 0.0
        %2630 = vmatprep.subr.mxu0 0.0
        %2631 = vmatpush1.msra.mxu0 0.0
        %2632 = vmatprep.subr.mxu0 0.0
        %2633 = vmatpush1.msra.mxu0 0.0
        %2634 = vmatprep.subr.mxu0 0.0
        %2635 = vmatpush1.msra.mxu0 0.0
        %2636 = vmatprep.subr.mxu0 0.0
        %2637 = vmatpush1.msra.mxu0 0.0
        %2638 = vmatprep.subr.mxu0 0.0
        %2639 = vmatpush1.msra.mxu0 0.0
        %2640 = vmatprep.subr.mxu0 0.0
        %2641 = vmatpush1.msra.mxu0 0.0
        %2642 = vmatprep.subr.mxu0 0.0
        %2643 = vmatpush1.msra.mxu0 0.0
        %2644 = vmatprep.subr.mxu0 0.0
        %2645 = vmatpush1.msra.mxu0 0.0
        %2646 = vmatprep.subr.mxu0 0.0
        %2647 = vmatpush1.msra.mxu0 0.0
        %2648 = vmatprep.subr.mxu0 0.0
        %2649 = vmatpush1.msra.mxu0 0.0
        %2650 = vmatprep.subr.mxu0 0.0
        %2651 = vmatpush1.msra.mxu0 0.0
        %2652 = vmatprep.subr.mxu0 0.0
        %2653 = vmatpush1.msra.mxu0 0.0
        %2654 = vmatprep.subr.mxu0 0.0
        %2655 = vmatpush1.msra.mxu0 0.0
        %2656 = vmatprep.subr.mxu0 0.0
        %2657 = vmatpush1.msra.mxu0 0.0
        %2658 = vmatprep.subr.mxu0 0.0
        %2659 = vmatpush1.msra.mxu0 0.0
        %2660 = vmatprep.subr.mxu0 0.0
        %2661 = vmatpush1.msra.mxu0 0.0
        %2662 = vmatprep.subr.mxu0 0.0
        %2663 = vmatpush1.msra.mxu0 0.0
        %2664 = vmatprep.mubr.f32.mxu0 0.0
        %2665 = vmatmul.mubr.f32.gmra.mrb[0].mxu0 %v2589
        %v2666 = vpop.f32.mrb[0].mxu0
        %v2667 = vadd.f32 0.0, %v2666
        %v2668 = vpop.f32.mrb[0].mxu0
        %v2669 = vadd.f32 0.0, %v2668
        %2670 = vmatprep.mubr.f32.mxu0 0.0
        %2671 = vmatmul.mubr.f32.gmra.mrb[0].mxu0 %v2592
        %v2672 = vpop.f32.mrb[0].mxu0
        %v2673 = vadd.f32 0.0, %v2672
        %v2674 = vpop.f32.mrb[0].mxu0
        %v2675 = vadd.f32 0.0, %v2674
        %2676 = vmatprep.mubr.f32.mxu0 0.0
        %2677 = vmatmul.mubr.f32.gmra.mrb[0].mxu0 %v2595
        %v2678 = vpop.f32.mrb[0].mxu0
        %v2679 = vadd.f32 0.0, %v2678
        %v2680 = vpop.f32.mrb[0].mxu0
        %v2681 = vadd.f32 0.0, %v2680
        %2682 = vmatprep.mubr.f32.mxu0 0.0
        %2683 = vmatmul.mubr.f32.gmra.mrb[0].mxu0 %v2598
        %v2684 = vpop.f32.mrb[0].mxu0
        %v2685 = vadd.f32 0.0, %v2684
        %v2686 = vpop.f32.mrb[0].mxu0
        %v2687 = vadd.f32 0.0, %v2686
        %2688 = vdwg.mxu0
        %v2689 = vadd.f32 %v2527, %v2667
        %v2690 = vadd.f32 %v2528, %v2669
        %v2691 = vadd.f32 %v2529, %v2673
        %v2692 = vadd.f32 %v2530, %v2675
        %v2693 = vadd.f32 %v2531, %v2679
        %v2694 = vadd.f32 %v2532, %v2681
        %v2695 = vadd.f32 %v2533, %v2685
        %v2696 = vadd.f32 %v2534, %v2687
        %s2697 = scalar_lea.vmem %s3, 224
        %v2698 = vld [vmem:[%s2697] sm:$0xff]
        %v2699 = vld [vmem:[%s2697 + $0x8] sm:$0xff]
        %v2700 = vld [vmem:[%s2697 + $0x10] sm:$0xff]
        %v2701 = vld [vmem:[%s2697 + $0x18] sm:$0xff]
        %2702 = vrot.lane.b32.xlu0 %v2349, 112
        %v2703 = vpop.permute.xlu0 %2702
        %2704 = vrot.lane.b32.xlu0 %v2350, 112
        %v2705 = vpop.permute.xlu0 %2704
        %2706 = vrot.lane.b32.xlu0 %v2351, 112
        %v2707 = vpop.permute.xlu0 %2706
        %2708 = vrot.lane.b32.xlu0 %v2352, 112
        %v2709 = vpop.permute.xlu0 %2708
        %2710 = vrot.lane.b32.xlu0 %v2353, 112
        %v2711 = vpop.permute.xlu0 %2710
        %2712 = vrot.lane.b32.xlu0 %v2354, 112
        %v2713 = vpop.permute.xlu0 %2712
        %2714 = vrot.lane.b32.xlu0 %v2355, 112
        %v2715 = vpop.permute.xlu0 %2714
        %2716 = vrot.lane.b32.xlu0 %v2356, 112
        %v2717 = vpop.permute.xlu0 %2716
        %2718 = vrot.lane.b32.xlu0 %v2357, 112
        %v2719 = vpop.permute.xlu0 %2718
        %2720 = vrot.lane.b32.xlu0 %v2358, 112
        %v2721 = vpop.permute.xlu0 %2720
        %2722 = vrot.lane.b32.xlu0 %v2359, 112
        %v2723 = vpop.permute.xlu0 %2722
        %2724 = vrot.lane.b32.xlu0 %v2360, 112
        %v2725 = vpop.permute.xlu0 %2724
        %v2726 = vsel %vm1213, %v2703, %v2705
        %v2727 = vsel %vm1213, %v2705, %v2707
        %v2728 = vsel %vm1213, %v2709, %v2711
        %v2729 = vsel %vm1213, %v2711, %v2713
        %v2730 = vsel %vm1213, %v2715, %v2717
        %v2731 = vsel %vm1213, %v2717, %v2719
        %v2732 = vsel %vm1213, %v2721, %v2723
        %v2733 = vsel %vm1213, %v2723, %v2725
        %v2743 = vsel %vm1708, %v2698, 0
        %v2746 = vsel %vm1708, %v2699, 0
        %v2749 = vsel %vm1708, %v2700, 0
        %v2752 = vsel %vm1708, %v2701, 0
        %2754 = vmatprep.subr.mxu0 %v2727
        %2755 = vmatpush1.msra.mxu0 %v2726
        %2756 = vmatprep.subr.mxu0 %v2729
        %2757 = vmatpush1.msra.mxu0 %v2728
        %2758 = vmatprep.subr.mxu0 %v2731
        %2759 = vmatpush1.msra.mxu0 %v2730
        %2760 = vmatprep.subr.mxu0 %v2733
        %2761 = vmatpush1.msra.mxu0 %v2732
        %2762 = vmatprep.subr.mxu0 0.0
        %2763 = vmatpush1.msra.mxu0 0.0
        %2764 = vmatprep.subr.mxu0 0.0
        %2765 = vmatpush1.msra.mxu0 0.0
        %2766 = vmatprep.subr.mxu0 0.0
        %2767 = vmatpush1.msra.mxu0 0.0
        %2768 = vmatprep.subr.mxu0 0.0
        %2769 = vmatpush1.msra.mxu0 0.0
        %2770 = vmatprep.subr.mxu0 0.0
        %2771 = vmatpush1.msra.mxu0 0.0
        %2772 = vmatprep.subr.mxu0 0.0
        %2773 = vmatpush1.msra.mxu0 0.0
        %2774 = vmatprep.subr.mxu0 0.0
        %2775 = vmatpush1.msra.mxu0 0.0
        %2776 = vmatprep.subr.mxu0 0.0
        %2777 = vmatpush1.msra.mxu0 0.0
        %2778 = vmatprep.subr.mxu0 0.0
        %2779 = vmatpush1.msra.mxu0 0.0
        %2780 = vmatprep.subr.mxu0 0.0
        %2781 = vmatpush1.msra.mxu0 0.0
        %2782 = vmatprep.subr.mxu0 0.0
        %2783 = vmatpush1.msra.mxu0 0.0
        %2784 = vmatprep.subr.mxu0 0.0
        %2785 = vmatpush1.msra.mxu0 0.0
        %2786 = vmatprep.subr.mxu0 0.0
        %2787 = vmatpush1.msra.mxu0 0.0
        %2788 = vmatprep.subr.mxu0 0.0
        %2789 = vmatpush1.msra.mxu0 0.0
        %2790 = vmatprep.subr.mxu0 0.0
        %2791 = vmatpush1.msra.mxu0 0.0
        %2792 = vmatprep.subr.mxu0 0.0
        %2793 = vmatpush1.msra.mxu0 0.0
        %2794 = vmatprep.subr.mxu0 0.0
        %2795 = vmatpush1.msra.mxu0 0.0
        %2796 = vmatprep.subr.mxu0 0.0
        %2797 = vmatpush1.msra.mxu0 0.0
        %2798 = vmatprep.subr.mxu0 0.0
        %2799 = vmatpush1.msra.mxu0 0.0
        %2800 = vmatprep.subr.mxu0 0.0
        %2801 = vmatpush1.msra.mxu0 0.0
        %2802 = vmatprep.subr.mxu0 0.0
        %2803 = vmatpush1.msra.mxu0 0.0
        %2804 = vmatprep.subr.mxu0 0.0
        %2805 = vmatpush1.msra.mxu0 0.0
        %2806 = vmatprep.subr.mxu0 0.0
        %2807 = vmatpush1.msra.mxu0 0.0
        %2808 = vmatprep.subr.mxu0 0.0
        %2809 = vmatpush1.msra.mxu0 0.0
        %2810 = vmatprep.subr.mxu0 0.0
        %2811 = vmatpush1.msra.mxu0 0.0
        %2812 = vmatprep.subr.mxu0 0.0
        %2813 = vmatpush1.msra.mxu0 0.0
        %2814 = vmatprep.subr.mxu0 0.0
        %2815 = vmatpush1.msra.mxu0 0.0
        %2816 = vmatprep.subr.mxu0 0.0
        %2817 = vmatpush1.msra.mxu0 0.0
        %2818 = vmatprep.mubr.f32.mxu0 0.0
        %2819 = vmatmul.mubr.f32.gmra.mrb[0].mxu0 %v2743
        %v2820 = vpop.f32.mrb[0].mxu0
        %v2821 = vadd.f32 0.0, %v2820
        %v2822 = vpop.f32.mrb[0].mxu0
        %v2823 = vadd.f32 0.0, %v2822
        %2824 = vmatprep.mubr.f32.mxu0 0.0
        %2825 = vmatmul.mubr.f32.gmra.mrb[0].mxu0 %v2746
        %v2826 = vpop.f32.mrb[0].mxu0
        %v2827 = vadd.f32 0.0, %v2826
        %v2828 = vpop.f32.mrb[0].mxu0
        %v2829 = vadd.f32 0.0, %v2828
        %2830 = vmatprep.mubr.f32.mxu0 0.0
        %2831 = vmatmul.mubr.f32.gmra.mrb[0].mxu0 %v2749
        %v2832 = vpop.f32.mrb[0].mxu0
        %v2833 = vadd.f32 0.0, %v2832
        %v2834 = vpop.f32.mrb[0].mxu0
        %v2835 = vadd.f32 0.0, %v2834
        %2836 = vmatprep.mubr.f32.mxu0 0.0
        %2837 = vmatmul.mubr.f32.gmra.mrb[0].mxu0 %v2752
        %v2838 = vpop.f32.mrb[0].mxu0
        %v2839 = vadd.f32 0.0, %v2838
        %v2840 = vpop.f32.mrb[0].mxu0
        %v2841 = vadd.f32 0.0, %v2840
        %2842 = vdwg.mxu0
        %v2843 = vadd.f32 %v2689, %v2821
        %v2844 = vadd.f32 %v2690, %v2823
        %v2845 = vadd.f32 %v2691, %v2827
        %v2846 = vadd.f32 %v2692, %v2829
        %v2847 = vadd.f32 %v2693, %v2833
        %v2848 = vadd.f32 %v2694, %v2835
        %v2849 = vadd.f32 %v2695, %v2839
        %v2850 = vadd.f32 %v2696, %v2841
        %2851 = vrot.lane.b32.xlu0 %v2349, 111
        %v2852 = vpop.permute.xlu0 %2851
        %2853 = vrot.lane.b32.xlu0 %v2350, 111
        %v2854 = vpop.permute.xlu0 %2853
        %2855 = vrot.lane.b32.xlu0 %v2351, 111
        %v2856 = vpop.permute.xlu0 %2855
        %2857 = vrot.lane.b32.xlu0 %v2352, 111
        %v2858 = vpop.permute.xlu0 %2857
        %2859 = vrot.lane.b32.xlu0 %v2353, 111
        %v2860 = vpop.permute.xlu0 %2859
        %2861 = vrot.lane.b32.xlu0 %v2354, 111
        %v2862 = vpop.permute.xlu0 %2861
        %2863 = vrot.lane.b32.xlu0 %v2355, 111
        %v2864 = vpop.permute.xlu0 %2863
        %2865 = vrot.lane.b32.xlu0 %v2356, 111
        %v2866 = vpop.permute.xlu0 %2865
        %2867 = vrot.lane.b32.xlu0 %v2357, 111
        %v2868 = vpop.permute.xlu0 %2867
        %2869 = vrot.lane.b32.xlu0 %v2358, 111
        %v2870 = vpop.permute.xlu0 %2869
        %2871 = vrot.lane.b32.xlu0 %v2359, 111
        %v2872 = vpop.permute.xlu0 %2871
        %2873 = vrot.lane.b32.xlu0 %v2360, 111
        %v2874 = vpop.permute.xlu0 %2873
        %v2875 = vsel %vm1340, %v2852, %v2854
        %v2876 = vsel %vm1340, %v2854, %v2856
        %v2877 = vsel %vm1340, %v2858, %v2860
        %v2878 = vsel %vm1340, %v2860, %v2862
        %v2879 = vsel %vm1340, %v2864, %v2866
        %v2880 = vsel %vm1340, %v2866, %v2868
        %v2881 = vsel %vm1340, %v2870, %v2872
        %v2882 = vsel %vm1340, %v2872, %v2874
        %v2891 = vsel %vm524, %v2875, 0.0
        %v2892 = vsel %vm525, %v2876, 0.0
        %v2893 = vsel %vm524, %v2877, 0.0
        %v2894 = vsel %vm525, %v2878, 0.0
        %v2895 = vsel %vm524, %v2879, 0.0
        %v2896 = vsel %vm525, %v2880, 0.0
        %v2897 = vsel %vm524, %v2881, 0.0
        %v2898 = vsel %vm525, %v2882, 0.0
        %s2899 = scalar_lea.vmem %s3, 256
        %v2900 = vld [vmem:[%s2899] sm:$0xff]
        %v2901 = vld [vmem:[%s2899 + $0x8] sm:$0xff]
        %v2902 = vld [vmem:[%s2899 + $0x10] sm:$0xff]
        %v2903 = vld [vmem:[%s2899 + $0x18] sm:$0xff]
        %v2905 = vsel %vm1708, %v2900, 0
        %v2908 = vsel %vm1708, %v2901, 0
        %v2911 = vsel %vm1708, %v2902, 0
        %v2914 = vsel %vm1708, %v2903, 0
        %2916 = vmatprep.subr.mxu0 %v2892
        %2917 = vmatpush1.msra.mxu0 %v2891
        %2918 = vmatprep.subr.mxu0 %v2894
        %2919 = vmatpush1.msra.mxu0 %v2893
        %2920 = vmatprep.subr.mxu0 %v2896
        %2921 = vmatpush1.msra.mxu0 %v2895
        %2922 = vmatprep.subr.mxu0 %v2898
        %2923 = vmatpush1.msra.mxu0 %v2897
        %2924 = vmatprep.subr.mxu0 0.0
        %2925 = vmatpush1.msra.mxu0 0.0
        %2926 = vmatprep.subr.mxu0 0.0
        %2927 = vmatpush1.msra.mxu0 0.0
        %2928 = vmatprep.subr.mxu0 0.0
        %2929 = vmatpush1.msra.mxu0 0.0
        %2930 = vmatprep.subr.mxu0 0.0
        %2931 = vmatpush1.msra.mxu0 0.0
        %2932 = vmatprep.subr.mxu0 0.0
        %2933 = vmatpush1.msra.mxu0 0.0
        %2934 = vmatprep.subr.mxu0 0.0
        %2935 = vmatpush1.msra.mxu0 0.0
        %2936 = vmatprep.subr.mxu0 0.0
        %2937 = vmatpush1.msra.mxu0 0.0
        %2938 = vmatprep.subr.mxu0 0.0
        %2939 = vmatpush1.msra.mxu0 0.0
        %2940 = vmatprep.subr.mxu0 0.0
        %2941 = vmatpush1.msra.mxu0 0.0
        %2942 = vmatprep.subr.mxu0 0.0
        %2943 = vmatpush1.msra.mxu0 0.0
        %2944 = vmatprep.subr.mxu0 0.0
        %2945 = vmatpush1.msra.mxu0 0.0
        %2946 = vmatprep.subr.mxu0 0.0
        %2947 = vmatpush1.msra.mxu0 0.0
        %2948 = vmatprep.subr.mxu0 0.0
        %2949 = vmatpush1.msra.mxu0 0.0
        %2950 = vmatprep.subr.mxu0 0.0
        %2951 = vmatpush1.msra.mxu0 0.0
        %2952 = vmatprep.subr.mxu0 0.0
        %2953 = vmatpush1.msra.mxu0 0.0
        %2954 = vmatprep.subr.mxu0 0.0
        %2955 = vmatpush1.msra.mxu0 0.0
        %2956 = vmatprep.subr.mxu0 0.0
        %2957 = vmatpush1.msra.mxu0 0.0
        %2958 = vmatprep.subr.mxu0 0.0
        %2959 = vmatpush1.msra.mxu0 0.0
        %2960 = vmatprep.subr.mxu0 0.0
        %2961 = vmatpush1.msra.mxu0 0.0
        %2962 = vmatprep.subr.mxu0 0.0
        %2963 = vmatpush1.msra.mxu0 0.0
        %2964 = vmatprep.subr.mxu0 0.0
        %2965 = vmatpush1.msra.mxu0 0.0
        %2966 = vmatprep.subr.mxu0 0.0
        %2967 = vmatpush1.msra.mxu0 0.0
        %2968 = vmatprep.subr.mxu0 0.0
        %2969 = vmatpush1.msra.mxu0 0.0
        %2970 = vmatprep.subr.mxu0 0.0
        %2971 = vmatpush1.msra.mxu0 0.0
        %2972 = vmatprep.subr.mxu0 0.0
        %2973 = vmatpush1.msra.mxu0 0.0
        %2974 = vmatprep.subr.mxu0 0.0
        %2975 = vmatpush1.msra.mxu0 0.0
        %2976 = vmatprep.subr.mxu0 0.0
        %2977 = vmatpush1.msra.mxu0 0.0
        %2978 = vmatprep.subr.mxu0 0.0
        %2979 = vmatpush1.msra.mxu0 0.0
        %2980 = vmatprep.mubr.f32.mxu0 0.0
        %2981 = vmatmul.mubr.f32.gmra.mrb[0].mxu0 %v2905
        %v2982 = vpop.f32.mrb[0].mxu0
        %v2983 = vadd.f32 0.0, %v2982
        %v2984 = vpop.f32.mrb[0].mxu0
        %v2985 = vadd.f32 0.0, %v2984
        %2986 = vmatprep.mubr.f32.mxu0 0.0
        %2987 = vmatmul.mubr.f32.gmra.mrb[0].mxu0 %v2908
        %v2988 = vpop.f32.mrb[0].mxu0
        %v2989 = vadd.f32 0.0, %v2988
        %v2990 = vpop.f32.mrb[0].mxu0
        %v2991 = vadd.f32 0.0, %v2990
        %2992 = vmatprep.mubr.f32.mxu0 0.0
        %2993 = vmatmul.mubr.f32.gmra.mrb[0].mxu0 %v2911
        %v2994 = vpop.f32.mrb[0].mxu0
        %v2995 = vadd.f32 0.0, %v2994
        %v2996 = vpop.f32.mrb[0].mxu0
        %v2997 = vadd.f32 0.0, %v2996
        %2998 = vmatprep.mubr.f32.mxu0 0.0
        %2999 = vmatmul.mubr.f32.gmra.mrb[0].mxu0 %v2914
        %v3000 = vpop.f32.mrb[0].mxu0
        %v3001 = vadd.f32 0.0, %v3000
        %v3002 = vpop.f32.mrb[0].mxu0
        %v3003 = vadd.f32 0.0, %v3002
        %3004 = vdwg.mxu0
        %v3005 = vadd.f32 %v2843, %v2983
        %v3006 = vadd.f32 %v2844, %v2985
        %v3007 = vadd.f32 %v2845, %v2989
        %v3008 = vadd.f32 %v2846, %v2991
        %v3009 = vadd.f32 %v2847, %v2995
        %v3010 = vadd.f32 %v2848, %v2997
        %v3011 = vadd.f32 %v2849, %v3001
        %v3012 = vadd.f32 %v2850, %v3003
        %v3013 = vld [vmem:[%s4] sm:$0xff]
        %v3014 = vld [vmem:[%s4 + $0x8] sm:$0xff]
        %v3015 = vld [vmem:[%s4 + $0x10] sm:$0xff]
        %v3016 = vld [vmem:[%s4 + $0x18] sm:$0xff]
        %3018 = vset.pattern.permute.xlu0 0
        %3019 = vperm.xlu0 %3018, %v3013
        %v3020 = vpop.permute.xlu0 %3019
        %3023 = vset.pattern.permute.xlu0 0
        %3024 = vperm.xlu0 %3023, %v3014
        %v3025 = vpop.permute.xlu0 %3024
        %3028 = vset.pattern.permute.xlu0 0
        %3029 = vperm.xlu0 %3028, %v3015
        %v3030 = vpop.permute.xlu0 %3029
        %3033 = vset.pattern.permute.xlu0 0
        %3034 = vperm.xlu0 %3033, %v3016
        %v3035 = vpop.permute.xlu0 %3034
        %v3037 = vadd.f32 %v3005, %v3020
        %v3038 = vadd.f32 %v3006, %v3020
        %v3039 = vadd.f32 %v3007, %v3025
        %v3040 = vadd.f32 %v3008, %v3025
        %v3041 = vadd.f32 %v3009, %v3030
        %v3042 = vadd.f32 %v3010, %v3030
        %v3043 = vadd.f32 %v3011, %v3035
        %v3044 = vadd.f32 %v3012, %v3035
        %v3045 = vadd.f32 %v3037, %v3038
        %3046 = vadd.xlane.f32.xlu0 %v3045
        %v3047 = vpop.xlane.xlu0 %3046
        %v3048 = vadd.f32 %v3039, %v3040
        %3049 = vadd.xlane.f32.xlu0 %v3048
        %v3050 = vpop.xlane.xlu0 %3049
        %v3051 = vadd.f32 %v3041, %v3042
        %3052 = vadd.xlane.f32.xlu0 %v3051
        %v3053 = vpop.xlane.xlu0 %3052
        %v3054 = vadd.f32 %v3043, %v3044
        %3055 = vadd.xlane.f32.xlu0 %v3054
        %v3056 = vpop.xlane.xlu0 %3055
        %v3057 = vmul.f32 %v3037, %v3037
        %v3058 = vmul.f32 %v3038, %v3038
        %v3059 = vmul.f32 %v3039, %v3039
        %v3060 = vmul.f32 %v3040, %v3040
        %v3061 = vmul.f32 %v3041, %v3041
        %v3062 = vmul.f32 %v3042, %v3042
        %v3063 = vmul.f32 %v3043, %v3043
        %v3064 = vmul.f32 %v3044, %v3044
        %v3065 = vadd.f32 %v3057, %v3058
        %3066 = vadd.xlane.f32.xlu0 %v3065
        %v3067 = vpop.xlane.xlu0 %3066
        %v3068 = vadd.f32 %v3059, %v3060
        %3069 = vadd.xlane.f32.xlu0 %v3068
        %v3070 = vpop.xlane.xlu0 %3069
        %v3071 = vadd.f32 %v3061, %v3062
        %3072 = vadd.xlane.f32.xlu0 %v3071
        %v3073 = vpop.xlane.xlu0 %3072
        %v3074 = vadd.f32 %v3063, %v3064
        %3075 = vadd.xlane.f32.xlu0 %v3074
        %v3076 = vpop.xlane.xlu0 %3075
        %v3077 = vmul.f32 %v3047, 0.00390625
        %v3078 = vmul.f32 %v3050, 0.00390625
        %v3079 = vmul.f32 %v3053, 0.00390625
        %v3080 = vmul.f32 %v3056, 0.00390625
        %v3081 = vmul.f32 %v3067, 0.00390625
        %v3082 = vmul.f32 %v3070, 0.00390625
        %v3083 = vmul.f32 %v3073, 0.00390625
        %v3084 = vmul.f32 %v3076, 0.00390625
        %v3085 = vmul.f32 %v3077, %v3077
        %v3086 = vmul.f32 %v3078, %v3078
        %v3087 = vmul.f32 %v3079, %v3079
        %v3088 = vmul.f32 %v3080, %v3080
        %v3089 = vsub.f32 %v3081, %v3085
        %v3090 = vsub.f32 %v3082, %v3086
        %v3091 = vsub.f32 %v3083, %v3087
        %v3092 = vsub.f32 %v3084, %v3088
        %v3093 = vsub.f32 %v3037, %v3077
        %v3094 = vsub.f32 %v3038, %v3077
        %v3095 = vsub.f32 %v3039, %v3078
        %v3096 = vsub.f32 %v3040, %v3078
        %v3097 = vsub.f32 %v3041, %v3079
        %v3098 = vsub.f32 %v3042, %v3079
        %v3099 = vsub.f32 %v3043, %v3080
        %v3100 = vsub.f32 %v3044, %v3080
        %v3101 = vadd.f32 %v3089, 1e-05
        %v3102 = vadd.f32 %v3090, 1e-05
        %v3103 = vadd.f32 %v3091, 1e-05
        %v3104 = vadd.f32 %v3092, 1e-05
        %v3105 = vrsqrt.pop %v3101
        %v3106 = vrsqrt.pop %v3102
        %v3107 = vrsqrt.pop %v3103
        %v3108 = vrsqrt.pop %v3104
        %v3109 = vmul.f32 %v3093, %v3105
        %v3110 = vmul.f32 %v3094, %v3105
        %v3111 = vmul.f32 %v3095, %v3106
        %v3112 = vmul.f32 %v3096, %v3106
        %v3113 = vmul.f32 %v3097, %v3107
        %v3114 = vmul.f32 %v3098, %v3107
        %v3115 = vmul.f32 %v3099, %v3108
        %v3116 = vmul.f32 %v3100, %v3108
        %v3117 = vmax.f32 %v3109, 0.0
        %v3118 = vmax.f32 %v3110, 0.0
        %v3119 = vmax.f32 %v3111, 0.0
        %v3120 = vmax.f32 %v3112, 0.0
        %v3121 = vmax.f32 %v3113, 0.0
        %v3122 = vmax.f32 %v3114, 0.0
        %v3123 = vmax.f32 %v3115, 0.0
        %v3124 = vmax.f32 %v3116, 0.0
        %3125 = vst [vmem:[%s217] sm:$0xff] %v3117
        %3126 = vst [vmem:[%s217 + $0x8] sm:$0xff] %v3118
        %3127 = vst [vmem:[%s217 + $0x10] sm:$0xff] %v3119
        %3128 = vst [vmem:[%s217 + $0x18] sm:$0xff] %v3120
        %3129 = vst [vmem:[%s217 + $0x20] sm:$0xff] %v3121
        %3130 = vst [vmem:[%s217 + $0x28] sm:$0xff] %v3122
        %3131 = vst [vmem:[%s217 + $0x30] sm:$0xff] %v3123
        %3132 = vst [vmem:[%s217 + $0x38] sm:$0xff] %v3124
        %s3133 = sand.u32 %s137, 1
        %s3134 = scalar_lea.sflag [#allocation5], %s3133
        %s3135 = sand.u32 %s137, 1
        %s3136 = smul.addr %s3135, 64
        %s3137 = scalar_lea.vmem [#allocation4], %s3136
        // Predicated region
        $region41: #{tpu_custom_call.1} parent=39 // pred_check
          %p3138 = pneg %p147
        $region42: #{tpu_custom_call.1} parent=39 // pred_check_branch
          %3140 = sbr.rel (%p3138) target = $region44
        $region43: #{tpu_custom_call.1} parent=39 // pred_region
          %s3142 = ssub.s32 1024, 1024
          %3143 = vsyncadd %s3134, %s3142
          %s3144 = smul.addr %s19, 8
          %s3145 = smul.addr %s3144, 128
          %s3146 = scalar_lea.hbm %s5, %s3145
          %s3147 = sshll.u32 %s3137, 4
          %s3148 = int_to_ptr.vmem [resolvable:$true] %s3147
          %3153 = dma.vmem_to_hbm [thread:$0]  %s3148, 1024, %s3146, %s3134, 256, 256, 16
        $region44: #{tpu_custom_call.1} parent=39 // pred_fallthru
          _
      $region40: #{tpu_custom_call.1} parent=5 // pred_fallthru
        _
      %p3154 = scmp.le.s32.totalorder 2, %s14
      // Predicated region
      $region45: #{tpu_custom_call.1} parent=5 // pred_check
        %p3155 = pneg %p3154
      $region46: #{tpu_custom_call.1} parent=5 // pred_check_branch
        %3157 = sbr.rel (%p3155) target = $region48
      $region47: #{tpu_custom_call.1} parent=5 // pred_region
        %s3158 = ssub.s32 %s14, 2
        // Predicated region
        $region49: #{tpu_custom_call.1} parent=47 // pred_check
          %p3159 = pneg %p153
        $region50: #{tpu_custom_call.1} parent=47 // pred_check_branch
          %3161 = sbr.rel (%p3159) target = $region52
        $region51: #{tpu_custom_call.1} parent=47 // pred_region
          %s3162 = sand.u32 %s138, 1
          %s3163 = scalar_lea.sflag [#allocation5], %s3162
          %s3164 = sand.u32 %s138, 1
          %s3165 = smul.addr %s3164, 64
          %s3166 = scalar_lea.vmem [#allocation4], %s3165
          %3167 = dma.done %s3163, 1024
        $region52: #{tpu_custom_call.1} parent=47 // pred_fallthru
          _
      $region48: #{tpu_custom_call.1} parent=5 // pred_fallthru
        _
    $region6: #{tpu_custom_call.1} parent=1 // loop_footer
      %s18 = sadd.s32 1, %s14
    $region7: #{tpu_custom_call.1} parent=1 // loop_footer_branch
      %13 = sbr.rel target = $region3
    $region8: #{tpu_custom_call.1} parent=1 // loop_exit
      _
    %3168 = vsyncpa [#allocation5], 1
    %s3169 = scalar_lea.sflag [#allocation5], 1
    %3170 = vsyncpa %s3169, 1

</llo_original>
